<compile_context>
chip_gen: v6e
topology: v6e:2x2x1
jax: 0.10.0
libtpu: 0.0.40
codegen_flags: <defaults>
</compile_context>

<pallas_src>
import functools

import jax
import jax.numpy as jnp
import numpy as np
from jax.experimental import pallas as pl
from jax.experimental.pallas import tpu as pltpu


# ----------------------------- activation helpers ----------------------------
# NOTE(perf review): on v6e/v7x these could run in bf16 (doubles EUP/VALU
# throughput); kept in f32 so the same kernel lowers cleanly on v5e as well.

def _sigmoid(v):
    # exp and the approximate reciprocal both run on the EUP slot.
    return pl.reciprocal(1.0 + jnp.exp(-v), approx=True)


def _silu(v):
    return v * _sigmoid(v)


def _hswish(v):
    # x * relu6(x + 3) / 6
    return v * jnp.clip(v + 3.0, 0.0, 6.0) * (1.0 / 6.0)


# ----------------------------- hardware queries -------------------------------

def _vmem_capacity_bytes():
    try:
        info = pltpu.get_tpu_info()
        cap = int(getattr(info, "vmem_capacity_bytes", 0) or 0)
        if cap > 0:
            return cap
    except Exception:
        pass
    return 64 * 1024 * 1024     # conservative fallback (v7x per-TC VMEM)


def _nbytes(arrs):
    return sum(int(np.prod(a.shape)) * a.dtype.itemsize for a in arrs)


def _pick_h_tile(H, per_row_bytes, budget_bytes):
    """Largest divisor of H whose working set fits the budget; prefer
    multiples of 8 (or H itself).  Always returns a divisor that fits
    (falls back to the largest fitting divisor, ultimately 1)."""
    cap_rows = max(1, budget_bytes // max(per_row_bytes, 1))
    fallback = 1
    for th in range(min(H, cap_rows), 0, -1):
        if H % th == 0:
            if th == H or th % 8 == 0:
                return th
            if fallback == 1:
                fallback = th
    return fallback


# --------------------------- shared compute pieces ----------------------------

def _cv1_two_dots(x, w1a_ref, b1a_ref, w1b_ref, b1b_ref):
    """cv1 (Conv+BN+SiLU) as two lane-aligned dots; 'a' is cast to bf16
    immediately (only ever consumed as a bf16 matmul operand)."""
    a = _silu(jnp.dot(x, w1a_ref[...], preferred_element_type=jnp.float32)
              + b1a_ref[...]).astype(jnp.bfloat16)                 # (R, c) bf16
    b = _silu(jnp.dot(x, w1b_ref[...], preferred_element_type=jnp.float32)
              + b1b_ref[...])                                      # (R, c) f32
    return a, b


def _gates_from_pools(x_h, x_w, wa1_ref, ba1_ref, wah_ref, bah_ref,
                      waw_ref, baw_ref):
    """conv1+bn1+h_swish on the pooled rows/cols, then the two gate convs.
    A 1x1 conv is pointwise over spatial positions, so it can be applied
    per piece of the [x_h ; x_w] concat."""
    y_h = _hswish(jnp.dot(x_h.astype(jnp.bfloat16), wa1_ref[...],
                          preferred_element_type=jnp.float32) + ba1_ref[...])
    y_w = _hswish(jnp.dot(x_w.astype(jnp.bfloat16), wa1_ref[...],
                          preferred_element_type=jnp.float32) + ba1_ref[...])
    a_h = _sigmoid(jnp.dot(y_h.astype(jnp.bfloat16), wah_ref[...],
                           preferred_element_type=jnp.float32) + bah_ref[...])
    a_w = _sigmoid(jnp.dot(y_w.astype(jnp.bfloat16), waw_ref[...],
                           preferred_element_type=jnp.float32) + baw_ref[...])
    return a_h, a_w


def _apply_attn_ffn_cv2(a_bf16, b, gate,
                        wf1_ref, bf1_ref, wf2_ref, bf2_ref,
                        w2a_ref, w2b_ref, b2_ref, fuse_cv2):
    """b + b*gate, ffn residual, cv2 (+SiLU).  Returns f32."""
    b = b + b * gate
    f = _silu(jnp.dot(b.astype(jnp.bfloat16), wf1_ref[...],
                      preferred_element_type=jnp.float32) + bf1_ref[...])
    f = jnp.dot(f.astype(jnp.bfloat16), wf2_ref[...],
                preferred_element_type=jnp.float32) + bf2_ref[...]
    b = b + f
    b16 = b.astype(jnp.bfloat16)
    if fuse_cv2:
        # c % 128 == 0: lane concat is free vreg placement; K = 2c fills the
        # 256-deep MXU contraction on v6e/v7x with a single matmul pass.
        ab = jnp.concatenate([a_bf16, b16], axis=-1)
        w2 = jnp.concatenate([w2a_ref[...], w2b_ref[...]], axis=0)
        out = jnp.dot(ab, w2, preferred_element_type=jnp.float32) + b2_ref[...]
    else:
        out = (jnp.dot(a_bf16, w2a_ref[...], preferred_element_type=jnp.float32)
               + jnp.dot(b16, w2b_ref[...], preferred_element_type=jnp.float32)
               + b2_ref[...])
    return _silu(out)


# ---------------- fused single-pass kernel (grid=(N,)) ------------------------
# Used whenever the per-image working set fits VMEM: x is read from HBM once.

def _fused_kernel(x_ref,
                  w1a_ref, b1a_ref, w1b_ref, b1b_ref,
                  wa1_ref, ba1_ref, wah_ref, bah_ref, waw_ref, baw_ref,
                  wf1_ref, bf1_ref, wf2_ref, bf2_ref,
                  w2a_ref, w2b_ref, b2_ref,
                  o_ref, *, H, W, fuse_cv2):
    x = x_ref[0]                                                   # (HW, C) bf16
    a, b = _cv1_two_dots(x, w1a_ref, b1a_ref, w1b_ref, b1b_ref)
    c = b.shape[-1]
    # CoordAtt pooling (these reshapes are layout-preserving when W % 8 == 0).
    b3 = b.reshape(H, W, c)
    x_h = jnp.mean(b3, axis=1)                                     # (H, c)
    x_w = jnp.mean(b3, axis=0)                                     # (W, c)
    a_h, a_w = _gates_from_pools(x_h, x_w, wa1_ref, ba1_ref,
                                 wah_ref, bah_ref, waw_ref, baw_ref)
    gate = (a_w[None, :, :] * a_h[:, None, :]).reshape(H * W, c)
    out = _apply_attn_ffn_cv2(a, b, gate, wf1_ref, bf1_ref, wf2_ref, bf2_ref,
                              w2a_ref, w2b_ref, b2_ref, fuse_cv2)
    # NOTE: if C < 128 the store is a masked vst; a lane-dense folded output
    # ((N, H, W*C)) is a further optimization left for real channel counts.
    o_ref[0] = out.astype(o_ref.dtype)


# --------------- two-pass fallback, pass 1: CoordAtt gates --------------------
# Row-tiled over H (grid=(N, H/TH), N parallel / H arbitrary).  Row means and
# the column sum are accumulated in VMEM scratch; the small gate matmuls run
# only at the last step (P3 accumulator pattern).

def _gate_pass_kernel(x_ref,
                      w1b_ref, b1b_ref, wa1_ref, ba1_ref,
                      wah_ref, bah_ref, waw_ref, baw_ref,
                      ah_ref, aw_ref,
                      rowmean_ref, colsum_ref, *, W):
    H = ah_ref.shape[1]
    TH = x_ref.shape[1] // W
    j = pl.program_id(1)
    nj = pl.num_programs(1)

    @pl.when(j == 0)
    def _():
        colsum_ref[...] = jnp.zeros_like(colsum_ref)

    x = x_ref[0]                                                   # (TH*W, C) bf16
    b = _silu(jnp.dot(x, w1b_ref[...], preferred_element_type=jnp.float32)
              + b1b_ref[...])                                      # (TH*W, c) f32
    c = b.shape[-1]
    b3 = b.reshape(TH, W, c)
    rowmean_ref[pl.ds(j * TH, TH), :] = jnp.mean(b3, axis=1)       # pool over W
    colsum_ref[...] = colsum_ref[...] + jnp.sum(b3, axis=0)        # accumulate H

    @pl.when(j == nj - 1)
    def _():
        x_h = rowmean_ref[...]                                     # (H, c)
        x_w = colsum_ref[...] * (1.0 / H)                          # (W, c)
        a_h, a_w = _gates_from_pools(x_h, x_w, wa1_ref, ba1_ref,
                                     wah_ref, bah_ref, waw_ref, baw_ref)
        ah_ref[0] = a_h
        aw_ref[0] = a_w


# --------------- two-pass fallback, pass 2: main fused block ------------------
# Row-tiled over H; every conv is a 1x1 (pointwise), so tiles are independent
# given the precomputed gates.

def _main_pass_kernel(x_ref, ah_ref, aw_ref,
                      w1a_ref, b1a_ref, w1b_ref, b1b_ref,
                      wf1_ref, bf1_ref, wf2_ref, bf2_ref,
                      w2a_ref, w2b_ref, b2_ref,
                      o_ref, *, fuse_cv2):
    TH = ah_ref.shape[1]
    W = aw_ref.shape[1]
    x = x_ref[0]                                                   # (TH*W, C) bf16
    a, b = _cv1_two_dots(x, w1a_ref, b1a_ref, w1b_ref, b1b_ref)
    c = b.shape[-1]
    gate = (aw_ref[0][None, :, :] * ah_ref[0][:, None, :]).reshape(TH * W, c)
    out = _apply_attn_ffn_cv2(a, b, gate, wf1_ref, bf1_ref, wf2_ref, bf2_ref,
                              w2a_ref, w2b_ref, b2_ref, fuse_cv2)
    o_ref[0] = out.astype(o_ref.dtype)


# ----------------------------- wrapper ----------------------------------------

_FUSED_WKEYS = ('w1a', 'b1a', 'w1b', 'b1b', 'wa1', 'ba1', 'wah', 'bah',
                'waw', 'baw', 'wf1', 'bf1', 'wf2', 'bf2', 'w2a', 'w2b', 'b2')
_P1_WKEYS = ('w1b', 'b1b', 'wa1', 'ba1', 'wah', 'bah', 'waw', 'baw')
_P2_WKEYS = ('w1a', 'b1a', 'w1b', 'b1b', 'wf1', 'bf1', 'wf2', 'bf2',
             'w2a', 'w2b', 'b2')


def _const_spec(p, ngrid):
    """Full-array block with a grid-invariant index map (weights / biases)."""
    zeros = (0,) * p.ndim
    if ngrid == 1:
        return pl.BlockSpec(p.shape, lambda n, _z=zeros: _z)
    return pl.BlockSpec(p.shape, lambda n, j, _z=zeros: _z)


def ps_coordatt_forward_nhwc(x_nhwc, params, *, row_tile=None,
                             gate_row_tile=None, force_two_pass=False):
    """Channels-last forward. x_nhwc: (N, H, W, C). Returns (N, H, W, C) bf16."""
    N, H, W, C = x_nhwc.shape
    HW = H * W
    p = params
    c = p['w1a'].shape[1]
    mip = p['wa1'].shape[1]
    fuse_cv2 = (c % 128 == 0)
    x = x_nhwc.astype(jnp.bfloat16).reshape(N, HW, C)

    cap = _vmem_capacity_bytes()
    vmem_limit = max(32 * 1024 * 1024, min((cap * 3) // 4, 100 * 1024 * 1024))
    tile_budget = cap // 6          # ~10.6 MiB on v7x, ~21 MiB on v5e/v6e
    fuse_budget = cap // 4          # per-image footprint threshold for fusion

    # ------------------------- fused single-pass path -------------------------
    wlist = [p[k] for k in _FUSED_WKEYS]
    fused_per_image = HW * (12 * C + 26 * c) + _nbytes(wlist)
    if not force_two_pass and fused_per_image <= fuse_budget:
        kern = functools.partial(_fused_kernel, H=H, W=W, fuse_cv2=fuse_cv2)
        flops = 2 * N * HW * (2 * C * c + 4 * c * c + 2 * c * C) \
            + 4 * N * (H + W) * c * mip
        trans = N * (HW * (4 * c + C) + 2 * (H + W) * c)
        byts = 2 * N * HW * C * 2 + _nbytes(wlist)
        out = pl.pallas_call(
            kern,
            out_shape=jax.ShapeDtypeStruct((N, HW, C), jnp.bfloat16),
            grid=(N,),
            in_specs=[pl.BlockSpec((1, HW, C), lambda n: (n, 0, 0))]
                     + [_const_spec(w, 1) for w in wlist],
            out_specs=pl.BlockSpec((1, HW, C), lambda n: (n, 0, 0)),
            compiler_params=pltpu.CompilerParams(
                dimension_semantics=("parallel",),
                vmem_limit_bytes=vmem_limit),
            cost_estimate=pl.CostEstimate(flops=int(flops),
                                          transcendentals=int(trans),
                                          bytes_accessed=int(byts)),
        )(x, *wlist)
        return out.reshape(N, H, W, C)

    # ----------------------------- two-pass path -------------------------------
    # pass 1: CoordAtt gates, H-tiled with accumulators.
    per_row1 = W * (4 * C + 6 * c)
    TH1 = gate_row_tile if gate_row_tile is not None else \
        _pick_h_tile(H, per_row1, tile_budget)
    assert H % TH1 == 0, "gate_row_tile must divide H"
    p1_list = [p[k] for k in _P1_WKEYS]
    flops1 = 2 * N * HW * C * c + 4 * N * (H + W) * c * mip
    trans1 = N * (HW * c + 2 * (H + W) * c)
    bytes1 = N * HW * C * 2 + _nbytes(p1_list) + N * (H + W) * c * 4
    a_h, a_w = pl.pallas_call(
        functools.partial(_gate_pass_kernel, W=W),
        out_shape=(jax.ShapeDtypeStruct((N, H, c), jnp.float32),
                   jax.ShapeDtypeStruct((N, W, c), jnp.float32)),
        grid=(N, H // TH1),
        in_specs=[pl.BlockSpec((1, TH1 * W, C), lambda n, j: (n, j, 0))]
                 + [_const_spec(w, 2) for w in p1_list],
        out_specs=(pl.BlockSpec((1, H, c), lambda n, j: (n, 0, 0)),
                   pl.BlockSpec((1, W, c), lambda n, j: (n, 0, 0))),
        scratch_shapes=[pltpu.VMEM((H, c), jnp.float32),
                        pltpu.VMEM((W, c), jnp.float32)],
        compiler_params=pltpu.CompilerParams(
            dimension_semantics=("parallel", "arbitrary"),
            vmem_limit_bytes=vmem_limit),
        cost_estimate=pl.CostEstimate(flops=int(flops1),
                                      transcendentals=int(trans1),
                                      bytes_accessed=int(bytes1)),
    )(x, *p1_list)

    # pass 2: main fused block (row-tiled over H).
    per_row2 = W * (12 * C + 22 * c)
    TH2 = row_tile if row_tile is not None else \
        _pick_h_tile(H, per_row2, tile_budget)
    assert H % TH2 == 0, "row_tile must divide H"
    p2_list = [p[k] for k in _P2_WKEYS]
    flops2 = 2 * N * HW * (2 * C * c + 4 * c * c + 2 * c * C)
    trans2 = N * HW * (4 * c + C)
    bytes2 = 2 * N * HW * C * 2 + _nbytes(p2_list) + N * (H + W) * c * 4
    out = pl.pallas_call(
        functools.partial(_main_pass_kernel, fuse_cv2=fuse_cv2),
        out_shape=jax.ShapeDtypeStruct((N, HW, C), jnp.bfloat16),
        grid=(N, H // TH2),
        in_specs=[pl.BlockSpec((1, TH2 * W, C), lambda n, j: (n, j, 0)),
                  pl.BlockSpec((1, TH2, c), lambda n, j: (n, j, 0)),
                  pl.BlockSpec((1, W, c), lambda n, j: (n, 0, 0))]
                 + [_const_spec(w, 2) for w in p2_list],
        out_specs=pl.BlockSpec((1, TH2 * W, C), lambda n, j: (n, j, 0)),
        compiler_params=pltpu.CompilerParams(
            dimension_semantics=("parallel", "parallel"),
            vmem_limit_bytes=vmem_limit),
        cost_estimate=pl.CostEstimate(flops=int(flops2),
                                      transcendentals=int(trans2),
                                      bytes_accessed=int(bytes2)),
    )(x, a_h, a_w, *p2_list)
    return out.reshape(N, H, W, C)


def ps_coordatt_forward(x_nchw, params, **kwargs):
    """NCHW convenience wrapper (PyTorch layout parity).  If the surrounding
    graph is channels-last, call ps_coordatt_forward_nhwc directly and skip
    these transposes (each one is an extra HBM round-trip of the tensor)."""
    x_nhwc = jnp.transpose(x_nchw, (0, 2, 3, 1))
    out = ps_coordatt_forward_nhwc(x_nhwc, params, **kwargs)
    return jnp.transpose(out, (0, 3, 1, 2)).astype(x_nchw.dtype)


# ------------------------ parameter construction -----------------------------

def init_raw_params(key, c1, e=0.5):
    """Deterministic synthetic params; BN folded in eval mode.
    Weights kept in PyTorch (Cout, Cin) convention + bias (Cout,), f32."""
    c = int(c1 * e)
    mip = max(8, c // 32)
    keys = jax.random.split(key, 9)

    def rnd(k, shape, s=0.3):
        return s * jax.random.normal(k, shape, jnp.float32)

    def make_conv_bn(k, cin, cout, eps, conv_bias=False):
        ks = jax.random.split(k, 6)
        w = rnd(ks[0], (cout, cin))
        cb = rnd(ks[1], (cout,), 0.1) if conv_bias else jnp.zeros((cout,), jnp.float32)
        gamma = 1.0 + rnd(ks[2], (cout,), 0.1)
        beta = rnd(ks[3], (cout,), 0.1)
        mean = rnd(ks[4], (cout,), 0.1)
        var = 0.5 + jnp.abs(rnd(ks[5], (cout,), 0.2))
        scale = gamma / jnp.sqrt(var + eps)
        return w * scale[:, None], scale * (cb - mean) + beta

    raw = {}
    # TODO(synk): BatchNorm is eval-mode only (folded affine); training-mode
    # running-stat updates have no in-kernel equivalent here.
    raw['w_cv1'], raw['b_cv1'] = make_conv_bn(keys[0], c1, 2 * c, 1e-3)
    raw['w_a1'],  raw['b_a1']  = make_conv_bn(keys[1], c, mip, 1e-5, conv_bias=True)
    raw['w_ah'] = rnd(keys[2], (c, mip)); raw['b_ah'] = rnd(jax.random.fold_in(keys[2], 1), (c,), 0.1)
    raw['w_aw'] = rnd(keys[3], (c, mip)); raw['b_aw'] = rnd(jax.random.fold_in(keys[3], 1), (c,), 0.1)
    raw['w_f1'], raw['b_f1'] = make_conv_bn(keys[4], c, 2 * c, 1e-3)
    raw['w_f2'], raw['b_f2'] = make_conv_bn(keys[5], 2 * c, c, 1e-3)
    raw['w_cv2'], raw['b_cv2'] = make_conv_bn(keys[6], 2 * c, c1, 1e-3)
    return raw, c, mip


def make_kernel_params(raw, c):
    """bf16 (Cin, Cout) weights for channels-last matmuls, f32 (1, Cout) biases."""
    bf = jnp.bfloat16

    def w(t):
        return jnp.asarray(t.T, bf)

    def b(t):
        return jnp.asarray(t, jnp.float32)[None, :]

    return dict(
        w1a=w(raw['w_cv1'][:c]),    b1a=b(raw['b_cv1'][:c]),
        w1b=w(raw['w_cv1'][c:]),    b1b=b(raw['b_cv1'][c:]),
        wa1=w(raw['w_a1']),         ba1=b(raw['b_a1']),
        wah=w(raw['w_ah']),         bah=b(raw['b_ah']),
        waw=w(raw['w_aw']),         baw=b(raw['b_aw']),
        wf1=w(raw['w_f1']),         bf1=b(raw['b_f1']),
        wf2=w(raw['w_f2']),         bf2=b(raw['b_f2']),
        w2a=w(raw['w_cv2'][:, :c]), w2b=w(raw['w_cv2'][:, c:]),
        b2=b(raw['b_cv2']),
    )


def _bf16_round(t):
    return jnp.asarray(t, jnp.bfloat16).astype(jnp.float32)


# ------------------------ pure-JAX reference (NCHW, f32) ----------------------

def reference_forward(x, raw, c):
    def conv1x1(v, w, b):
        return jnp.einsum('oc,nchw->nohw', w, v) + b[None, :, None, None]

    def silu(v):
        return v * jax.nn.sigmoid(v)

    y = silu(conv1x1(x, raw['w_cv1'], raw['b_cv1']))
    a, b = y[:, :c], y[:, c:]
    n, cc, H, W = b.shape
    x_h = jnp.mean(b, axis=3, keepdims=True)                               # (n,c,H,1)
    x_w = jnp.transpose(jnp.mean(b, axis=2, keepdims=True), (0, 1, 3, 2))  # (n,c,W,1)
    ycat = jnp.concatenate([x_h, x_w], axis=2)                             # (n,c,H+W,1)
    ycat = conv1x1(ycat, raw['w_a1'], raw['b_a1'])
    ycat = ycat * jnp.clip(ycat + 3.0, 0.0, 6.0) / 6.0
    xh2, xw2 = ycat[:, :, :H], jnp.transpose(ycat[:, :, H:], (0, 1, 3, 2))
    a_h = jax.nn.sigmoid(conv1x1(xh2, raw['w_ah'], raw['b_ah']))
    a_w = jax.nn.sigmoid(conv1x1(xw2, raw['w_aw'], raw['b_aw']))
    b = b + b * a_w * a_h
    f = silu(conv1x1(b, raw['w_f1'], raw['b_f1']))
    f = conv1x1(f, raw['w_f2'], raw['b_f2'])
    b = b + f
    out = silu(conv1x1(jnp.concatenate([a, b], axis=1), raw['w_cv2'], raw['b_cv2']))
    return out


# ----------------------------------- main -------------------------------------

if __name__ == "__main__":
    key = jax.random.PRNGKey(0)
    kx, kp = jax.random.split(key)
    N, C, H, W = 2, 4, 16, 16          # c1 = c2 = 4, e = 0.5 -> c = 2, mip = 8
    x = jax.random.normal(kx, (N, C, H, W), jnp.float32)

    raw, c, mip = init_raw_params(kp, C, 0.5)
    # Round weights to bf16 so the f32 reference and the bf16 kernel share the
    # same effective weights -> tighter parity tolerance than before.
    raw = {k: (_bf16_round(v) if k.startswith('w_') else v) for k, v in raw.items()}
    params = make_kernel_params(raw, c)

    # Fused single-pass path (per-image footprint fits VMEM at these shapes).
    out_fused = jax.block_until_ready(ps_coordatt_forward(x, params))
    # Two-pass fallback path (H-tiled gate accumulation + row-tiled main pass),
    # forced here so both code paths are exercised on TPU.
    out_split = jax.block_until_ready(
        ps_coordatt_forward(x, params, force_two_pass=True,
                            row_tile=8, gate_row_tile=8))
    assert out_fused.shape == (N, C, H, W)
    assert out_split.shape == (N, C, H, W)

    ref = np.asarray(reference_forward(_bf16_round(x), raw, c))
    np.testing.assert_allclose(np.asarray(out_fused, np.float32), ref,
                               rtol=5e-2, atol=5e-2)
    np.testing.assert_allclose(np.asarray(out_split, np.float32), ref,
                               rtol=5e-2, atol=5e-2)

    print("KERNEL_OK")
</pallas_src>

<mosaic_0001>
module attributes {stable_mosaic.version = 11 : i64} {
  func.func @_fused_kernel(%arg0: i32, %arg1: memref<1x256x4xbf16, #tpu.memory_space<vmem>>, %arg2: memref<4x2xbf16, #tpu.memory_space<vmem>>, %arg3: memref<1x2xf32, #tpu.memory_space<vmem>>, %arg4: memref<4x2xbf16, #tpu.memory_space<vmem>>, %arg5: memref<1x2xf32, #tpu.memory_space<vmem>>, %arg6: memref<2x8xbf16, #tpu.memory_space<vmem>>, %arg7: memref<1x8xf32, #tpu.memory_space<vmem>>, %arg8: memref<8x2xbf16, #tpu.memory_space<vmem>>, %arg9: memref<1x2xf32, #tpu.memory_space<vmem>>, %arg10: memref<8x2xbf16, #tpu.memory_space<vmem>>, %arg11: memref<1x2xf32, #tpu.memory_space<vmem>>, %arg12: memref<2x4xbf16, #tpu.memory_space<vmem>>, %arg13: memref<1x4xf32, #tpu.memory_space<vmem>>, %arg14: memref<4x2xbf16, #tpu.memory_space<vmem>>, %arg15: memref<1x2xf32, #tpu.memory_space<vmem>>, %arg16: memref<2x4xbf16, #tpu.memory_space<vmem>>, %arg17: memref<2x4xbf16, #tpu.memory_space<vmem>>, %arg18: memref<1x4xf32, #tpu.memory_space<vmem>>, %arg19: memref<1x256x4xbf16, #tpu.memory_space<vmem>>) attributes {dimension_semantics = [#tpu.dimension_semantics<parallel>], iteration_bounds = array<i64: 2>, scalar_prefetch = 0 : i64, scratch_operands = 0 : i64, tpu.core_type = #tpu.core_type<tc>, window_params = [{transform_indices = @transform_0, window_bounds = array<i64: 1, 256, 4>}, {pipeline_mode = #tpu.pipeline_mode<synchronous>, transform_indices = @transform_1, window_bounds = array<i64: 4, 2>}, {pipeline_mode = #tpu.pipeline_mode<synchronous>, transform_indices = @transform_2, window_bounds = array<i64: 1, 2>}, {pipeline_mode = #tpu.pipeline_mode<synchronous>, transform_indices = @transform_3, window_bounds = array<i64: 4, 2>}, {pipeline_mode = #tpu.pipeline_mode<synchronous>, transform_indices = @transform_4, window_bounds = array<i64: 1, 2>}, {pipeline_mode = #tpu.pipeline_mode<synchronous>, transform_indices = @transform_5, window_bounds = array<i64: 2, 8>}, {pipeline_mode = #tpu.pipeline_mode<synchronous>, transform_indices = @transform_6, window_bounds = array<i64: 1, 8>}, {pipeline_mode = #tpu.pipeline_mode<synchronous>, transform_indices = @transform_7, window_bounds = array<i64: 8, 2>}, {pipeline_mode = #tpu.pipeline_mode<synchronous>, transform_indices = @transform_8, window_bounds = array<i64: 1, 2>}, {pipeline_mode = #tpu.pipeline_mode<synchronous>, transform_indices = @transform_9, window_bounds = array<i64: 8, 2>}, {pipeline_mode = #tpu.pipeline_mode<synchronous>, transform_indices = @transform_10, window_bounds = array<i64: 1, 2>}, {pipeline_mode = #tpu.pipeline_mode<synchronous>, transform_indices = @transform_11, window_bounds = array<i64: 2, 4>}, {pipeline_mode = #tpu.pipeline_mode<synchronous>, transform_indices = @transform_12, window_bounds = array<i64: 1, 4>}, {pipeline_mode = #tpu.pipeline_mode<synchronous>, transform_indices = @transform_13, window_bounds = array<i64: 4, 2>}, {pipeline_mode = #tpu.pipeline_mode<synchronous>, transform_indices = @transform_14, window_bounds = array<i64: 1, 2>}, {pipeline_mode = #tpu.pipeline_mode<synchronous>, transform_indices = @transform_15, window_bounds = array<i64: 2, 4>}, {pipeline_mode = #tpu.pipeline_mode<synchronous>, transform_indices = @transform_16, window_bounds = array<i64: 2, 4>}, {pipeline_mode = #tpu.pipeline_mode<synchronous>, transform_indices = @transform_17, window_bounds = array<i64: 1, 4>}, {transform_indices = @transform_18, window_bounds = array<i64: 1, 256, 4>}]} {
    %c0 = arith.constant 0 : index
    %c0_0 = arith.constant 0 : index
    %c0_1 = arith.constant 0 : index
    %0 = vector.load %arg1[%c0, %c0_0, %c0_1] : memref<1x256x4xbf16, #tpu.memory_space<vmem>>, vector<1x256x4xbf16>
    %1 = vector.shape_cast %0 : vector<1x256x4xbf16> to vector<256x4xbf16>
    %c0_2 = arith.constant 0 : index
    %c0_3 = arith.constant 0 : index
    %2 = vector.load %arg2[%c0_2, %c0_3] : memref<4x2xbf16, #tpu.memory_space<vmem>>, vector<4x2xbf16>
    %cst = arith.constant dense<0.000000e+00> : vector<256x2xf32>
    %3 = tpu.matmul %1, %2, %cst {dimension_numbers = #tpu.dot_dimension_numbers<[1], [0], [0], [1], [0, 0, 1, 1], [], []>} : vector<256x4xbf16>, vector<4x2xbf16>, vector<256x2xf32> -> vector<256x2xf32>
    %c0_4 = arith.constant 0 : index
    %c0_5 = arith.constant 0 : index
    %4 = vector.load %arg3[%c0_4, %c0_5] : memref<1x2xf32, #tpu.memory_space<vmem>>, vector<1x2xf32>
    %5 = vector.broadcast %4 : vector<1x2xf32> to vector<256x2xf32>
    %6 = arith.addf %3, %5 : vector<256x2xf32>
    %cst_6 = arith.constant 0.000000e+00 : f32
    %7 = vector.broadcast %cst_6 : f32 to vector<256x2xf32>
    %8 = arith.subf %7, %6 : vector<256x2xf32>
    %9 = math.exp %8 : vector<256x2xf32>
    %cst_7 = arith.constant 1.000000e+00 : f32
    %10 = vector.broadcast %cst_7 : f32 to vector<256x2xf32>
    %11 = arith.addf %10, %9 : vector<256x2xf32>
    %12 = tpu.reciprocal %11 {approx = true} : vector<256x2xf32> -> vector<256x2xf32>
    %13 = arith.mulf %6, %12 : vector<256x2xf32>
    %14 = arith.truncf %13 : vector<256x2xf32> to vector<256x2xbf16>
    %c0_8 = arith.constant 0 : index
    %c0_9 = arith.constant 0 : index
    %15 = vector.load %arg4[%c0_8, %c0_9] : memref<4x2xbf16, #tpu.memory_space<vmem>>, vector<4x2xbf16>
    %cst_10 = arith.constant dense<0.000000e+00> : vector<256x2xf32>
    %16 = tpu.matmul %1, %15, %cst_10 {dimension_numbers = #tpu.dot_dimension_numbers<[1], [0], [0], [1], [0, 0, 1, 1], [], []>} : vector<256x4xbf16>, vector<4x2xbf16>, vector<256x2xf32> -> vector<256x2xf32>
    %c0_11 = arith.constant 0 : index
    %c0_12 = arith.constant 0 : index
    %17 = vector.load %arg5[%c0_11, %c0_12] : memref<1x2xf32, #tpu.memory_space<vmem>>, vector<1x2xf32>
    %18 = vector.broadcast %17 : vector<1x2xf32> to vector<256x2xf32>
    %19 = arith.addf %16, %18 : vector<256x2xf32>
    %cst_13 = arith.constant 0.000000e+00 : f32
    %20 = vector.broadcast %cst_13 : f32 to vector<256x2xf32>
    %21 = arith.subf %20, %19 : vector<256x2xf32>
    %22 = math.exp %21 : vector<256x2xf32>
    %cst_14 = arith.constant 1.000000e+00 : f32
    %23 = vector.broadcast %cst_14 : f32 to vector<256x2xf32>
    %24 = arith.addf %23, %22 : vector<256x2xf32>
    %25 = tpu.reciprocal %24 {approx = true} : vector<256x2xf32> -> vector<256x2xf32>
    %26 = arith.mulf %19, %25 : vector<256x2xf32>
    %27 = vector.shape_cast %26 : vector<256x2xf32> to vector<16x16x2xf32>
    %cst_15 = arith.constant dense<0.000000e+00> : vector<16x2xf32>
    %28 = vector.multi_reduction <add>, %27, %cst_15 [1] : vector<16x16x2xf32> to vector<16x2xf32>
    %cst_16 = arith.constant 1.600000e+01 : f32
    %29 = vector.broadcast %cst_16 : f32 to vector<16x2xf32>
    %30 = arith.divf %28, %29 : vector<16x2xf32>
    %cst_17 = arith.constant dense<0.000000e+00> : vector<16x2xf32>
    %31 = vector.multi_reduction <add>, %27, %cst_17 [0] : vector<16x16x2xf32> to vector<16x2xf32>
    %cst_18 = arith.constant 1.600000e+01 : f32
    %32 = vector.broadcast %cst_18 : f32 to vector<16x2xf32>
    %33 = arith.divf %31, %32 : vector<16x2xf32>
    %34 = arith.truncf %30 : vector<16x2xf32> to vector<16x2xbf16>
    %c0_19 = arith.constant 0 : index
    %c0_20 = arith.constant 0 : index
    %35 = vector.load %arg6[%c0_19, %c0_20] : memref<2x8xbf16, #tpu.memory_space<vmem>>, vector<2x8xbf16>
    %cst_21 = arith.constant dense<0.000000e+00> : vector<16x8xf32>
    %36 = tpu.matmul %34, %35, %cst_21 {dimension_numbers = #tpu.dot_dimension_numbers<[1], [0], [0], [1], [0, 0, 1, 1], [], []>} : vector<16x2xbf16>, vector<2x8xbf16>, vector<16x8xf32> -> vector<16x8xf32>
    %c0_22 = arith.constant 0 : index
    %c0_23 = arith.constant 0 : index
    %37 = vector.load %arg7[%c0_22, %c0_23] : memref<1x8xf32, #tpu.memory_space<vmem>>, vector<1x8xf32>
    %38 = vector.broadcast %37 : vector<1x8xf32> to vector<16x8xf32>
    %39 = arith.addf %36, %38 : vector<16x8xf32>
    %cst_24 = arith.constant 3.000000e+00 : f32
    %40 = vector.broadcast %cst_24 : f32 to vector<16x8xf32>
    %41 = arith.addf %39, %40 : vector<16x8xf32>
    %cst_25 = arith.constant 0.000000e+00 : f32
    %cst_26 = arith.constant 6.000000e+00 : f32
    %42 = vector.broadcast %cst_25 : f32 to vector<16x8xf32>
    %43 = arith.maximumf %42, %41 : vector<16x8xf32>
    %44 = vector.broadcast %cst_26 : f32 to vector<16x8xf32>
    %45 = arith.minimumf %44, %43 : vector<16x8xf32>
    %46 = arith.mulf %39, %45 : vector<16x8xf32>
    %cst_27 = arith.constant 0.166666672 : f32
    %47 = vector.broadcast %cst_27 : f32 to vector<16x8xf32>
    %48 = arith.mulf %46, %47 : vector<16x8xf32>
    %49 = arith.truncf %33 : vector<16x2xf32> to vector<16x2xbf16>
    %c0_28 = arith.constant 0 : index
    %c0_29 = arith.constant 0 : index
    %50 = vector.load %arg6[%c0_28, %c0_29] : memref<2x8xbf16, #tpu.memory_space<vmem>>, vector<2x8xbf16>
    %cst_30 = arith.constant dense<0.000000e+00> : vector<16x8xf32>
    %51 = tpu.matmul %49, %50, %cst_30 {dimension_numbers = #tpu.dot_dimension_numbers<[1], [0], [0], [1], [0, 0, 1, 1], [], []>} : vector<16x2xbf16>, vector<2x8xbf16>, vector<16x8xf32> -> vector<16x8xf32>
    %c0_31 = arith.constant 0 : index
    %c0_32 = arith.constant 0 : index
    %52 = vector.load %arg7[%c0_31, %c0_32] : memref<1x8xf32, #tpu.memory_space<vmem>>, vector<1x8xf32>
    %53 = vector.broadcast %52 : vector<1x8xf32> to vector<16x8xf32>
    %54 = arith.addf %51, %53 : vector<16x8xf32>
    %cst_33 = arith.constant 3.000000e+00 : f32
    %55 = vector.broadcast %cst_33 : f32 to vector<16x8xf32>
    %56 = arith.addf %54, %55 : vector<16x8xf32>
    %cst_34 = arith.constant 0.000000e+00 : f32
    %cst_35 = arith.constant 6.000000e+00 : f32
    %57 = vector.broadcast %cst_34 : f32 to vector<16x8xf32>
    %58 = arith.maximumf %57, %56 : vector<16x8xf32>
    %59 = vector.broadcast %cst_35 : f32 to vector<16x8xf32>
    %60 = arith.minimumf %59, %58 : vector<16x8xf32>
    %61 = arith.mulf %54, %60 : vector<16x8xf32>
    %cst_36 = arith.constant 0.166666672 : f32
    %62 = vector.broadcast %cst_36 : f32 to vector<16x8xf32>
    %63 = arith.mulf %61, %62 : vector<16x8xf32>
    %64 = arith.truncf %48 : vector<16x8xf32> to vector<16x8xbf16>
    %c0_37 = arith.constant 0 : index
    %c0_38 = arith.constant 0 : index
    %65 = vector.load %arg8[%c0_37, %c0_38] : memref<8x2xbf16, #tpu.memory_space<vmem>>, vector<8x2xbf16>
    %cst_39 = arith.constant dense<0.000000e+00> : vector<16x2xf32>
    %66 = tpu.matmul %64, %65, %cst_39 {dimension_numbers = #tpu.dot_dimension_numbers<[1], [0], [0], [1], [0, 0, 1, 1], [], []>} : vector<16x8xbf16>, vector<8x2xbf16>, vector<16x2xf32> -> vector<16x2xf32>
    %c0_40 = arith.constant 0 : index
    %c0_41 = arith.constant 0 : index
    %67 = vector.load %arg9[%c0_40, %c0_41] : memref<1x2xf32, #tpu.memory_space<vmem>>, vector<1x2xf32>
    %68 = vector.broadcast %67 : vector<1x2xf32> to vector<16x2xf32>
    %69 = arith.addf %66, %68 : vector<16x2xf32>
    %cst_42 = arith.constant 0.000000e+00 : f32
    %70 = vector.broadcast %cst_42 : f32 to vector<16x2xf32>
    %71 = arith.subf %70, %69 : vector<16x2xf32>
    %72 = math.exp %71 : vector<16x2xf32>
    %cst_43 = arith.constant 1.000000e+00 : f32
    %73 = vector.broadcast %cst_43 : f32 to vector<16x2xf32>
    %74 = arith.addf %73, %72 : vector<16x2xf32>
    %75 = tpu.reciprocal %74 {approx = true} : vector<16x2xf32> -> vector<16x2xf32>
    %76 = arith.truncf %63 : vector<16x8xf32> to vector<16x8xbf16>
    %c0_44 = arith.constant 0 : index
    %c0_45 = arith.constant 0 : index
    %77 = vector.load %arg10[%c0_44, %c0_45] : memref<8x2xbf16, #tpu.memory_space<vmem>>, vector<8x2xbf16>
    %cst_46 = arith.constant dense<0.000000e+00> : vector<16x2xf32>
    %78 = tpu.matmul %76, %77, %cst_46 {dimension_numbers = #tpu.dot_dimension_numbers<[1], [0], [0], [1], [0, 0, 1, 1], [], []>} : vector<16x8xbf16>, vector<8x2xbf16>, vector<16x2xf32> -> vector<16x2xf32>
    %c0_47 = arith.constant 0 : index
    %c0_48 = arith.constant 0 : index
    %79 = vector.load %arg11[%c0_47, %c0_48] : memref<1x2xf32, #tpu.memory_space<vmem>>, vector<1x2xf32>
    %80 = vector.broadcast %79 : vector<1x2xf32> to vector<16x2xf32>
    %81 = arith.addf %78, %80 : vector<16x2xf32>
    %cst_49 = arith.constant 0.000000e+00 : f32
    %82 = vector.broadcast %cst_49 : f32 to vector<16x2xf32>
    %83 = arith.subf %82, %81 : vector<16x2xf32>
    %84 = math.exp %83 : vector<16x2xf32>
    %cst_50 = arith.constant 1.000000e+00 : f32
    %85 = vector.broadcast %cst_50 : f32 to vector<16x2xf32>
    %86 = arith.addf %85, %84 : vector<16x2xf32>
    %87 = tpu.reciprocal %86 {approx = true} : vector<16x2xf32> -> vector<16x2xf32>
    %88 = vector.shape_cast %87 : vector<16x2xf32> to vector<1x16x2xf32>
    %89 = vector.shape_cast %75 : vector<16x2xf32> to vector<16x1x2xf32>
    %90 = vector.broadcast %88 : vector<1x16x2xf32> to vector<16x16x2xf32>
    %91 = vector.broadcast %89 : vector<16x1x2xf32> to vector<16x16x2xf32>
    %92 = arith.mulf %90, %91 : vector<16x16x2xf32>
    %93 = vector.shape_cast %92 : vector<16x16x2xf32> to vector<256x2xf32>
    %94 = arith.mulf %26, %93 : vector<256x2xf32>
    %95 = arith.addf %26, %94 : vector<256x2xf32>
    %96 = arith.truncf %95 : vector<256x2xf32> to vector<256x2xbf16>
    %c0_51 = arith.constant 0 : index
    %c0_52 = arith.constant 0 : index
    %97 = vector.load %arg12[%c0_51, %c0_52] : memref<2x4xbf16, #tpu.memory_space<vmem>>, vector<2x4xbf16>
    %cst_53 = arith.constant dense<0.000000e+00> : vector<256x4xf32>
    %98 = tpu.matmul %96, %97, %cst_53 {dimension_numbers = #tpu.dot_dimension_numbers<[1], [0], [0], [1], [0, 0, 1, 1], [], []>} : vector<256x2xbf16>, vector<2x4xbf16>, vector<256x4xf32> -> vector<256x4xf32>
    %c0_54 = arith.constant 0 : index
    %c0_55 = arith.constant 0 : index
    %99 = vector.load %arg13[%c0_54, %c0_55] : memref<1x4xf32, #tpu.memory_space<vmem>>, vector<1x4xf32>
    %100 = vector.broadcast %99 : vector<1x4xf32> to vector<256x4xf32>
    %101 = arith.addf %98, %100 : vector<256x4xf32>
    %cst_56 = arith.constant 0.000000e+00 : f32
    %102 = vector.broadcast %cst_56 : f32 to vector<256x4xf32>
    %103 = arith.subf %102, %101 : vector<256x4xf32>
    %104 = math.exp %103 : vector<256x4xf32>
    %cst_57 = arith.constant 1.000000e+00 : f32
    %105 = vector.broadcast %cst_57 : f32 to vector<256x4xf32>
    %106 = arith.addf %105, %104 : vector<256x4xf32>
    %107 = tpu.reciprocal %106 {approx = true} : vector<256x4xf32> -> vector<256x4xf32>
    %108 = arith.mulf %101, %107 : vector<256x4xf32>
    %109 = arith.truncf %108 : vector<256x4xf32> to vector<256x4xbf16>
    %c0_58 = arith.constant 0 : index
    %c0_59 = arith.constant 0 : index
    %110 = vector.load %arg14[%c0_58, %c0_59] : memref<4x2xbf16, #tpu.memory_space<vmem>>, vector<4x2xbf16>
    %cst_60 = arith.constant dense<0.000000e+00> : vector<256x2xf32>
    %111 = tpu.matmul %109, %110, %cst_60 {dimension_numbers = #tpu.dot_dimension_numbers<[1], [0], [0], [1], [0, 0, 1, 1], [], []>} : vector<256x4xbf16>, vector<4x2xbf16>, vector<256x2xf32> -> vector<256x2xf32>
    %c0_61 = arith.constant 0 : index
    %c0_62 = arith.constant 0 : index
    %112 = vector.load %arg15[%c0_61, %c0_62] : memref<1x2xf32, #tpu.memory_space<vmem>>, vector<1x2xf32>
    %113 = vector.broadcast %112 : vector<1x2xf32> to vector<256x2xf32>
    %114 = arith.addf %111, %113 : vector<256x2xf32>
    %115 = arith.addf %95, %114 : vector<256x2xf32>
    %116 = arith.truncf %115 : vector<256x2xf32> to vector<256x2xbf16>
    %c0_63 = arith.constant 0 : index
    %c0_64 = arith.constant 0 : index
    %117 = vector.load %arg16[%c0_63, %c0_64] : memref<2x4xbf16, #tpu.memory_space<vmem>>, vector<2x4xbf16>
    %cst_65 = arith.constant dense<0.000000e+00> : vector<256x4xf32>
    %118 = tpu.matmul %14, %117, %cst_65 {dimension_numbers = #tpu.dot_dimension_numbers<[1], [0], [0], [1], [0, 0, 1, 1], [], []>} : vector<256x2xbf16>, vector<2x4xbf16>, vector<256x4xf32> -> vector<256x4xf32>
    %c0_66 = arith.constant 0 : index
    %c0_67 = arith.constant 0 : index
    %119 = vector.load %arg17[%c0_66, %c0_67] : memref<2x4xbf16, #tpu.memory_space<vmem>>, vector<2x4xbf16>
    %cst_68 = arith.constant dense<0.000000e+00> : vector<256x4xf32>
    %120 = tpu.matmul %116, %119, %cst_68 {dimension_numbers = #tpu.dot_dimension_numbers<[1], [0], [0], [1], [0, 0, 1, 1], [], []>} : vector<256x2xbf16>, vector<2x4xbf16>, vector<256x4xf32> -> vector<256x4xf32>
    %121 = arith.addf %118, %120 : vector<256x4xf32>
    %c0_69 = arith.constant 0 : index
    %c0_70 = arith.constant 0 : index
    %122 = vector.load %arg18[%c0_69, %c0_70] : memref<1x4xf32, #tpu.memory_space<vmem>>, vector<1x4xf32>
    %123 = vector.broadcast %122 : vector<1x4xf32> to vector<256x4xf32>
    %124 = arith.addf %121, %123 : vector<256x4xf32>
    %cst_71 = arith.constant 0.000000e+00 : f32
    %125 = vector.broadcast %cst_71 : f32 to vector<256x4xf32>
    %126 = arith.subf %125, %124 : vector<256x4xf32>
    %127 = math.exp %126 : vector<256x4xf32>
    %cst_72 = arith.constant 1.000000e+00 : f32
    %128 = vector.broadcast %cst_72 : f32 to vector<256x4xf32>
    %129 = arith.addf %128, %127 : vector<256x4xf32>
    %130 = tpu.reciprocal %129 {approx = true} : vector<256x4xf32> -> vector<256x4xf32>
    %131 = arith.mulf %124, %130 : vector<256x4xf32>
    %132 = arith.truncf %131 : vector<256x4xf32> to vector<256x4xbf16>
    %c0_73 = arith.constant 0 : index
    %c0_74 = arith.constant 0 : index
    %c0_75 = arith.constant 0 : index
    %133 = vector.load %arg19[%c0_73, %c0_74, %c0_75] : memref<1x256x4xbf16, #tpu.memory_space<vmem>>, vector<1x256x4xbf16>
    %134 = vector.shape_cast %133 : vector<1x256x4xbf16> to vector<256x4xbf16>
    %135 = vector.shape_cast %132 : vector<256x4xbf16> to vector<1x256x4xbf16>
    tpu.vector_store %arg19[%c0_73, %c0_74, %c0_75], %135 {strides = array<i32>} : memref<1x256x4xbf16, #tpu.memory_space<vmem>>, vector<1x256x4xbf16>,
    return
  }
  func.func @transform_0(%arg0: i32) -> (i32, i32, i32) {
    %c0_i32 = arith.constant 0 : i32
    %c0_i32_0 = arith.constant 0 : i32
    %c0_i32_1 = arith.constant 0 : i32
    return %arg0, %c0_i32, %c0_i32_0 : i32, i32, i32
  }
  func.func @transform_1(%arg0: i32) -> (i32, i32) {
    %c0_i32 = arith.constant 0 : i32
    %c0_i32_0 = arith.constant 0 : i32
    %c0_i32_1 = arith.constant 0 : i32
    return %c0_i32, %c0_i32_0 : i32, i32
  }
  func.func @transform_2(%arg0: i32) -> (i32, i32) {
    %c0_i32 = arith.constant 0 : i32
    %c0_i32_0 = arith.constant 0 : i32
    %c0_i32_1 = arith.constant 0 : i32
    return %c0_i32, %c0_i32_0 : i32, i32
  }
  func.func @transform_3(%arg0: i32) -> (i32, i32) {
    %c0_i32 = arith.constant 0 : i32
    %c0_i32_0 = arith.constant 0 : i32
    %c0_i32_1 = arith.constant 0 : i32
    return %c0_i32, %c0_i32_0 : i32, i32
  }
  func.func @transform_4(%arg0: i32) -> (i32, i32) {
    %c0_i32 = arith.constant 0 : i32
    %c0_i32_0 = arith.constant 0 : i32
    %c0_i32_1 = arith.constant 0 : i32
    return %c0_i32, %c0_i32_0 : i32, i32
  }
  func.func @transform_5(%arg0: i32) -> (i32, i32) {
    %c0_i32 = arith.constant 0 : i32
    %c0_i32_0 = arith.constant 0 : i32
    %c0_i32_1 = arith.constant 0 : i32
    return %c0_i32, %c0_i32_0 : i32, i32
  }
  func.func @transform_6(%arg0: i32) -> (i32, i32) {
    %c0_i32 = arith.constant 0 : i32
    %c0_i32_0 = arith.constant 0 : i32
    %c0_i32_1 = arith.constant 0 : i32
    return %c0_i32, %c0_i32_0 : i32, i32
  }
  func.func @transform_7(%arg0: i32) -> (i32, i32) {
    %c0_i32 = arith.constant 0 : i32
    %c0_i32_0 = arith.constant 0 : i32
    %c0_i32_1 = arith.constant 0 : i32
    return %c0_i32, %c0_i32_0 : i32, i32
  }
  func.func @transform_8(%arg0: i32) -> (i32, i32) {
    %c0_i32 = arith.constant 0 : i32
    %c0_i32_0 = arith.constant 0 : i32
    %c0_i32_1 = arith.constant 0 : i32
    return %c0_i32, %c0_i32_0 : i32, i32
  }
  func.func @transform_9(%arg0: i32) -> (i32, i32) {
    %c0_i32 = arith.constant 0 : i32
    %c0_i32_0 = arith.constant 0 : i32
    %c0_i32_1 = arith.constant 0 : i32
    return %c0_i32, %c0_i32_0 : i32, i32
  }
  func.func @transform_10(%arg0: i32) -> (i32, i32) {
    %c0_i32 = arith.constant 0 : i32
    %c0_i32_0 = arith.constant 0 : i32
    %c0_i32_1 = arith.constant 0 : i32
    return %c0_i32, %c0_i32_0 : i32, i32
  }
  func.func @transform_11(%arg0: i32) -> (i32, i32) {
    %c0_i32 = arith.constant 0 : i32
    %c0_i32_0 = arith.constant 0 : i32
    %c0_i32_1 = arith.constant 0 : i32
    return %c0_i32, %c0_i32_0 : i32, i32
  }
  func.func @transform_12(%arg0: i32) -> (i32, i32) {
    %c0_i32 = arith.constant 0 : i32
    %c0_i32_0 = arith.constant 0 : i32
    %c0_i32_1 = arith.constant 0 : i32
    return %c0_i32, %c0_i32_0 : i32, i32
  }
  func.func @transform_13(%arg0: i32) -> (i32, i32) {
    %c0_i32 = arith.constant 0 : i32
    %c0_i32_0 = arith.constant 0 : i32
    %c0_i32_1 = arith.constant 0 : i32
    return %c0_i32, %c0_i32_0 : i32, i32
  }
  func.func @transform_14(%arg0: i32) -> (i32, i32) {
    %c0_i32 = arith.constant 0 : i32
    %c0_i32_0 = arith.constant 0 : i32
    %c0_i32_1 = arith.constant 0 : i32
    return %c0_i32, %c0_i32_0 : i32, i32
  }
  func.func @transform_15(%arg0: i32) -> (i32, i32) {
    %c0_i32 = arith.constant 0 : i32
    %c0_i32_0 = arith.constant 0 : i32
    %c0_i32_1 = arith.constant 0 : i32
    return %c0_i32, %c0_i32_0 : i32, i32
  }
  func.func @transform_16(%arg0: i32) -> (i32, i32) {
    %c0_i32 = arith.constant 0 : i32
    %c0_i32_0 = arith.constant 0 : i32
    %c0_i32_1 = arith.constant 0 : i32
    return %c0_i32, %c0_i32_0 : i32, i32
  }
  func.func @transform_17(%arg0: i32) -> (i32, i32) {
    %c0_i32 = arith.constant 0 : i32
    %c0_i32_0 = arith.constant 0 : i32
    %c0_i32_1 = arith.constant 0 : i32
    return %c0_i32, %c0_i32_0 : i32, i32
  }
  func.func @transform_18(%arg0: i32) -> (i32, i32, i32) {
    %c0_i32 = arith.constant 0 : i32
    %c0_i32_0 = arith.constant 0 : i32
    %c0_i32_1 = arith.constant 0 : i32
    return %arg0, %c0_i32, %c0_i32_0 : i32, i32, i32
  }
}

</mosaic_0001>

<llo_original>
// kernel: tpu_custom_call.1
$region0: #{tpu_custom_call.1}
  #allocation0 [shape = 'u32[]', space=smem, size = 0x4, offset = 0x4, fixed_abs, tag = 'smem constant byte address 0x4 - core index']
  #allocation1 [shape = 'u32[144,128]{1,0:T(1,128)}', space=vmem, size = 0x12000, scoped, tag = 'internal scratch']
  %s0 = inlined_call_operand.vmem [shape: bf16[2,256,4], index: 0, kind: input, shape index: {}]
  %s1 = inlined_call_operand.vmem [shape: bf16[4,2], index: 1, kind: input, shape index: {}]
  %s2 = inlined_call_operand.vmem [shape: f32[1,2], index: 2, kind: input, shape index: {}]
  %s3 = inlined_call_operand.vmem [shape: bf16[4,2], index: 3, kind: input, shape index: {}]
  %s4 = inlined_call_operand.vmem [shape: f32[1,2], index: 4, kind: input, shape index: {}]
  %s5 = inlined_call_operand.vmem [shape: bf16[2,8], index: 5, kind: input, shape index: {}]
  %s6 = inlined_call_operand.vmem [shape: f32[1,8], index: 6, kind: input, shape index: {}]
  %s7 = inlined_call_operand.vmem [shape: bf16[8,2], index: 7, kind: input, shape index: {}]
  %s8 = inlined_call_operand.vmem [shape: f32[1,2], index: 8, kind: input, shape index: {}]
  %s9 = inlined_call_operand.vmem [shape: bf16[8,2], index: 9, kind: input, shape index: {}]
  %s10 = inlined_call_operand.vmem [shape: f32[1,2], index: 10, kind: input, shape index: {}]
  %s11 = inlined_call_operand.vmem [shape: bf16[2,4], index: 11, kind: input, shape index: {}]
  %s12 = inlined_call_operand.vmem [shape: f32[1,4], index: 12, kind: input, shape index: {}]
  %s13 = inlined_call_operand.vmem [shape: bf16[4,2], index: 13, kind: input, shape index: {}]
  %s14 = inlined_call_operand.vmem [shape: f32[1,2], index: 14, kind: input, shape index: {}]
  %s15 = inlined_call_operand.vmem [shape: bf16[2,4], index: 15, kind: input, shape index: {}]
  %s16 = inlined_call_operand.vmem [shape: bf16[2,4], index: 16, kind: input, shape index: {}]
  %s17 = inlined_call_operand.vmem [shape: f32[1,4], index: 17, kind: input, shape index: {}]
  %s18 = inlined_call_operand.vmem [shape: bf16[2,256,4], index: 18, kind: output, shape index: {}]
  %s19 = sld [smem:[#allocation0]]
  $region105: #{tpu_custom_call.1} parent=0
    _
  %s21 = ssub.s32 1, %s19
  %s22 = scalar_select 0, %s21, %s19
  loop: start=0, step=1, limit=4
  $region2: #{tpu_custom_call.1} parent=0 // loop_pre_header
    _
  $region3: #{tpu_custom_call.1} parent=0 // loop_header
    %s24 = sphi 0, %s28
    %p25 = scmp.ge.s32.totalorder %s24, 4
    %s34 = sphi 0, %s36
    %s37 = sphi 0, %s34
    %s38 = sphi 0, %s37
    %s54 = sphi 0, %s38
    %s58 = sphi 0, %s58
    %s60 = sphi 0, %s58
    %s61 = sphi 0, %s60
    %s75 = sphi 0, %s61
    %s79 = sphi 0, %s79
    %s81 = sphi 0, %s79
    %s82 = sphi 0, %s81
    %s96 = sphi 0, %s82
    %s100 = sphi 0, %s100
    %s102 = sphi 0, %s100
    %s103 = sphi 0, %s102
    %s117 = sphi 0, %s103
    %s121 = sphi 0, %s121
    %s123 = sphi 0, %s121
    %s124 = sphi 0, %s123
    %s138 = sphi 0, %s124
    %s142 = sphi 0, %s142
    %s144 = sphi 0, %s142
    %s145 = sphi 0, %s144
    %s159 = sphi 0, %s145
    %s163 = sphi 0, %s163
    %s165 = sphi 0, %s163
    %s166 = sphi 0, %s165
    %s180 = sphi 0, %s166
    %s184 = sphi 0, %s184
    %s186 = sphi 0, %s184
    %s187 = sphi 0, %s186
    %s201 = sphi 0, %s187
    %s205 = sphi 0, %s205
    %s207 = sphi 0, %s205
    %s208 = sphi 0, %s207
    %s222 = sphi 0, %s208
    %s226 = sphi 0, %s226
    %s228 = sphi 0, %s226
    %s229 = sphi 0, %s228
    %s243 = sphi 0, %s229
    %s247 = sphi 0, %s247
    %s249 = sphi 0, %s247
    %s250 = sphi 0, %s249
    %s264 = sphi 0, %s250
    %s268 = sphi 0, %s268
    %s270 = sphi 0, %s268
    %s271 = sphi 0, %s270
    %s285 = sphi 0, %s271
    %s289 = sphi 0, %s289
    %s291 = sphi 0, %s289
    %s292 = sphi 0, %s291
    %s306 = sphi 0, %s292
    %s310 = sphi 0, %s310
    %s312 = sphi 0, %s310
    %s313 = sphi 0, %s312
    %s327 = sphi 0, %s313
    %s331 = sphi 0, %s331
    %s333 = sphi 0, %s331
    %s334 = sphi 0, %s333
    %s348 = sphi 0, %s334
    %s352 = sphi 0, %s352
    %s354 = sphi 0, %s352
    %s355 = sphi 0, %s354
    %s369 = sphi 0, %s355
    %s373 = sphi 0, %s373
    %s375 = sphi 0, %s373
    %s376 = sphi 0, %s375
    %s390 = sphi 0, %s376
    %s394 = sphi 0, %s394
    %s396 = sphi 0, %s394
    %s397 = sphi 0, %s396
    %s411 = sphi 0, %s397
    %s417 = sphi 0, %s419
    %s420 = sphi 0, %s417
    %s421 = sphi 0, %s420
    %s437 = sphi 0, %s421
  $region4: #{tpu_custom_call.1} parent=0 // loop_header_branch
    %27 = sbr.rel (%p25) target = $region8
  $region5: #{tpu_custom_call.1} parent=0 // loop_body
    %s29 = ssub.s32 %s24, 1
    %s30 = ssub.s32 %s24, 2
    %s31 = sadd.s32 %s24, 1
    %s32 = ssub.s32 %s24, %s31
    %p33 = scmp.eq.s32.totalorder %s32, 0
    %s35 = sadd.s32 %s34, 1
    %s36 = scalar_select %p33, %s34, %s35
    %p39 = pneg %p33
    %p40 = scmp.eq.s32.totalorder %s24, 1
    %p41 = por %p39, %p40
    %p42 = scmp.ne.s32.totalorder %s34, %s37
    %p43 = scmp.eq.s32.totalorder %s24, 0
    %p44 = por %p42, %p43
    %p45 = scmp.ne.s32.totalorder %s34, %s37
    %p46 = scmp.eq.s32.totalorder %s29, 1
    %p47 = por %p45, %p46
    %p48 = scmp.ne.s32.totalorder %s37, %s38
    %p49 = scmp.eq.s32.totalorder %s29, 0
    %p50 = por %p48, %p49
    %p51 = scmp.ne.s32.totalorder %s37, %s38
    %p52 = scmp.eq.s32.totalorder %s30, 1
    %p53 = por %p51, %p52
    %p55 = scmp.ne.s32.totalorder %s38, %s54
    %p56 = scmp.eq.s32.totalorder %s30, 0
    %p57 = por %p55, %p56
    %s59 = sadd.s32 %s58, 1
    %p62 = scmp.eq.s32.totalorder %s24, 1
    %p63 = scmp.ne.s32.totalorder %s58, %s60
    %p64 = scmp.eq.s32.totalorder %s24, 0
    %p65 = por %p63, %p64
    %p66 = scmp.ne.s32.totalorder %s58, %s60
    %p67 = scmp.eq.s32.totalorder %s29, 1
    %p68 = por %p66, %p67
    %p69 = scmp.ne.s32.totalorder %s60, %s61
    %p70 = scmp.eq.s32.totalorder %s29, 0
    %p71 = por %p69, %p70
    %p72 = scmp.ne.s32.totalorder %s60, %s61
    %p73 = scmp.eq.s32.totalorder %s30, 1
    %p74 = por %p72, %p73
    %p76 = scmp.ne.s32.totalorder %s61, %s75
    %p77 = scmp.eq.s32.totalorder %s30, 0
    %p78 = por %p76, %p77
    %s80 = sadd.s32 %s79, 1
    %p83 = scmp.eq.s32.totalorder %s24, 1
    %p84 = scmp.ne.s32.totalorder %s79, %s81
    %p85 = scmp.eq.s32.totalorder %s24, 0
    %p86 = por %p84, %p85
    %p87 = scmp.ne.s32.totalorder %s79, %s81
    %p88 = scmp.eq.s32.totalorder %s29, 1
    %p89 = por %p87, %p88
    %p90 = scmp.ne.s32.totalorder %s81, %s82
    %p91 = scmp.eq.s32.totalorder %s29, 0
    %p92 = por %p90, %p91
    %p93 = scmp.ne.s32.totalorder %s81, %s82
    %p94 = scmp.eq.s32.totalorder %s30, 1
    %p95 = por %p93, %p94
    %p97 = scmp.ne.s32.totalorder %s82, %s96
    %p98 = scmp.eq.s32.totalorder %s30, 0
    %p99 = por %p97, %p98
    %s101 = sadd.s32 %s100, 1
    %p104 = scmp.eq.s32.totalorder %s24, 1
    %p105 = scmp.ne.s32.totalorder %s100, %s102
    %p106 = scmp.eq.s32.totalorder %s24, 0
    %p107 = por %p105, %p106
    %p108 = scmp.ne.s32.totalorder %s100, %s102
    %p109 = scmp.eq.s32.totalorder %s29, 1
    %p110 = por %p108, %p109
    %p111 = scmp.ne.s32.totalorder %s102, %s103
    %p112 = scmp.eq.s32.totalorder %s29, 0
    %p113 = por %p111, %p112
    %p114 = scmp.ne.s32.totalorder %s102, %s103
    %p115 = scmp.eq.s32.totalorder %s30, 1
    %p116 = por %p114, %p115
    %p118 = scmp.ne.s32.totalorder %s103, %s117
    %p119 = scmp.eq.s32.totalorder %s30, 0
    %p120 = por %p118, %p119
    %s122 = sadd.s32 %s121, 1
    %p125 = scmp.eq.s32.totalorder %s24, 1
    %p126 = scmp.ne.s32.totalorder %s121, %s123
    %p127 = scmp.eq.s32.totalorder %s24, 0
    %p128 = por %p126, %p127
    %p129 = scmp.ne.s32.totalorder %s121, %s123
    %p130 = scmp.eq.s32.totalorder %s29, 1
    %p131 = por %p129, %p130
    %p132 = scmp.ne.s32.totalorder %s123, %s124
    %p133 = scmp.eq.s32.totalorder %s29, 0
    %p134 = por %p132, %p133
    %p135 = scmp.ne.s32.totalorder %s123, %s124
    %p136 = scmp.eq.s32.totalorder %s30, 1
    %p137 = por %p135, %p136
    %p139 = scmp.ne.s32.totalorder %s124, %s138
    %p140 = scmp.eq.s32.totalorder %s30, 0
    %p141 = por %p139, %p140
    %s143 = sadd.s32 %s142, 1
    %p146 = scmp.eq.s32.totalorder %s24, 1
    %p147 = scmp.ne.s32.totalorder %s142, %s144
    %p148 = scmp.eq.s32.totalorder %s24, 0
    %p149 = por %p147, %p148
    %p150 = scmp.ne.s32.totalorder %s142, %s144
    %p151 = scmp.eq.s32.totalorder %s29, 1
    %p152 = por %p150, %p151
    %p153 = scmp.ne.s32.totalorder %s144, %s145
    %p154 = scmp.eq.s32.totalorder %s29, 0
    %p155 = por %p153, %p154
    %p156 = scmp.ne.s32.totalorder %s144, %s145
    %p157 = scmp.eq.s32.totalorder %s30, 1
    %p158 = por %p156, %p157
    %p160 = scmp.ne.s32.totalorder %s145, %s159
    %p161 = scmp.eq.s32.totalorder %s30, 0
    %p162 = por %p160, %p161
    %s164 = sadd.s32 %s163, 1
    %p167 = scmp.eq.s32.totalorder %s24, 1
    %p168 = scmp.ne.s32.totalorder %s163, %s165
    %p169 = scmp.eq.s32.totalorder %s24, 0
    %p170 = por %p168, %p169
    %p171 = scmp.ne.s32.totalorder %s163, %s165
    %p172 = scmp.eq.s32.totalorder %s29, 1
    %p173 = por %p171, %p172
    %p174 = scmp.ne.s32.totalorder %s165, %s166
    %p175 = scmp.eq.s32.totalorder %s29, 0
    %p176 = por %p174, %p175
    %p177 = scmp.ne.s32.totalorder %s165, %s166
    %p178 = scmp.eq.s32.totalorder %s30, 1
    %p179 = por %p177, %p178
    %p181 = scmp.ne.s32.totalorder %s166, %s180
    %p182 = scmp.eq.s32.totalorder %s30, 0
    %p183 = por %p181, %p182
    %s185 = sadd.s32 %s184, 1
    %p188 = scmp.eq.s32.totalorder %s24, 1
    %p189 = scmp.ne.s32.totalorder %s184, %s186
    %p190 = scmp.eq.s32.totalorder %s24, 0
    %p191 = por %p189, %p190
    %p192 = scmp.ne.s32.totalorder %s184, %s186
    %p193 = scmp.eq.s32.totalorder %s29, 1
    %p194 = por %p192, %p193
    %p195 = scmp.ne.s32.totalorder %s186, %s187
    %p196 = scmp.eq.s32.totalorder %s29, 0
    %p197 = por %p195, %p196
    %p198 = scmp.ne.s32.totalorder %s186, %s187
    %p199 = scmp.eq.s32.totalorder %s30, 1
    %p200 = por %p198, %p199
    %p202 = scmp.ne.s32.totalorder %s187, %s201
    %p203 = scmp.eq.s32.totalorder %s30, 0
    %p204 = por %p202, %p203
    %s206 = sadd.s32 %s205, 1
    %p209 = scmp.eq.s32.totalorder %s24, 1
    %p210 = scmp.ne.s32.totalorder %s205, %s207
    %p211 = scmp.eq.s32.totalorder %s24, 0
    %p212 = por %p210, %p211
    %p213 = scmp.ne.s32.totalorder %s205, %s207
    %p214 = scmp.eq.s32.totalorder %s29, 1
    %p215 = por %p213, %p214
    %p216 = scmp.ne.s32.totalorder %s207, %s208
    %p217 = scmp.eq.s32.totalorder %s29, 0
    %p218 = por %p216, %p217
    %p219 = scmp.ne.s32.totalorder %s207, %s208
    %p220 = scmp.eq.s32.totalorder %s30, 1
    %p221 = por %p219, %p220
    %p223 = scmp.ne.s32.totalorder %s208, %s222
    %p224 = scmp.eq.s32.totalorder %s30, 0
    %p225 = por %p223, %p224
    %s227 = sadd.s32 %s226, 1
    %p230 = scmp.eq.s32.totalorder %s24, 1
    %p231 = scmp.ne.s32.totalorder %s226, %s228
    %p232 = scmp.eq.s32.totalorder %s24, 0
    %p233 = por %p231, %p232
    %p234 = scmp.ne.s32.totalorder %s226, %s228
    %p235 = scmp.eq.s32.totalorder %s29, 1
    %p236 = por %p234, %p235
    %p237 = scmp.ne.s32.totalorder %s228, %s229
    %p238 = scmp.eq.s32.totalorder %s29, 0
    %p239 = por %p237, %p238
    %p240 = scmp.ne.s32.totalorder %s228, %s229
    %p241 = scmp.eq.s32.totalorder %s30, 1
    %p242 = por %p240, %p241
    %p244 = scmp.ne.s32.totalorder %s229, %s243
    %p245 = scmp.eq.s32.totalorder %s30, 0
    %p246 = por %p244, %p245
    %s248 = sadd.s32 %s247, 1
    %p251 = scmp.eq.s32.totalorder %s24, 1
    %p252 = scmp.ne.s32.totalorder %s247, %s249
    %p253 = scmp.eq.s32.totalorder %s24, 0
    %p254 = por %p252, %p253
    %p255 = scmp.ne.s32.totalorder %s247, %s249
    %p256 = scmp.eq.s32.totalorder %s29, 1
    %p257 = por %p255, %p256
    %p258 = scmp.ne.s32.totalorder %s249, %s250
    %p259 = scmp.eq.s32.totalorder %s29, 0
    %p260 = por %p258, %p259
    %p261 = scmp.ne.s32.totalorder %s249, %s250
    %p262 = scmp.eq.s32.totalorder %s30, 1
    %p263 = por %p261, %p262
    %p265 = scmp.ne.s32.totalorder %s250, %s264
    %p266 = scmp.eq.s32.totalorder %s30, 0
    %p267 = por %p265, %p266
    %s269 = sadd.s32 %s268, 1
    %p272 = scmp.eq.s32.totalorder %s24, 1
    %p273 = scmp.ne.s32.totalorder %s268, %s270
    %p274 = scmp.eq.s32.totalorder %s24, 0
    %p275 = por %p273, %p274
    %p276 = scmp.ne.s32.totalorder %s268, %s270
    %p277 = scmp.eq.s32.totalorder %s29, 1
    %p278 = por %p276, %p277
    %p279 = scmp.ne.s32.totalorder %s270, %s271
    %p280 = scmp.eq.s32.totalorder %s29, 0
    %p281 = por %p279, %p280
    %p282 = scmp.ne.s32.totalorder %s270, %s271
    %p283 = scmp.eq.s32.totalorder %s30, 1
    %p284 = por %p282, %p283
    %p286 = scmp.ne.s32.totalorder %s271, %s285
    %p287 = scmp.eq.s32.totalorder %s30, 0
    %p288 = por %p286, %p287
    %s290 = sadd.s32 %s289, 1
    %p293 = scmp.eq.s32.totalorder %s24, 1
    %p294 = scmp.ne.s32.totalorder %s289, %s291
    %p295 = scmp.eq.s32.totalorder %s24, 0
    %p296 = por %p294, %p295
    %p297 = scmp.ne.s32.totalorder %s289, %s291
    %p298 = scmp.eq.s32.totalorder %s29, 1
    %p299 = por %p297, %p298
    %p300 = scmp.ne.s32.totalorder %s291, %s292
    %p301 = scmp.eq.s32.totalorder %s29, 0
    %p302 = por %p300, %p301
    %p303 = scmp.ne.s32.totalorder %s291, %s292
    %p304 = scmp.eq.s32.totalorder %s30, 1
    %p305 = por %p303, %p304
    %p307 = scmp.ne.s32.totalorder %s292, %s306
    %p308 = scmp.eq.s32.totalorder %s30, 0
    %p309 = por %p307, %p308
    %s311 = sadd.s32 %s310, 1
    %p314 = scmp.eq.s32.totalorder %s24, 1
    %p315 = scmp.ne.s32.totalorder %s310, %s312
    %p316 = scmp.eq.s32.totalorder %s24, 0
    %p317 = por %p315, %p316
    %p318 = scmp.ne.s32.totalorder %s310, %s312
    %p319 = scmp.eq.s32.totalorder %s29, 1
    %p320 = por %p318, %p319
    %p321 = scmp.ne.s32.totalorder %s312, %s313
    %p322 = scmp.eq.s32.totalorder %s29, 0
    %p323 = por %p321, %p322
    %p324 = scmp.ne.s32.totalorder %s312, %s313
    %p325 = scmp.eq.s32.totalorder %s30, 1
    %p326 = por %p324, %p325
    %p328 = scmp.ne.s32.totalorder %s313, %s327
    %p329 = scmp.eq.s32.totalorder %s30, 0
    %p330 = por %p328, %p329
    %s332 = sadd.s32 %s331, 1
    %p335 = scmp.eq.s32.totalorder %s24, 1
    %p336 = scmp.ne.s32.totalorder %s331, %s333
    %p337 = scmp.eq.s32.totalorder %s24, 0
    %p338 = por %p336, %p337
    %p339 = scmp.ne.s32.totalorder %s331, %s333
    %p340 = scmp.eq.s32.totalorder %s29, 1
    %p341 = por %p339, %p340
    %p342 = scmp.ne.s32.totalorder %s333, %s334
    %p343 = scmp.eq.s32.totalorder %s29, 0
    %p344 = por %p342, %p343
    %p345 = scmp.ne.s32.totalorder %s333, %s334
    %p346 = scmp.eq.s32.totalorder %s30, 1
    %p347 = por %p345, %p346
    %p349 = scmp.ne.s32.totalorder %s334, %s348
    %p350 = scmp.eq.s32.totalorder %s30, 0
    %p351 = por %p349, %p350
    %s353 = sadd.s32 %s352, 1
    %p356 = scmp.eq.s32.totalorder %s24, 1
    %p357 = scmp.ne.s32.totalorder %s352, %s354
    %p358 = scmp.eq.s32.totalorder %s24, 0
    %p359 = por %p357, %p358
    %p360 = scmp.ne.s32.totalorder %s352, %s354
    %p361 = scmp.eq.s32.totalorder %s29, 1
    %p362 = por %p360, %p361
    %p363 = scmp.ne.s32.totalorder %s354, %s355
    %p364 = scmp.eq.s32.totalorder %s29, 0
    %p365 = por %p363, %p364
    %p366 = scmp.ne.s32.totalorder %s354, %s355
    %p367 = scmp.eq.s32.totalorder %s30, 1
    %p368 = por %p366, %p367
    %p370 = scmp.ne.s32.totalorder %s355, %s369
    %p371 = scmp.eq.s32.totalorder %s30, 0
    %p372 = por %p370, %p371
    %s374 = sadd.s32 %s373, 1
    %p377 = scmp.eq.s32.totalorder %s24, 1
    %p378 = scmp.ne.s32.totalorder %s373, %s375
    %p379 = scmp.eq.s32.totalorder %s24, 0
    %p380 = por %p378, %p379
    %p381 = scmp.ne.s32.totalorder %s373, %s375
    %p382 = scmp.eq.s32.totalorder %s29, 1
    %p383 = por %p381, %p382
    %p384 = scmp.ne.s32.totalorder %s375, %s376
    %p385 = scmp.eq.s32.totalorder %s29, 0
    %p386 = por %p384, %p385
    %p387 = scmp.ne.s32.totalorder %s375, %s376
    %p388 = scmp.eq.s32.totalorder %s30, 1
    %p389 = por %p387, %p388
    %p391 = scmp.ne.s32.totalorder %s376, %s390
    %p392 = scmp.eq.s32.totalorder %s30, 0
    %p393 = por %p391, %p392
    %s395 = sadd.s32 %s394, 1
    %p398 = scmp.eq.s32.totalorder %s24, 1
    %p399 = scmp.ne.s32.totalorder %s394, %s396
    %p400 = scmp.eq.s32.totalorder %s24, 0
    %p401 = por %p399, %p400
    %p402 = scmp.ne.s32.totalorder %s394, %s396
    %p403 = scmp.eq.s32.totalorder %s29, 1
    %p404 = por %p402, %p403
    %p405 = scmp.ne.s32.totalorder %s396, %s397
    %p406 = scmp.eq.s32.totalorder %s29, 0
    %p407 = por %p405, %p406
    %p408 = scmp.ne.s32.totalorder %s396, %s397
    %p409 = scmp.eq.s32.totalorder %s30, 1
    %p410 = por %p408, %p409
    %p412 = scmp.ne.s32.totalorder %s397, %s411
    %p413 = scmp.eq.s32.totalorder %s30, 0
    %p414 = por %p412, %p413
    %s415 = ssub.s32 %s24, %s31
    %p416 = scmp.eq.s32.totalorder %s415, 0
    %s418 = sadd.s32 %s417, 1
    %s419 = scalar_select %p416, %s417, %s418
    %p422 = pneg %p416
    %p423 = scmp.eq.s32.totalorder %s24, 1
    %p424 = por %p422, %p423
    %p425 = scmp.ne.s32.totalorder %s417, %s420
    %p426 = scmp.eq.s32.totalorder %s24, 0
    %p427 = por %p425, %p426
    %p428 = scmp.ne.s32.totalorder %s417, %s420
    %p429 = scmp.eq.s32.totalorder %s29, 1
    %p430 = por %p428, %p429
    %p431 = scmp.ne.s32.totalorder %s420, %s421
    %p432 = scmp.eq.s32.totalorder %s29, 0
    %p433 = por %p431, %p432
    %p434 = scmp.ne.s32.totalorder %s420, %s421
    %p435 = scmp.eq.s32.totalorder %s30, 1
    %p436 = por %p434, %p435
    %p438 = scmp.ne.s32.totalorder %s421, %s437
    %p439 = scmp.eq.s32.totalorder %s30, 0
    %p440 = por %p438, %p439
    %p441 = scmp.le.s32.totalorder 1, %s24
    %p442 = scmp.lt.s32.totalorder %s24, 3
    %p443 = pnand %p441, %p442
    %p444 = pneg %p443
    // Predicated region
    $region9: #{tpu_custom_call.1} parent=5 // pred_check
      _
    $region10: #{tpu_custom_call.1} parent=5 // pred_check_branch
      %446 = sbr.rel (%p443) target = $region12
    $region11: #{tpu_custom_call.1} parent=5 // pred_region
      %s447 = ssub.s32 %s24, 1
      // Predicated region
      $region13: #{tpu_custom_call.1} parent=11 // pred_check
        %p448 = pneg %p71
      $region14: #{tpu_custom_call.1} parent=11 // pred_check_branch
        %450 = sbr.rel (%p448) target = $region16
      $region15: #{tpu_custom_call.1} parent=11 // pred_region
        _
      $region16: #{tpu_custom_call.1} parent=11 // pred_fallthru
        _
      // Predicated region
      $region17: #{tpu_custom_call.1} parent=11 // pred_check
        %p451 = pneg %p92
      $region18: #{tpu_custom_call.1} parent=11 // pred_check_branch
        %453 = sbr.rel (%p451) target = $region20
      $region19: #{tpu_custom_call.1} parent=11 // pred_region
        _
      $region20: #{tpu_custom_call.1} parent=11 // pred_fallthru
        _
      // Predicated region
      $region21: #{tpu_custom_call.1} parent=11 // pred_check
        %p454 = pneg %p113
      $region22: #{tpu_custom_call.1} parent=11 // pred_check_branch
        %456 = sbr.rel (%p454) target = $region24
      $region23: #{tpu_custom_call.1} parent=11 // pred_region
        _
      $region24: #{tpu_custom_call.1} parent=11 // pred_fallthru
        _
      // Predicated region
      $region25: #{tpu_custom_call.1} parent=11 // pred_check
        %p457 = pneg %p134
      $region26: #{tpu_custom_call.1} parent=11 // pred_check_branch
        %459 = sbr.rel (%p457) target = $region28
      $region27: #{tpu_custom_call.1} parent=11 // pred_region
        _
      $region28: #{tpu_custom_call.1} parent=11 // pred_fallthru
        _
      // Predicated region
      $region29: #{tpu_custom_call.1} parent=11 // pred_check
        %p460 = pneg %p155
      $region30: #{tpu_custom_call.1} parent=11 // pred_check_branch
        %462 = sbr.rel (%p460) target = $region32
      $region31: #{tpu_custom_call.1} parent=11 // pred_region
        _
      $region32: #{tpu_custom_call.1} parent=11 // pred_fallthru
        _
      // Predicated region
      $region33: #{tpu_custom_call.1} parent=11 // pred_check
        %p463 = pneg %p176
      $region34: #{tpu_custom_call.1} parent=11 // pred_check_branch
        %465 = sbr.rel (%p463) target = $region36
      $region35: #{tpu_custom_call.1} parent=11 // pred_region
        _
      $region36: #{tpu_custom_call.1} parent=11 // pred_fallthru
        _
      // Predicated region
      $region37: #{tpu_custom_call.1} parent=11 // pred_check
        %p466 = pneg %p197
      $region38: #{tpu_custom_call.1} parent=11 // pred_check_branch
        %468 = sbr.rel (%p466) target = $region40
      $region39: #{tpu_custom_call.1} parent=11 // pred_region
        _
      $region40: #{tpu_custom_call.1} parent=11 // pred_fallthru
        _
      // Predicated region
      $region41: #{tpu_custom_call.1} parent=11 // pred_check
        %p469 = pneg %p218
      $region42: #{tpu_custom_call.1} parent=11 // pred_check_branch
        %471 = sbr.rel (%p469) target = $region44
      $region43: #{tpu_custom_call.1} parent=11 // pred_region
        _
      $region44: #{tpu_custom_call.1} parent=11 // pred_fallthru
        _
      // Predicated region
      $region45: #{tpu_custom_call.1} parent=11 // pred_check
        %p472 = pneg %p239
      $region46: #{tpu_custom_call.1} parent=11 // pred_check_branch
        %474 = sbr.rel (%p472) target = $region48
      $region47: #{tpu_custom_call.1} parent=11 // pred_region
        _
      $region48: #{tpu_custom_call.1} parent=11 // pred_fallthru
        _
      // Predicated region
      $region49: #{tpu_custom_call.1} parent=11 // pred_check
        %p475 = pneg %p260
      $region50: #{tpu_custom_call.1} parent=11 // pred_check_branch
        %477 = sbr.rel (%p475) target = $region52
      $region51: #{tpu_custom_call.1} parent=11 // pred_region
        _
      $region52: #{tpu_custom_call.1} parent=11 // pred_fallthru
        _
      // Predicated region
      $region53: #{tpu_custom_call.1} parent=11 // pred_check
        %p478 = pneg %p281
      $region54: #{tpu_custom_call.1} parent=11 // pred_check_branch
        %480 = sbr.rel (%p478) target = $region56
      $region55: #{tpu_custom_call.1} parent=11 // pred_region
        _
      $region56: #{tpu_custom_call.1} parent=11 // pred_fallthru
        _
      // Predicated region
      $region57: #{tpu_custom_call.1} parent=11 // pred_check
        %p481 = pneg %p302
      $region58: #{tpu_custom_call.1} parent=11 // pred_check_branch
        %483 = sbr.rel (%p481) target = $region60
      $region59: #{tpu_custom_call.1} parent=11 // pred_region
        _
      $region60: #{tpu_custom_call.1} parent=11 // pred_fallthru
        _
      // Predicated region
      $region61: #{tpu_custom_call.1} parent=11 // pred_check
        %p484 = pneg %p323
      $region62: #{tpu_custom_call.1} parent=11 // pred_check_branch
        %486 = sbr.rel (%p484) target = $region64
      $region63: #{tpu_custom_call.1} parent=11 // pred_region
        _
      $region64: #{tpu_custom_call.1} parent=11 // pred_fallthru
        _
      // Predicated region
      $region65: #{tpu_custom_call.1} parent=11 // pred_check
        %p487 = pneg %p344
      $region66: #{tpu_custom_call.1} parent=11 // pred_check_branch
        %489 = sbr.rel (%p487) target = $region68
      $region67: #{tpu_custom_call.1} parent=11 // pred_region
        _
      $region68: #{tpu_custom_call.1} parent=11 // pred_fallthru
        _
      // Predicated region
      $region69: #{tpu_custom_call.1} parent=11 // pred_check
        %p490 = pneg %p365
      $region70: #{tpu_custom_call.1} parent=11 // pred_check_branch
        %492 = sbr.rel (%p490) target = $region72
      $region71: #{tpu_custom_call.1} parent=11 // pred_region
        _
      $region72: #{tpu_custom_call.1} parent=11 // pred_fallthru
        _
      // Predicated region
      $region73: #{tpu_custom_call.1} parent=11 // pred_check
        %p493 = pneg %p386
      $region74: #{tpu_custom_call.1} parent=11 // pred_check_branch
        %495 = sbr.rel (%p493) target = $region76
      $region75: #{tpu_custom_call.1} parent=11 // pred_region
        _
      $region76: #{tpu_custom_call.1} parent=11 // pred_fallthru
        _
      // Predicated region
      $region77: #{tpu_custom_call.1} parent=11 // pred_check
        %p496 = pneg %p407
      $region78: #{tpu_custom_call.1} parent=11 // pred_check_branch
        %498 = sbr.rel (%p496) target = $region80
      $region79: #{tpu_custom_call.1} parent=11 // pred_region
        _
      $region80: #{tpu_custom_call.1} parent=11 // pred_fallthru
        _
    $region12: #{tpu_custom_call.1} parent=5 // pred_fallthru
      _
    %p499 = scmp.lt.s32.totalorder %s24, 2
    // Predicated region
    $region81: #{tpu_custom_call.1} parent=5 // pred_check
      %p500 = pneg %p499
    $region82: #{tpu_custom_call.1} parent=5 // pred_check_branch
      %502 = sbr.rel (%p500) target = $region84
    $region83: #{tpu_custom_call.1} parent=5 // pred_region
      // Predicated region
      $region85: #{tpu_custom_call.1} parent=83 // pred_check
        %p503 = pneg %p44
      $region86: #{tpu_custom_call.1} parent=83 // pred_check_branch
        %505 = sbr.rel (%p503) target = $region88
      $region87: #{tpu_custom_call.1} parent=83 // pred_region
        %p506 = scmp.lt.s32.totalorder %s24, 1
        %s507 = scalar_select %p506, %s24, 1
        %s508 = smul.addr %s507, 32
        %s509 = smul.addr %s508, 4
        %s510 = scalar_lea.vmem %s0, %s509
      $region88: #{tpu_custom_call.1} parent=83 // pred_fallthru
        _
    $region84: #{tpu_custom_call.1} parent=5 // pred_fallthru
      _
    %p511 = scmp.le.s32.totalorder 1, %s24
    %p512 = scmp.lt.s32.totalorder %s24, 3
    %p513 = pnand %p511, %p512
    %p514 = pneg %p513
    // Predicated region
    $region89: #{tpu_custom_call.1} parent=5 // pred_check
      _
    $region90: #{tpu_custom_call.1} parent=5 // pred_check_branch
      %516 = sbr.rel (%p513) target = $region92
    $region91: #{tpu_custom_call.1} parent=5 // pred_region
      %s517 = ssub.s32 %s24, 1
      %p518 = scmp.lt.s32.totalorder %s29, 1
      %s519 = scalar_select %p518, %s29, 1
      %s520 = smul.addr %s519, 32
      %s521 = smul.addr %s520, 4
      %s522 = scalar_lea.vmem %s0, %s521
      %p523 = pneg %p50
      %p524 = pneg %p47
      %p525 = pneg %p71
      %p526 = pneg %p68
      %p527 = pneg %p92
      %p528 = pneg %p89
      %p529 = pneg %p113
      %p530 = pneg %p110
      %p531 = pneg %p134
      %p532 = pneg %p131
      %p533 = pneg %p155
      %p534 = pneg %p152
      %p535 = pneg %p176
      %p536 = pneg %p173
      %p537 = pneg %p197
      %p538 = pneg %p194
      %p539 = pneg %p218
      %p540 = pneg %p215
      %p541 = pneg %p239
      %p542 = pneg %p236
      %p543 = pneg %p260
      %p544 = pneg %p257
      %p545 = pneg %p281
      %p546 = pneg %p278
      %p547 = pneg %p302
      %p548 = pneg %p299
      %p549 = pneg %p323
      %p550 = pneg %p320
      %p551 = pneg %p344
      %p552 = pneg %p341
      %p553 = pneg %p365
      %p554 = pneg %p362
      %p555 = pneg %p386
      %p556 = pneg %p383
      %p557 = pneg %p407
      %p558 = pneg %p404
      %p559 = pneg %p433
      %p560 = pneg %p430
      %p561 = scmp.lt.s32.totalorder %s29, 1
      %s562 = scalar_select %p561, %s29, 1
      %s563 = smul.addr %s562, 32
      %s564 = smul.addr %s563, 4
      %s565 = scalar_lea.vmem %s18, %s564
      %p566 = scmp.lt.s32.totalorder %s29, 1
      %s567 = scalar_select %p566, %s29, 1
      %s568 = smul.addr %s567, 32
      %s569 = smul.addr %s568, 4
      %s570 = scalar_lea.vmem %s0, %s569
      %p571 = scmp.lt.s32.totalorder %s29, 1
      %s572 = scalar_select %p571, %s29, 1
      %s573 = smul.addr %s572, 32
      %s574 = smul.addr %s573, 4
      %s575 = scalar_lea.vmem %s18, %s574
      %v577 = vld [vmem:[%s570] sm:$0xf]
      %v578 = vld [vmem:[%s570 + $0x4] sm:$0xf]
      %v579 = vld [vmem:[%s570 + $0x8] sm:$0xf]
      %v580 = vld [vmem:[%s570 + $0xc] sm:$0xf]
      %v581 = vld [vmem:[%s570 + $0x10] sm:$0xf]
      %v582 = vld [vmem:[%s570 + $0x14] sm:$0xf]
      %v583 = vld [vmem:[%s570 + $0x18] sm:$0xf]
      %v584 = vld [vmem:[%s570 + $0x1c] sm:$0xf]
      %v585 = vld [vmem:[%s570 + $0x20] sm:$0xf]
      %v586 = vld [vmem:[%s570 + $0x24] sm:$0xf]
      %v587 = vld [vmem:[%s570 + $0x28] sm:$0xf]
      %v588 = vld [vmem:[%s570 + $0x2c] sm:$0xf]
      %v589 = vld [vmem:[%s570 + $0x30] sm:$0xf]
      %v590 = vld [vmem:[%s570 + $0x34] sm:$0xf]
      %v591 = vld [vmem:[%s570 + $0x38] sm:$0xf]
      %v592 = vld [vmem:[%s570 + $0x3c] sm:$0xf]
      %v593 = vld [vmem:[%s570 + $0x40] sm:$0xf]
      %v594 = vld [vmem:[%s570 + $0x44] sm:$0xf]
      %v595 = vld [vmem:[%s570 + $0x48] sm:$0xf]
      %v596 = vld [vmem:[%s570 + $0x4c] sm:$0xf]
      %v597 = vld [vmem:[%s570 + $0x50] sm:$0xf]
      %v598 = vld [vmem:[%s570 + $0x54] sm:$0xf]
      %v599 = vld [vmem:[%s570 + $0x58] sm:$0xf]
      %v600 = vld [vmem:[%s570 + $0x5c] sm:$0xf]
      %v601 = vld [vmem:[%s570 + $0x60] sm:$0xf]
      %v602 = vld [vmem:[%s570 + $0x64] sm:$0xf]
      %v603 = vld [vmem:[%s570 + $0x68] sm:$0xf]
      %v604 = vld [vmem:[%s570 + $0x6c] sm:$0xf]
      %v605 = vld [vmem:[%s570 + $0x70] sm:$0xf]
      %v606 = vld [vmem:[%s570 + $0x74] sm:$0xf]
      %v607 = vld [vmem:[%s570 + $0x78] sm:$0xf]
      %v608 = vld [vmem:[%s570 + $0x7c] sm:$0xf]
      %v609 = vld [vmem:[%s1] sm:$0x3]
      %v610 = vld [vmem:[%s2] sm:$0x1]
      %v612 = vlaneseq
      %v613 = vshrl.u32 %v612, 7
      %v614 = vsub.s32 0, %v613
      %v615 = vrot.slane %v610, %v614
      %v649 = vunpack.c.l.b16 %v577
      %v650 = vunpack.c.l.b16 %v578
      %v651 = vunpack.c.l.b16 %v579
      %v652 = vunpack.c.l.b16 %v580
      %v653 = vunpack.c.l.b16 %v581
      %v654 = vunpack.c.l.b16 %v582
      %v655 = vunpack.c.l.b16 %v583
      %v656 = vunpack.c.l.b16 %v584
      %v657 = vunpack.c.l.b16 %v585
      %v658 = vunpack.c.l.b16 %v586
      %v659 = vunpack.c.l.b16 %v587
      %v660 = vunpack.c.l.b16 %v588
      %v661 = vunpack.c.l.b16 %v589
      %v662 = vunpack.c.l.b16 %v590
      %v663 = vunpack.c.l.b16 %v591
      %v664 = vunpack.c.l.b16 %v592
      %v665 = vunpack.c.l.b16 %v593
      %v666 = vunpack.c.l.b16 %v594
      %v667 = vunpack.c.l.b16 %v595
      %v668 = vunpack.c.l.b16 %v596
      %v669 = vunpack.c.l.b16 %v597
      %v670 = vunpack.c.l.b16 %v598
      %v671 = vunpack.c.l.b16 %v599
      %v672 = vunpack.c.l.b16 %v600
      %v673 = vunpack.c.l.b16 %v601
      %v674 = vunpack.c.l.b16 %v602
      %v675 = vunpack.c.l.b16 %v603
      %v676 = vunpack.c.l.b16 %v604
      %v677 = vunpack.c.l.b16 %v605
      %v678 = vunpack.c.l.b16 %v606
      %v679 = vunpack.c.l.b16 %v607
      %v680 = vunpack.c.l.b16 %v608
      %v681 = vpack.c.b16 %v650, %v649
      %v682 = vpack.c.b16 %v652, %v651
      %v683 = vpack.c.b16 %v654, %v653
      %v684 = vpack.c.b16 %v656, %v655
      %v685 = vpack.c.b16 %v658, %v657
      %v686 = vpack.c.b16 %v660, %v659
      %v687 = vpack.c.b16 %v662, %v661
      %v688 = vpack.c.b16 %v664, %v663
      %v689 = vpack.c.b16 %v666, %v665
      %v690 = vpack.c.b16 %v668, %v667
      %v691 = vpack.c.b16 %v670, %v669
      %v692 = vpack.c.b16 %v672, %v671
      %v693 = vpack.c.b16 %v674, %v673
      %v694 = vpack.c.b16 %v676, %v675
      %v695 = vpack.c.b16 %v678, %v677
      %v696 = vpack.c.b16 %v680, %v679
      %vm697 = vcmask 31744
      %v699 = vsel %vm697, %v681, 0
      %v702 = vsel %vm697, %v682, 0
      %v705 = vsel %vm697, %v683, 0
      %v708 = vsel %vm697, %v684, 0
      %v711 = vsel %vm697, %v685, 0
      %v714 = vsel %vm697, %v686, 0
      %v717 = vsel %vm697, %v687, 0
      %v720 = vsel %vm697, %v688, 0
      %v723 = vsel %vm697, %v689, 0
      %v726 = vsel %vm697, %v690, 0
      %v729 = vsel %vm697, %v691, 0
      %v732 = vsel %vm697, %v692, 0
      %v735 = vsel %vm697, %v693, 0
      %v738 = vsel %vm697, %v694, 0
      %v741 = vsel %vm697, %v695, 0
      %v744 = vsel %vm697, %v696, 0
      %vm746 = vcmask 1041408
      %v748 = vsel %vm746, %v609, 0
      %750 = vmatprep.subr.bf16.mxu0 0
      %751 = vmatpush1.bf16.msra.mxu0 0
      %752 = vmatprep.subr.bf16.mxu0 0
      %753 = vmatpush1.bf16.msra.mxu0 0
      %754 = vmatprep.subr.bf16.mxu0 0
      %755 = vmatpush1.bf16.msra.mxu0 0
      %756 = vmatprep.subr.bf16.mxu0 0
      %757 = vmatpush1.bf16.msra.mxu0 0
      %758 = vmatprep.subr.bf16.mxu0 0
      %759 = vmatpush1.bf16.msra.mxu0 0
      %760 = vmatprep.subr.bf16.mxu0 0
      %761 = vmatpush1.bf16.msra.mxu0 0
      %762 = vmatprep.subr.bf16.mxu0 0
      %763 = vmatpush1.bf16.msra.mxu0 0
      %764 = vmatprep.subr.bf16.mxu0 0
      %765 = vmatpush1.bf16.msra.mxu0 %v748
      %766 = vmatprep.subr.bf16.mxu0 0
      %767 = vmatpush2.bf16.msra.mxu0 0
      %768 = vmatprep.subr.bf16.mxu0 0
      %769 = vmatpush2.bf16.msra.mxu0 0
      %770 = vmatprep.subr.bf16.mxu0 0
      %771 = vmatpush2.bf16.msra.mxu0 0
      %772 = vmatprep.subr.bf16.mxu0 0
      %773 = vmatpush2.bf16.msra.mxu0 0
      %774 = vmatprep.subr.bf16.mxu0 0
      %775 = vmatpush2.bf16.msra.mxu0 0
      %776 = vmatprep.subr.bf16.mxu0 0
      %777 = vmatpush2.bf16.msra.mxu0 0
      %778 = vmatprep.subr.bf16.mxu0 0
      %779 = vmatpush2.bf16.msra.mxu0 0
      %780 = vmatprep.subr.bf16.mxu0 0
      %781 = vmatpush2.bf16.msra.mxu0 0
      %782 = vmatprep.mubr.bf16.mxu0 0
      %783 = vmatmul.mubr.bf16.gmra.mxu0 %v699
      %v784 = vpop.f32.mrf.mxu0
      %v785 = vadd.f32 %v615, %v784
      %v786 = vpop.f32.mrf.mxu0
      %v787 = vpop.f32.mrf.mxu0
      %v788 = vadd.f32 %v615, %v787
      %v789 = vpop.f32.mrf.mxu0
      %790 = vmatprep.mubr.bf16.mxu0 0
      %791 = vmatmul.mubr.bf16.gmra.mxu0 %v702
      %v792 = vpop.f32.mrf.mxu0
      %v793 = vadd.f32 %v615, %v792
      %v794 = vpop.f32.mrf.mxu0
      %v795 = vpop.f32.mrf.mxu0
      %v796 = vadd.f32 %v615, %v795
      %v797 = vpop.f32.mrf.mxu0
      %798 = vmatprep.mubr.bf16.mxu0 0
      %799 = vmatmul.mubr.bf16.gmra.mxu0 %v705
      %v800 = vpop.f32.mrf.mxu0
      %v801 = vadd.f32 %v615, %v800
      %v802 = vpop.f32.mrf.mxu0
      %v803 = vpop.f32.mrf.mxu0
      %v804 = vadd.f32 %v615, %v803
      %v805 = vpop.f32.mrf.mxu0
      %806 = vmatprep.mubr.bf16.mxu0 0
      %807 = vmatmul.mubr.bf16.gmra.mxu0 %v708
      %v808 = vpop.f32.mrf.mxu0
      %v809 = vadd.f32 %v615, %v808
      %v810 = vpop.f32.mrf.mxu0
      %v811 = vpop.f32.mrf.mxu0
      %v812 = vadd.f32 %v615, %v811
      %v813 = vpop.f32.mrf.mxu0
      %814 = vmatprep.mubr.bf16.mxu0 0
      %815 = vmatmul.mubr.bf16.gmra.mxu0 %v711
      %v816 = vpop.f32.mrf.mxu0
      %v817 = vadd.f32 %v615, %v816
      %v818 = vpop.f32.mrf.mxu0
      %v819 = vpop.f32.mrf.mxu0
      %v820 = vadd.f32 %v615, %v819
      %v821 = vpop.f32.mrf.mxu0
      %822 = vmatprep.mubr.bf16.mxu0 0
      %823 = vmatmul.mubr.bf16.gmra.mxu0 %v714
      %v824 = vpop.f32.mrf.mxu0
      %v825 = vadd.f32 %v615, %v824
      %v826 = vpop.f32.mrf.mxu0
      %v827 = vpop.f32.mrf.mxu0
      %v828 = vadd.f32 %v615, %v827
      %v829 = vpop.f32.mrf.mxu0
      %830 = vmatprep.mubr.bf16.mxu0 0
      %831 = vmatmul.mubr.bf16.gmra.mxu0 %v717
      %v832 = vpop.f32.mrf.mxu0
      %v833 = vadd.f32 %v615, %v832
      %v834 = vpop.f32.mrf.mxu0
      %v835 = vpop.f32.mrf.mxu0
      %v836 = vadd.f32 %v615, %v835
      %v837 = vpop.f32.mrf.mxu0
      %838 = vmatprep.mubr.bf16.mxu0 0
      %839 = vmatmul.mubr.bf16.gmra.mxu0 %v720
      %v840 = vpop.f32.mrf.mxu0
      %v841 = vadd.f32 %v615, %v840
      %v842 = vpop.f32.mrf.mxu0
      %v843 = vpop.f32.mrf.mxu0
      %v844 = vadd.f32 %v615, %v843
      %v845 = vpop.f32.mrf.mxu0
      %846 = vmatprep.mubr.bf16.mxu0 0
      %847 = vmatmul.mubr.bf16.gmra.mxu0 %v723
      %v848 = vpop.f32.mrf.mxu0
      %v849 = vadd.f32 %v615, %v848
      %v850 = vpop.f32.mrf.mxu0
      %v851 = vpop.f32.mrf.mxu0
      %v852 = vadd.f32 %v615, %v851
      %v853 = vpop.f32.mrf.mxu0
      %854 = vmatprep.mubr.bf16.mxu0 0
      %855 = vmatmul.mubr.bf16.gmra.mxu0 %v726
      %v856 = vpop.f32.mrf.mxu0
      %v857 = vadd.f32 %v615, %v856
      %v858 = vpop.f32.mrf.mxu0
      %v859 = vpop.f32.mrf.mxu0
      %v860 = vadd.f32 %v615, %v859
      %v861 = vpop.f32.mrf.mxu0
      %862 = vmatprep.mubr.bf16.mxu0 0
      %863 = vmatmul.mubr.bf16.gmra.mxu0 %v729
      %v864 = vpop.f32.mrf.mxu0
      %v865 = vadd.f32 %v615, %v864
      %v866 = vpop.f32.mrf.mxu0
      %v867 = vpop.f32.mrf.mxu0
      %v868 = vadd.f32 %v615, %v867
      %v869 = vpop.f32.mrf.mxu0
      %870 = vmatprep.mubr.bf16.mxu0 0
      %871 = vmatmul.mubr.bf16.gmra.mxu0 %v732
      %v872 = vpop.f32.mrf.mxu0
      %v873 = vadd.f32 %v615, %v872
      %v874 = vpop.f32.mrf.mxu0
      %v875 = vpop.f32.mrf.mxu0
      %v876 = vadd.f32 %v615, %v875
      %v877 = vpop.f32.mrf.mxu0
      %878 = vmatprep.mubr.bf16.mxu0 0
      %879 = vmatmul.mubr.bf16.gmra.mxu0 %v735
      %v880 = vpop.f32.mrf.mxu0
      %v881 = vadd.f32 %v615, %v880
      %v882 = vpop.f32.mrf.mxu0
      %v883 = vpop.f32.mrf.mxu0
      %v884 = vadd.f32 %v615, %v883
      %v885 = vpop.f32.mrf.mxu0
      %886 = vmatprep.mubr.bf16.mxu0 0
      %887 = vmatmul.mubr.bf16.gmra.mxu0 %v738
      %v888 = vpop.f32.mrf.mxu0
      %v889 = vadd.f32 %v615, %v888
      %v890 = vpop.f32.mrf.mxu0
      %v891 = vpop.f32.mrf.mxu0
      %v892 = vadd.f32 %v615, %v891
      %v893 = vpop.f32.mrf.mxu0
      %894 = vmatprep.mubr.bf16.mxu0 0
      %895 = vmatmul.mubr.bf16.gmra.mxu0 %v741
      %v896 = vpop.f32.mrf.mxu0
      %v897 = vadd.f32 %v615, %v896
      %v898 = vpop.f32.mrf.mxu0
      %v899 = vpop.f32.mrf.mxu0
      %v900 = vadd.f32 %v615, %v899
      %v901 = vpop.f32.mrf.mxu0
      %902 = vmatprep.mubr.bf16.mxu0 0
      %903 = vmatmul.mubr.bf16.gmra.mxu0 %v744
      %v904 = vpop.f32.mrf.mxu0
      %v905 = vadd.f32 %v615, %v904
      %v906 = vpop.f32.mrf.mxu0
      %v907 = vpop.f32.mrf.mxu0
      %v908 = vadd.f32 %v615, %v907
      %v909 = vpop.f32.mrf.mxu0
      %910 = vdwg.mxu0
      %v911 = vsub.f32 0.0, %v785
      %v912 = vsub.f32 0.0, %v788
      %v913 = vsub.f32 0.0, %v793
      %v914 = vsub.f32 0.0, %v796
      %v915 = vsub.f32 0.0, %v801
      %v916 = vsub.f32 0.0, %v804
      %v917 = vsub.f32 0.0, %v809
      %v918 = vsub.f32 0.0, %v812
      %v919 = vsub.f32 0.0, %v817
      %v920 = vsub.f32 0.0, %v820
      %v921 = vsub.f32 0.0, %v825
      %v922 = vsub.f32 0.0, %v828
      %v923 = vsub.f32 0.0, %v833
      %v924 = vsub.f32 0.0, %v836
      %v925 = vsub.f32 0.0, %v841
      %v926 = vsub.f32 0.0, %v844
      %v927 = vsub.f32 0.0, %v849
      %v928 = vsub.f32 0.0, %v852
      %v929 = vsub.f32 0.0, %v857
      %v930 = vsub.f32 0.0, %v860
      %v931 = vsub.f32 0.0, %v865
      %v932 = vsub.f32 0.0, %v868
      %v933 = vsub.f32 0.0, %v873
      %v934 = vsub.f32 0.0, %v876
      %v935 = vsub.f32 0.0, %v881
      %v936 = vsub.f32 0.0, %v884
      %v937 = vsub.f32 0.0, %v889
      %v938 = vsub.f32 0.0, %v892
      %v939 = vsub.f32 0.0, %v897
      %v940 = vsub.f32 0.0, %v900
      %v941 = vsub.f32 0.0, %v905
      %v942 = vsub.f32 0.0, %v908
      %v943 = vmul.f32 %v911, 1.442695
      %v944 = vpow.pop %v943
      %v945 = vmul.f32 %v912, 1.442695
      %v946 = vpow.pop %v945
      %v947 = vmul.f32 %v913, 1.442695
      %v948 = vpow.pop %v947
      %v949 = vmul.f32 %v914, 1.442695
      %v950 = vpow.pop %v949
      %v951 = vmul.f32 %v915, 1.442695
      %v952 = vpow.pop %v951
      %v953 = vmul.f32 %v916, 1.442695
      %v954 = vpow.pop %v953
      %v955 = vmul.f32 %v917, 1.442695
      %v956 = vpow.pop %v955
      %v957 = vmul.f32 %v918, 1.442695
      %v958 = vpow.pop %v957
      %v959 = vmul.f32 %v919, 1.442695
      %v960 = vpow.pop %v959
      %v961 = vmul.f32 %v920, 1.442695
      %v962 = vpow.pop %v961
      %v963 = vmul.f32 %v921, 1.442695
      %v964 = vpow.pop %v963
      %v965 = vmul.f32 %v922, 1.442695
      %v966 = vpow.pop %v965
      %v967 = vmul.f32 %v923, 1.442695
      %v968 = vpow.pop %v967
      %v969 = vmul.f32 %v924, 1.442695
      %v970 = vpow.pop %v969
      %v971 = vmul.f32 %v925, 1.442695
      %v972 = vpow.pop %v971
      %v973 = vmul.f32 %v926, 1.442695
      %v974 = vpow.pop %v973
      %v975 = vmul.f32 %v927, 1.442695
      %v976 = vpow.pop %v975
      %v977 = vmul.f32 %v928, 1.442695
      %v978 = vpow.pop %v977
      %v979 = vmul.f32 %v929, 1.442695
      %v980 = vpow.pop %v979
      %v981 = vmul.f32 %v930, 1.442695
      %v982 = vpow.pop %v981
      %v983 = vmul.f32 %v931, 1.442695
      %v984 = vpow.pop %v983
      %v985 = vmul.f32 %v932, 1.442695
      %v986 = vpow.pop %v985
      %v987 = vmul.f32 %v933, 1.442695
      %v988 = vpow.pop %v987
      %v989 = vmul.f32 %v934, 1.442695
      %v990 = vpow.pop %v989
      %v991 = vmul.f32 %v935, 1.442695
      %v992 = vpow.pop %v991
      %v993 = vmul.f32 %v936, 1.442695
      %v994 = vpow.pop %v993
      %v995 = vmul.f32 %v937, 1.442695
      %v996 = vpow.pop %v995
      %v997 = vmul.f32 %v938, 1.442695
      %v998 = vpow.pop %v997
      %v999 = vmul.f32 %v939, 1.442695
      %v1000 = vpow.pop %v999
      %v1001 = vmul.f32 %v940, 1.442695
      %v1002 = vpow.pop %v1001
      %v1003 = vmul.f32 %v941, 1.442695
      %v1004 = vpow.pop %v1003
      %v1005 = vmul.f32 %v942, 1.442695
      %v1006 = vpow.pop %v1005
      %v1007 = vadd.f32 %v944, 1.0
      %v1008 = vadd.f32 %v946, 1.0
      %v1009 = vadd.f32 %v948, 1.0
      %v1010 = vadd.f32 %v950, 1.0
      %v1011 = vadd.f32 %v952, 1.0
      %v1012 = vadd.f32 %v954, 1.0
      %v1013 = vadd.f32 %v956, 1.0
      %v1014 = vadd.f32 %v958, 1.0
      %v1015 = vadd.f32 %v960, 1.0
      %v1016 = vadd.f32 %v962, 1.0
      %v1017 = vadd.f32 %v964, 1.0
      %v1018 = vadd.f32 %v966, 1.0
      %v1019 = vadd.f32 %v968, 1.0
      %v1020 = vadd.f32 %v970, 1.0
      %v1021 = vadd.f32 %v972, 1.0
      %v1022 = vadd.f32 %v974, 1.0
      %v1023 = vadd.f32 %v976, 1.0
      %v1024 = vadd.f32 %v978, 1.0
      %v1025 = vadd.f32 %v980, 1.0
      %v1026 = vadd.f32 %v982, 1.0
      %v1027 = vadd.f32 %v984, 1.0
      %v1028 = vadd.f32 %v986, 1.0
      %v1029 = vadd.f32 %v988, 1.0
      %v1030 = vadd.f32 %v990, 1.0
      %v1031 = vadd.f32 %v992, 1.0
      %v1032 = vadd.f32 %v994, 1.0
      %v1033 = vadd.f32 %v996, 1.0
      %v1034 = vadd.f32 %v998, 1.0
      %v1035 = vadd.f32 %v1000, 1.0
      %v1036 = vadd.f32 %v1002, 1.0
      %v1037 = vadd.f32 %v1004, 1.0
      %v1038 = vadd.f32 %v1006, 1.0
      %v1039 = vrcp.pop %v1007
      %v1040 = vrcp.pop %v1008
      %v1041 = vrcp.pop %v1009
      %v1042 = vrcp.pop %v1010
      %v1043 = vrcp.pop %v1011
      %v1044 = vrcp.pop %v1012
      %v1045 = vrcp.pop %v1013
      %v1046 = vrcp.pop %v1014
      %v1047 = vrcp.pop %v1015
      %v1048 = vrcp.pop %v1016
      %v1049 = vrcp.pop %v1017
      %v1050 = vrcp.pop %v1018
      %v1051 = vrcp.pop %v1019
      %v1052 = vrcp.pop %v1020
      %v1053 = vrcp.pop %v1021
      %v1054 = vrcp.pop %v1022
      %v1055 = vrcp.pop %v1023
      %v1056 = vrcp.pop %v1024
      %v1057 = vrcp.pop %v1025
      %v1058 = vrcp.pop %v1026
      %v1059 = vrcp.pop %v1027
      %v1060 = vrcp.pop %v1028
      %v1061 = vrcp.pop %v1029
      %v1062 = vrcp.pop %v1030
      %v1063 = vrcp.pop %v1031
      %v1064 = vrcp.pop %v1032
      %v1065 = vrcp.pop %v1033
      %v1066 = vrcp.pop %v1034
      %v1067 = vrcp.pop %v1035
      %v1068 = vrcp.pop %v1036
      %v1069 = vrcp.pop %v1037
      %v1070 = vrcp.pop %v1038
      %v1071 = vmul.f32 %v785, %v1039
      %v1072 = vmul.f32 %v788, %v1040
      %v1073 = vmul.f32 %v793, %v1041
      %v1074 = vmul.f32 %v796, %v1042
      %v1075 = vmul.f32 %v801, %v1043
      %v1076 = vmul.f32 %v804, %v1044
      %v1077 = vmul.f32 %v809, %v1045
      %v1078 = vmul.f32 %v812, %v1046
      %v1079 = vmul.f32 %v817, %v1047
      %v1080 = vmul.f32 %v820, %v1048
      %v1081 = vmul.f32 %v825, %v1049
      %v1082 = vmul.f32 %v828, %v1050
      %v1083 = vmul.f32 %v833, %v1051
      %v1084 = vmul.f32 %v836, %v1052
      %v1085 = vmul.f32 %v841, %v1053
      %v1086 = vmul.f32 %v844, %v1054
      %v1087 = vmul.f32 %v849, %v1055
      %v1088 = vmul.f32 %v852, %v1056
      %v1089 = vmul.f32 %v857, %v1057
      %v1090 = vmul.f32 %v860, %v1058
      %v1091 = vmul.f32 %v865, %v1059
      %v1092 = vmul.f32 %v868, %v1060
      %v1093 = vmul.f32 %v873, %v1061
      %v1094 = vmul.f32 %v876, %v1062
      %v1095 = vmul.f32 %v881, %v1063
      %v1096 = vmul.f32 %v884, %v1064
      %v1097 = vmul.f32 %v889, %v1065
      %v1098 = vmul.f32 %v892, %v1066
      %v1099 = vmul.f32 %v897, %v1067
      %v1100 = vmul.f32 %v900, %v1068
      %v1101 = vmul.f32 %v905, %v1069
      %v1102 = vmul.f32 %v908, %v1070
      %v1103 = vpack.c.bf16 %v1072, %v1071
      %v1104 = vpack.c.bf16 %v1074, %v1073
      %v1105 = vpack.c.bf16 %v1076, %v1075
      %v1106 = vpack.c.bf16 %v1078, %v1077
      %v1107 = vpack.c.bf16 %v1080, %v1079
      %v1108 = vpack.c.bf16 %v1082, %v1081
      %v1109 = vpack.c.bf16 %v1084, %v1083
      %v1110 = vpack.c.bf16 %v1086, %v1085
      %v1111 = vpack.c.bf16 %v1088, %v1087
      %v1112 = vpack.c.bf16 %v1090, %v1089
      %v1113 = vpack.c.bf16 %v1092, %v1091
      %v1114 = vpack.c.bf16 %v1094, %v1093
      %v1115 = vpack.c.bf16 %v1096, %v1095
      %v1116 = vpack.c.bf16 %v1098, %v1097
      %v1117 = vpack.c.bf16 %v1100, %v1099
      %v1118 = vpack.c.bf16 %v1102, %v1101
      %v1119 = vld [vmem:[%s3] sm:$0x3]
      %v1120 = vld [vmem:[%s4] sm:$0x1]
      %v1122 = vlaneseq
      %v1123 = vshrl.u32 %v1122, 7
      %v1124 = vsub.s32 0, %v1123
      %v1125 = vrot.slane %v1120, %v1124
      %v1128 = vsel %vm746, %v1119, 0
      %1130 = vmatprep.subr.bf16.mxu0 0
      %1131 = vmatpush1.bf16.msra.mxu0 0
      %1132 = vmatprep.subr.bf16.mxu0 0
      %1133 = vmatpush1.bf16.msra.mxu0 0
      %1134 = vmatprep.subr.bf16.mxu0 0
      %1135 = vmatpush1.bf16.msra.mxu0 0
      %1136 = vmatprep.subr.bf16.mxu0 0
      %1137 = vmatpush1.bf16.msra.mxu0 0
      %1138 = vmatprep.subr.bf16.mxu0 0
      %1139 = vmatpush1.bf16.msra.mxu0 0
      %1140 = vmatprep.subr.bf16.mxu0 0
      %1141 = vmatpush1.bf16.msra.mxu0 0
      %1142 = vmatprep.subr.bf16.mxu0 0
      %1143 = vmatpush1.bf16.msra.mxu0 0
      %1144 = vmatprep.subr.bf16.mxu0 0
      %1145 = vmatpush1.bf16.msra.mxu0 %v1128
      %1146 = vmatprep.subr.bf16.mxu0 0
      %1147 = vmatpush2.bf16.msra.mxu0 0
      %1148 = vmatprep.subr.bf16.mxu0 0
      %1149 = vmatpush2.bf16.msra.mxu0 0
      %1150 = vmatprep.subr.bf16.mxu0 0
      %1151 = vmatpush2.bf16.msra.mxu0 0
      %1152 = vmatprep.subr.bf16.mxu0 0
      %1153 = vmatpush2.bf16.msra.mxu0 0
      %1154 = vmatprep.subr.bf16.mxu0 0
      %1155 = vmatpush2.bf16.msra.mxu0 0
      %1156 = vmatprep.subr.bf16.mxu0 0
      %1157 = vmatpush2.bf16.msra.mxu0 0
      %1158 = vmatprep.subr.bf16.mxu0 0
      %1159 = vmatpush2.bf16.msra.mxu0 0
      %1160 = vmatprep.subr.bf16.mxu0 0
      %1161 = vmatpush2.bf16.msra.mxu0 0
      %1162 = vmatprep.mubr.bf16.mxu0 0
      %1163 = vmatmul.mubr.bf16.gmra.mxu0 %v699
      %v1164 = vpop.f32.mrf.mxu0
      %v1165 = vadd.f32 %v1125, %v1164
      %v1166 = vpop.f32.mrf.mxu0
      %v1167 = vpop.f32.mrf.mxu0
      %v1168 = vadd.f32 %v1125, %v1167
      %v1169 = vpop.f32.mrf.mxu0
      %1170 = vmatprep.mubr.bf16.mxu0 0
      %1171 = vmatmul.mubr.bf16.gmra.mxu0 %v702
      %v1172 = vpop.f32.mrf.mxu0
      %v1173 = vadd.f32 %v1125, %v1172
      %v1174 = vpop.f32.mrf.mxu0
      %v1175 = vpop.f32.mrf.mxu0
      %v1176 = vadd.f32 %v1125, %v1175
      %v1177 = vpop.f32.mrf.mxu0
      %1178 = vmatprep.mubr.bf16.mxu0 0
      %1179 = vmatmul.mubr.bf16.gmra.mxu0 %v705
      %v1180 = vpop.f32.mrf.mxu0
      %v1181 = vadd.f32 %v1125, %v1180
      %v1182 = vpop.f32.mrf.mxu0
      %v1183 = vpop.f32.mrf.mxu0
      %v1184 = vadd.f32 %v1125, %v1183
      %v1185 = vpop.f32.mrf.mxu0
      %1186 = vmatprep.mubr.bf16.mxu0 0
      %1187 = vmatmul.mubr.bf16.gmra.mxu0 %v708
      %v1188 = vpop.f32.mrf.mxu0
      %v1189 = vadd.f32 %v1125, %v1188
      %v1190 = vpop.f32.mrf.mxu0
      %v1191 = vpop.f32.mrf.mxu0
      %v1192 = vadd.f32 %v1125, %v1191
      %v1193 = vpop.f32.mrf.mxu0
      %1194 = vmatprep.mubr.bf16.mxu0 0
      %1195 = vmatmul.mubr.bf16.gmra.mxu0 %v711
      %v1196 = vpop.f32.mrf.mxu0
      %v1197 = vadd.f32 %v1125, %v1196
      %v1198 = vpop.f32.mrf.mxu0
      %v1199 = vpop.f32.mrf.mxu0
      %v1200 = vadd.f32 %v1125, %v1199
      %v1201 = vpop.f32.mrf.mxu0
      %1202 = vmatprep.mubr.bf16.mxu0 0
      %1203 = vmatmul.mubr.bf16.gmra.mxu0 %v714
      %v1204 = vpop.f32.mrf.mxu0
      %v1205 = vadd.f32 %v1125, %v1204
      %v1206 = vpop.f32.mrf.mxu0
      %v1207 = vpop.f32.mrf.mxu0
      %v1208 = vadd.f32 %v1125, %v1207
      %v1209 = vpop.f32.mrf.mxu0
      %1210 = vmatprep.mubr.bf16.mxu0 0
      %1211 = vmatmul.mubr.bf16.gmra.mxu0 %v717
      %v1212 = vpop.f32.mrf.mxu0
      %v1213 = vadd.f32 %v1125, %v1212
      %v1214 = vpop.f32.mrf.mxu0
      %v1215 = vpop.f32.mrf.mxu0
      %v1216 = vadd.f32 %v1125, %v1215
      %v1217 = vpop.f32.mrf.mxu0
      %1218 = vmatprep.mubr.bf16.mxu0 0
      %1219 = vmatmul.mubr.bf16.gmra.mxu0 %v720
      %v1220 = vpop.f32.mrf.mxu0
      %v1221 = vadd.f32 %v1125, %v1220
      %v1222 = vpop.f32.mrf.mxu0
      %v1223 = vpop.f32.mrf.mxu0
      %v1224 = vadd.f32 %v1125, %v1223
      %v1225 = vpop.f32.mrf.mxu0
      %1226 = vmatprep.mubr.bf16.mxu0 0
      %1227 = vmatmul.mubr.bf16.gmra.mxu0 %v723
      %v1228 = vpop.f32.mrf.mxu0
      %v1229 = vadd.f32 %v1125, %v1228
      %v1230 = vpop.f32.mrf.mxu0
      %v1231 = vpop.f32.mrf.mxu0
      %v1232 = vadd.f32 %v1125, %v1231
      %v1233 = vpop.f32.mrf.mxu0
      %1234 = vmatprep.mubr.bf16.mxu0 0
      %1235 = vmatmul.mubr.bf16.gmra.mxu0 %v726
      %v1236 = vpop.f32.mrf.mxu0
      %v1237 = vadd.f32 %v1125, %v1236
      %v1238 = vpop.f32.mrf.mxu0
      %v1239 = vpop.f32.mrf.mxu0
      %v1240 = vadd.f32 %v1125, %v1239
      %v1241 = vpop.f32.mrf.mxu0
      %1242 = vmatprep.mubr.bf16.mxu0 0
      %1243 = vmatmul.mubr.bf16.gmra.mxu0 %v729
      %v1244 = vpop.f32.mrf.mxu0
      %v1245 = vadd.f32 %v1125, %v1244
      %v1246 = vpop.f32.mrf.mxu0
      %v1247 = vpop.f32.mrf.mxu0
      %v1248 = vadd.f32 %v1125, %v1247
      %v1249 = vpop.f32.mrf.mxu0
      %1250 = vmatprep.mubr.bf16.mxu0 0
      %1251 = vmatmul.mubr.bf16.gmra.mxu0 %v732
      %v1252 = vpop.f32.mrf.mxu0
      %v1253 = vadd.f32 %v1125, %v1252
      %v1254 = vpop.f32.mrf.mxu0
      %v1255 = vpop.f32.mrf.mxu0
      %v1256 = vadd.f32 %v1125, %v1255
      %v1257 = vpop.f32.mrf.mxu0
      %1258 = vmatprep.mubr.bf16.mxu0 0
      %1259 = vmatmul.mubr.bf16.gmra.mxu0 %v735
      %v1260 = vpop.f32.mrf.mxu0
      %v1261 = vadd.f32 %v1125, %v1260
      %v1262 = vpop.f32.mrf.mxu0
      %v1263 = vpop.f32.mrf.mxu0
      %v1264 = vadd.f32 %v1125, %v1263
      %v1265 = vpop.f32.mrf.mxu0
      %1266 = vmatprep.mubr.bf16.mxu0 0
      %1267 = vmatmul.mubr.bf16.gmra.mxu0 %v738
      %v1268 = vpop.f32.mrf.mxu0
      %v1269 = vadd.f32 %v1125, %v1268
      %v1270 = vpop.f32.mrf.mxu0
      %v1271 = vpop.f32.mrf.mxu0
      %v1272 = vadd.f32 %v1125, %v1271
      %v1273 = vpop.f32.mrf.mxu0
      %1274 = vmatprep.mubr.bf16.mxu0 0
      %1275 = vmatmul.mubr.bf16.gmra.mxu0 %v741
      %v1276 = vpop.f32.mrf.mxu0
      %v1277 = vadd.f32 %v1125, %v1276
      %v1278 = vpop.f32.mrf.mxu0
      %v1279 = vpop.f32.mrf.mxu0
      %v1280 = vadd.f32 %v1125, %v1279
      %v1281 = vpop.f32.mrf.mxu0
      %1282 = vmatprep.mubr.bf16.mxu0 0
      %1283 = vmatmul.mubr.bf16.gmra.mxu0 %v744
      %v1284 = vpop.f32.mrf.mxu0
      %v1285 = vadd.f32 %v1125, %v1284
      %v1286 = vpop.f32.mrf.mxu0
      %v1287 = vpop.f32.mrf.mxu0
      %v1288 = vadd.f32 %v1125, %v1287
      %v1289 = vpop.f32.mrf.mxu0
      %1290 = vdwg.mxu0
      %v1291 = vsub.f32 0.0, %v1165
      %v1292 = vsub.f32 0.0, %v1168
      %v1293 = vsub.f32 0.0, %v1173
      %v1294 = vsub.f32 0.0, %v1176
      %v1295 = vsub.f32 0.0, %v1181
      %v1296 = vsub.f32 0.0, %v1184
      %v1297 = vsub.f32 0.0, %v1189
      %v1298 = vsub.f32 0.0, %v1192
      %v1299 = vsub.f32 0.0, %v1197
      %v1300 = vsub.f32 0.0, %v1200
      %v1301 = vsub.f32 0.0, %v1205
      %v1302 = vsub.f32 0.0, %v1208
      %v1303 = vsub.f32 0.0, %v1213
      %v1304 = vsub.f32 0.0, %v1216
      %v1305 = vsub.f32 0.0, %v1221
      %v1306 = vsub.f32 0.0, %v1224
      %v1307 = vsub.f32 0.0, %v1229
      %v1308 = vsub.f32 0.0, %v1232
      %v1309 = vsub.f32 0.0, %v1237
      %v1310 = vsub.f32 0.0, %v1240
      %v1311 = vsub.f32 0.0, %v1245
      %v1312 = vsub.f32 0.0, %v1248
      %v1313 = vsub.f32 0.0, %v1253
      %v1314 = vsub.f32 0.0, %v1256
      %v1315 = vsub.f32 0.0, %v1261
      %v1316 = vsub.f32 0.0, %v1264
      %v1317 = vsub.f32 0.0, %v1269
      %v1318 = vsub.f32 0.0, %v1272
      %v1319 = vsub.f32 0.0, %v1277
      %v1320 = vsub.f32 0.0, %v1280
      %v1321 = vsub.f32 0.0, %v1285
      %v1322 = vsub.f32 0.0, %v1288
      %v1323 = vmul.f32 %v1291, 1.442695
      %v1324 = vpow.pop %v1323
      %v1325 = vmul.f32 %v1292, 1.442695
      %v1326 = vpow.pop %v1325
      %v1327 = vmul.f32 %v1293, 1.442695
      %v1328 = vpow.pop %v1327
      %v1329 = vmul.f32 %v1294, 1.442695
      %v1330 = vpow.pop %v1329
      %v1331 = vmul.f32 %v1295, 1.442695
      %v1332 = vpow.pop %v1331
      %v1333 = vmul.f32 %v1296, 1.442695
      %v1334 = vpow.pop %v1333
      %v1335 = vmul.f32 %v1297, 1.442695
      %v1336 = vpow.pop %v1335
      %v1337 = vmul.f32 %v1298, 1.442695
      %v1338 = vpow.pop %v1337
      %v1339 = vmul.f32 %v1299, 1.442695
      %v1340 = vpow.pop %v1339
      %v1341 = vmul.f32 %v1300, 1.442695
      %v1342 = vpow.pop %v1341
      %v1343 = vmul.f32 %v1301, 1.442695
      %v1344 = vpow.pop %v1343
      %v1345 = vmul.f32 %v1302, 1.442695
      %v1346 = vpow.pop %v1345
      %v1347 = vmul.f32 %v1303, 1.442695
      %v1348 = vpow.pop %v1347
      %v1349 = vmul.f32 %v1304, 1.442695
      %v1350 = vpow.pop %v1349
      %v1351 = vmul.f32 %v1305, 1.442695
      %v1352 = vpow.pop %v1351
      %v1353 = vmul.f32 %v1306, 1.442695
      %v1354 = vpow.pop %v1353
      %v1355 = vmul.f32 %v1307, 1.442695
      %v1356 = vpow.pop %v1355
      %v1357 = vmul.f32 %v1308, 1.442695
      %v1358 = vpow.pop %v1357
      %v1359 = vmul.f32 %v1309, 1.442695
      %v1360 = vpow.pop %v1359
      %v1361 = vmul.f32 %v1310, 1.442695
      %v1362 = vpow.pop %v1361
      %v1363 = vmul.f32 %v1311, 1.442695
      %v1364 = vpow.pop %v1363
      %v1365 = vmul.f32 %v1312, 1.442695
      %v1366 = vpow.pop %v1365
      %v1367 = vmul.f32 %v1313, 1.442695
      %v1368 = vpow.pop %v1367
      %v1369 = vmul.f32 %v1314, 1.442695
      %v1370 = vpow.pop %v1369
      %v1371 = vmul.f32 %v1315, 1.442695
      %v1372 = vpow.pop %v1371
      %v1373 = vmul.f32 %v1316, 1.442695
      %v1374 = vpow.pop %v1373
      %v1375 = vmul.f32 %v1317, 1.442695
      %v1376 = vpow.pop %v1375
      %v1377 = vmul.f32 %v1318, 1.442695
      %v1378 = vpow.pop %v1377
      %v1379 = vmul.f32 %v1319, 1.442695
      %v1380 = vpow.pop %v1379
      %v1381 = vmul.f32 %v1320, 1.442695
      %v1382 = vpow.pop %v1381
      %v1383 = vmul.f32 %v1321, 1.442695
      %v1384 = vpow.pop %v1383
      %v1385 = vmul.f32 %v1322, 1.442695
      %v1386 = vpow.pop %v1385
      %v1387 = vadd.f32 %v1324, 1.0
      %v1388 = vadd.f32 %v1326, 1.0
      %v1389 = vadd.f32 %v1328, 1.0
      %v1390 = vadd.f32 %v1330, 1.0
      %v1391 = vadd.f32 %v1332, 1.0
      %v1392 = vadd.f32 %v1334, 1.0
      %v1393 = vadd.f32 %v1336, 1.0
      %v1394 = vadd.f32 %v1338, 1.0
      %v1395 = vadd.f32 %v1340, 1.0
      %v1396 = vadd.f32 %v1342, 1.0
      %v1397 = vadd.f32 %v1344, 1.0
      %v1398 = vadd.f32 %v1346, 1.0
      %v1399 = vadd.f32 %v1348, 1.0
      %v1400 = vadd.f32 %v1350, 1.0
      %v1401 = vadd.f32 %v1352, 1.0
      %v1402 = vadd.f32 %v1354, 1.0
      %v1403 = vadd.f32 %v1356, 1.0
      %v1404 = vadd.f32 %v1358, 1.0
      %v1405 = vadd.f32 %v1360, 1.0
      %v1406 = vadd.f32 %v1362, 1.0
      %v1407 = vadd.f32 %v1364, 1.0
      %v1408 = vadd.f32 %v1366, 1.0
      %v1409 = vadd.f32 %v1368, 1.0
      %v1410 = vadd.f32 %v1370, 1.0
      %v1411 = vadd.f32 %v1372, 1.0
      %v1412 = vadd.f32 %v1374, 1.0
      %v1413 = vadd.f32 %v1376, 1.0
      %v1414 = vadd.f32 %v1378, 1.0
      %v1415 = vadd.f32 %v1380, 1.0
      %v1416 = vadd.f32 %v1382, 1.0
      %v1417 = vadd.f32 %v1384, 1.0
      %v1418 = vadd.f32 %v1386, 1.0
      %v1419 = vrcp.pop %v1387
      %v1420 = vrcp.pop %v1388
      %v1421 = vrcp.pop %v1389
      %v1422 = vrcp.pop %v1390
      %v1423 = vrcp.pop %v1391
      %v1424 = vrcp.pop %v1392
      %v1425 = vrcp.pop %v1393
      %v1426 = vrcp.pop %v1394
      %v1427 = vrcp.pop %v1395
      %v1428 = vrcp.pop %v1396
      %v1429 = vrcp.pop %v1397
      %v1430 = vrcp.pop %v1398
      %v1431 = vrcp.pop %v1399
      %v1432 = vrcp.pop %v1400
      %v1433 = vrcp.pop %v1401
      %v1434 = vrcp.pop %v1402
      %v1435 = vrcp.pop %v1403
      %v1436 = vrcp.pop %v1404
      %v1437 = vrcp.pop %v1405
      %v1438 = vrcp.pop %v1406
      %v1439 = vrcp.pop %v1407
      %v1440 = vrcp.pop %v1408
      %v1441 = vrcp.pop %v1409
      %v1442 = vrcp.pop %v1410
      %v1443 = vrcp.pop %v1411
      %v1444 = vrcp.pop %v1412
      %v1445 = vrcp.pop %v1413
      %v1446 = vrcp.pop %v1414
      %v1447 = vrcp.pop %v1415
      %v1448 = vrcp.pop %v1416
      %v1449 = vrcp.pop %v1417
      %v1450 = vrcp.pop %v1418
      %v1451 = vmul.f32 %v1165, %v1419
      %v1452 = vmul.f32 %v1168, %v1420
      %v1453 = vmul.f32 %v1173, %v1421
      %v1454 = vmul.f32 %v1176, %v1422
      %v1455 = vmul.f32 %v1181, %v1423
      %v1456 = vmul.f32 %v1184, %v1424
      %v1457 = vmul.f32 %v1189, %v1425
      %v1458 = vmul.f32 %v1192, %v1426
      %v1459 = vmul.f32 %v1197, %v1427
      %v1460 = vmul.f32 %v1200, %v1428
      %v1461 = vmul.f32 %v1205, %v1429
      %v1462 = vmul.f32 %v1208, %v1430
      %v1463 = vmul.f32 %v1213, %v1431
      %v1464 = vmul.f32 %v1216, %v1432
      %v1465 = vmul.f32 %v1221, %v1433
      %v1466 = vmul.f32 %v1224, %v1434
      %v1467 = vmul.f32 %v1229, %v1435
      %v1468 = vmul.f32 %v1232, %v1436
      %v1469 = vmul.f32 %v1237, %v1437
      %v1470 = vmul.f32 %v1240, %v1438
      %v1471 = vmul.f32 %v1245, %v1439
      %v1472 = vmul.f32 %v1248, %v1440
      %v1473 = vmul.f32 %v1253, %v1441
      %v1474 = vmul.f32 %v1256, %v1442
      %v1475 = vmul.f32 %v1261, %v1443
      %v1476 = vmul.f32 %v1264, %v1444
      %v1477 = vmul.f32 %v1269, %v1445
      %v1478 = vmul.f32 %v1272, %v1446
      %v1479 = vmul.f32 %v1277, %v1447
      %v1480 = vmul.f32 %v1280, %v1448
      %v1481 = vmul.f32 %v1285, %v1449
      %v1482 = vmul.f32 %v1288, %v1450
      %vm1483 = vcmask 15360
      %v1484 = vsel %vm1483, %v1451, 0.0
      %v1485 = vsel %vm1483, %v1452, 0.0
      %v1486 = vadd.f32 %v1484, %v1485
      %v1487 = vrot.slane %v1486, 4
      %v1488 = vadd.f32 %v1486, %v1487
      %v1489 = vrot.slane %v1488, 2
      %v1490 = vadd.f32 %v1488, %v1489
      %v1491 = vrot.slane %v1490, 1
      %v1492 = vadd.f32 %v1490, %v1491
      %v1493 = vsel %vm1483, %v1453, 0.0
      %v1494 = vsel %vm1483, %v1454, 0.0
      %v1495 = vadd.f32 %v1493, %v1494
      %v1496 = vrot.slane %v1495, 4
      %v1497 = vadd.f32 %v1495, %v1496
      %v1498 = vrot.slane %v1497, 2
      %v1499 = vadd.f32 %v1497, %v1498
      %v1500 = vrot.slane %v1499, 1
      %v1501 = vadd.f32 %v1499, %v1500
      %v1502 = vsel %vm1483, %v1455, 0.0
      %v1503 = vsel %vm1483, %v1456, 0.0
      %v1504 = vadd.f32 %v1502, %v1503
      %v1505 = vrot.slane %v1504, 4
      %v1506 = vadd.f32 %v1504, %v1505
      %v1507 = vrot.slane %v1506, 2
      %v1508 = vadd.f32 %v1506, %v1507
      %v1509 = vrot.slane %v1508, 1
      %v1510 = vadd.f32 %v1508, %v1509
      %v1511 = vsel %vm1483, %v1457, 0.0
      %v1512 = vsel %vm1483, %v1458, 0.0
      %v1513 = vadd.f32 %v1511, %v1512
      %v1514 = vrot.slane %v1513, 4
      %v1515 = vadd.f32 %v1513, %v1514
      %v1516 = vrot.slane %v1515, 2
      %v1517 = vadd.f32 %v1515, %v1516
      %v1518 = vrot.slane %v1517, 1
      %v1519 = vadd.f32 %v1517, %v1518
      %v1520 = vsel %vm1483, %v1459, 0.0
      %v1521 = vsel %vm1483, %v1460, 0.0
      %v1522 = vadd.f32 %v1520, %v1521
      %v1523 = vrot.slane %v1522, 4
      %v1524 = vadd.f32 %v1522, %v1523
      %v1525 = vrot.slane %v1524, 2
      %v1526 = vadd.f32 %v1524, %v1525
      %v1527 = vrot.slane %v1526, 1
      %v1528 = vadd.f32 %v1526, %v1527
      %v1529 = vsel %vm1483, %v1461, 0.0
      %v1530 = vsel %vm1483, %v1462, 0.0
      %v1531 = vadd.f32 %v1529, %v1530
      %v1532 = vrot.slane %v1531, 4
      %v1533 = vadd.f32 %v1531, %v1532
      %v1534 = vrot.slane %v1533, 2
      %v1535 = vadd.f32 %v1533, %v1534
      %v1536 = vrot.slane %v1535, 1
      %v1537 = vadd.f32 %v1535, %v1536
      %v1538 = vsel %vm1483, %v1463, 0.0
      %v1539 = vsel %vm1483, %v1464, 0.0
      %v1540 = vadd.f32 %v1538, %v1539
      %v1541 = vrot.slane %v1540, 4
      %v1542 = vadd.f32 %v1540, %v1541
      %v1543 = vrot.slane %v1542, 2
      %v1544 = vadd.f32 %v1542, %v1543
      %v1545 = vrot.slane %v1544, 1
      %v1546 = vadd.f32 %v1544, %v1545
      %v1547 = vsel %vm1483, %v1465, 0.0
      %v1548 = vsel %vm1483, %v1466, 0.0
      %v1549 = vadd.f32 %v1547, %v1548
      %v1550 = vrot.slane %v1549, 4
      %v1551 = vadd.f32 %v1549, %v1550
      %v1552 = vrot.slane %v1551, 2
      %v1553 = vadd.f32 %v1551, %v1552
      %v1554 = vrot.slane %v1553, 1
      %v1555 = vadd.f32 %v1553, %v1554
      %v1556 = vsel %vm1483, %v1467, 0.0
      %v1557 = vsel %vm1483, %v1468, 0.0
      %v1558 = vadd.f32 %v1556, %v1557
      %v1559 = vrot.slane %v1558, 4
      %v1560 = vadd.f32 %v1558, %v1559
      %v1561 = vrot.slane %v1560, 2
      %v1562 = vadd.f32 %v1560, %v1561
      %v1563 = vrot.slane %v1562, 1
      %v1564 = vadd.f32 %v1562, %v1563
      %v1565 = vsel %vm1483, %v1469, 0.0
      %v1566 = vsel %vm1483, %v1470, 0.0
      %v1567 = vadd.f32 %v1565, %v1566
      %v1568 = vrot.slane %v1567, 4
      %v1569 = vadd.f32 %v1567, %v1568
      %v1570 = vrot.slane %v1569, 2
      %v1571 = vadd.f32 %v1569, %v1570
      %v1572 = vrot.slane %v1571, 1
      %v1573 = vadd.f32 %v1571, %v1572
      %v1574 = vsel %vm1483, %v1471, 0.0
      %v1575 = vsel %vm1483, %v1472, 0.0
      %v1576 = vadd.f32 %v1574, %v1575
      %v1577 = vrot.slane %v1576, 4
      %v1578 = vadd.f32 %v1576, %v1577
      %v1579 = vrot.slane %v1578, 2
      %v1580 = vadd.f32 %v1578, %v1579
      %v1581 = vrot.slane %v1580, 1
      %v1582 = vadd.f32 %v1580, %v1581
      %v1583 = vsel %vm1483, %v1473, 0.0
      %v1584 = vsel %vm1483, %v1474, 0.0
      %v1585 = vadd.f32 %v1583, %v1584
      %v1586 = vrot.slane %v1585, 4
      %v1587 = vadd.f32 %v1585, %v1586
      %v1588 = vrot.slane %v1587, 2
      %v1589 = vadd.f32 %v1587, %v1588
      %v1590 = vrot.slane %v1589, 1
      %v1591 = vadd.f32 %v1589, %v1590
      %v1592 = vsel %vm1483, %v1475, 0.0
      %v1593 = vsel %vm1483, %v1476, 0.0
      %v1594 = vadd.f32 %v1592, %v1593
      %v1595 = vrot.slane %v1594, 4
      %v1596 = vadd.f32 %v1594, %v1595
      %v1597 = vrot.slane %v1596, 2
      %v1598 = vadd.f32 %v1596, %v1597
      %v1599 = vrot.slane %v1598, 1
      %v1600 = vadd.f32 %v1598, %v1599
      %v1601 = vsel %vm1483, %v1477, 0.0
      %v1602 = vsel %vm1483, %v1478, 0.0
      %v1603 = vadd.f32 %v1601, %v1602
      %v1604 = vrot.slane %v1603, 4
      %v1605 = vadd.f32 %v1603, %v1604
      %v1606 = vrot.slane %v1605, 2
      %v1607 = vadd.f32 %v1605, %v1606
      %v1608 = vrot.slane %v1607, 1
      %v1609 = vadd.f32 %v1607, %v1608
      %v1610 = vsel %vm1483, %v1479, 0.0
      %v1611 = vsel %vm1483, %v1480, 0.0
      %v1612 = vadd.f32 %v1610, %v1611
      %v1613 = vrot.slane %v1612, 4
      %v1614 = vadd.f32 %v1612, %v1613
      %v1615 = vrot.slane %v1614, 2
      %v1616 = vadd.f32 %v1614, %v1615
      %v1617 = vrot.slane %v1616, 1
      %v1618 = vadd.f32 %v1616, %v1617
      %v1619 = vsel %vm1483, %v1481, 0.0
      %v1620 = vsel %vm1483, %v1482, 0.0
      %v1621 = vadd.f32 %v1619, %v1620
      %v1622 = vrot.slane %v1621, 4
      %v1623 = vadd.f32 %v1621, %v1622
      %v1624 = vrot.slane %v1623, 2
      %v1625 = vadd.f32 %v1623, %v1624
      %v1626 = vrot.slane %v1625, 1
      %v1627 = vadd.f32 %v1625, %v1626
      %v1628 = vrcp.pop 16.0
      %v1629 = vmul.f32 %v1492, %v1628
      %v1630 = vmul.f32 %v1501, %v1628
      %v1631 = vmul.f32 %v1510, %v1628
      %v1632 = vmul.f32 %v1519, %v1628
      %v1633 = vmul.f32 %v1528, %v1628
      %v1634 = vmul.f32 %v1537, %v1628
      %v1635 = vmul.f32 %v1546, %v1628
      %v1636 = vmul.f32 %v1555, %v1628
      %v1637 = vmul.f32 %v1564, %v1628
      %v1638 = vmul.f32 %v1573, %v1628
      %v1639 = vmul.f32 %v1582, %v1628
      %v1640 = vmul.f32 %v1591, %v1628
      %v1641 = vmul.f32 %v1600, %v1628
      %v1642 = vmul.f32 %v1609, %v1628
      %v1643 = vmul.f32 %v1618, %v1628
      %v1644 = vmul.f32 %v1627, %v1628
      %v1645 = vadd.f32 %v1484, %v1493
      %v1646 = vadd.f32 %v1645, %v1502
      %v1647 = vadd.f32 %v1646, %v1511
      %v1648 = vadd.f32 %v1647, %v1520
      %v1649 = vadd.f32 %v1648, %v1529
      %v1650 = vadd.f32 %v1649, %v1538
      %v1651 = vadd.f32 %v1650, %v1547
      %v1652 = vadd.f32 %v1651, %v1556
      %v1653 = vadd.f32 %v1652, %v1565
      %v1654 = vadd.f32 %v1653, %v1574
      %v1655 = vadd.f32 %v1654, %v1583
      %v1656 = vadd.f32 %v1655, %v1592
      %v1657 = vadd.f32 %v1656, %v1601
      %v1658 = vadd.f32 %v1657, %v1610
      %v1659 = vadd.f32 %v1658, %v1619
      %v1660 = vadd.f32 %v1485, %v1494
      %v1661 = vadd.f32 %v1660, %v1503
      %v1662 = vadd.f32 %v1661, %v1512
      %v1663 = vadd.f32 %v1662, %v1521
      %v1664 = vadd.f32 %v1663, %v1530
      %v1665 = vadd.f32 %v1664, %v1539
      %v1666 = vadd.f32 %v1665, %v1548
      %v1667 = vadd.f32 %v1666, %v1557
      %v1668 = vadd.f32 %v1667, %v1566
      %v1669 = vadd.f32 %v1668, %v1575
      %v1670 = vadd.f32 %v1669, %v1584
      %v1671 = vadd.f32 %v1670, %v1593
      %v1672 = vadd.f32 %v1671, %v1602
      %v1673 = vadd.f32 %v1672, %v1611
      %v1674 = vadd.f32 %v1673, %v1620
      %v1675 = vmul.f32 %v1659, %v1628
      %v1676 = vmul.f32 %v1674, %v1628
      %v1677 = vpack.c.bf16 %v1629, %v1629
      %v1678 = vpack.c.bf16 %v1630, %v1630
      %v1679 = vpack.c.bf16 %v1631, %v1631
      %v1680 = vpack.c.bf16 %v1632, %v1632
      %v1681 = vpack.c.bf16 %v1633, %v1633
      %v1682 = vpack.c.bf16 %v1634, %v1634
      %v1683 = vpack.c.bf16 %v1635, %v1635
      %v1684 = vpack.c.bf16 %v1636, %v1636
      %v1685 = vpack.c.bf16 %v1637, %v1637
      %v1686 = vpack.c.bf16 %v1638, %v1638
      %v1687 = vpack.c.bf16 %v1639, %v1639
      %v1688 = vpack.c.bf16 %v1640, %v1640
      %v1689 = vpack.c.bf16 %v1641, %v1641
      %v1690 = vpack.c.bf16 %v1642, %v1642
      %v1691 = vpack.c.bf16 %v1643, %v1643
      %v1692 = vpack.c.bf16 %v1644, %v1644
      %v1693 = vld [vmem:[%s5] sm:$0x1]
      %v1694 = vld [vmem:[%s6] sm:$0x1]
      %v1696 = vlaneseq
      %v1697 = vshrl.u32 %v1696, 7
      %v1698 = vsub.s32 0, %v1697
      %v1699 = vrot.slane %v1694, %v1698
      %v1717 = vunpack.c.l.b16 %v1677
      %v1718 = vunpack.c.l.b16 %v1678
      %v1719 = vunpack.c.l.b16 %v1679
      %v1720 = vunpack.c.l.b16 %v1680
      %v1721 = vunpack.c.l.b16 %v1681
      %v1722 = vunpack.c.l.b16 %v1682
      %v1723 = vunpack.c.l.b16 %v1683
      %v1724 = vunpack.c.l.b16 %v1684
      %v1725 = vunpack.c.l.b16 %v1685
      %v1726 = vunpack.c.l.b16 %v1686
      %v1727 = vunpack.c.l.b16 %v1687
      %v1728 = vunpack.c.l.b16 %v1688
      %v1729 = vunpack.c.l.b16 %v1689
      %v1730 = vunpack.c.l.b16 %v1690
      %v1731 = vunpack.c.l.b16 %v1691
      %v1732 = vunpack.c.l.b16 %v1692
      %vm1733 = vcmask 1041409
      %v1734 = vsel %vm1733, %v1718, %v1717
      %vm1735 = vcmask 1042434
      %v1736 = vsel %vm1735, %v1719, %v1734
      %vm1737 = vcmask 1043459
      %v1738 = vsel %vm1737, %v1720, %v1736
      %vm1739 = vcmask 1044484
      %v1740 = vsel %vm1739, %v1721, %v1738
      %vm1741 = vcmask 1045509
      %v1742 = vsel %vm1741, %v1722, %v1740
      %vm1743 = vcmask 1046534
      %v1744 = vsel %vm1743, %v1723, %v1742
      %vm1745 = vcmask 1047559
      %v1746 = vsel %vm1745, %v1724, %v1744
      %v1747 = vsel %vm1733, %v1726, %v1725
      %v1748 = vsel %vm1735, %v1727, %v1747
      %v1749 = vsel %vm1737, %v1728, %v1748
      %v1750 = vsel %vm1739, %v1729, %v1749
      %v1751 = vsel %vm1741, %v1730, %v1750
      %v1752 = vsel %vm1743, %v1731, %v1751
      %v1753 = vsel %vm1745, %v1732, %v1752
      %v1754 = vpack.c.b16 %v1753, %v1746
      %v1756 = vsel %vm1483, %v1754, 0
      %vm1758 = vcmask 1040384
      %v1760 = vsel %vm1758, %v1693, 0
      %1762 = vmatprep.subr.bf16.mxu0 0
      %1763 = vmatpush1.bf16.msra.mxu0 0
      %1764 = vmatprep.subr.bf16.mxu0 0
      %1765 = vmatpush1.bf16.msra.mxu0 0
      %1766 = vmatprep.subr.bf16.mxu0 0
      %1767 = vmatpush1.bf16.msra.mxu0 0
      %1768 = vmatprep.subr.bf16.mxu0 0
      %1769 = vmatpush1.bf16.msra.mxu0 0
      %1770 = vmatprep.subr.bf16.mxu0 0
      %1771 = vmatpush1.bf16.msra.mxu0 0
      %1772 = vmatprep.subr.bf16.mxu0 0
      %1773 = vmatpush1.bf16.msra.mxu0 0
      %1774 = vmatprep.subr.bf16.mxu0 0
      %1775 = vmatpush1.bf16.msra.mxu0 0
      %1776 = vmatprep.subr.bf16.mxu0 0
      %1777 = vmatpush1.bf16.msra.mxu0 %v1760
      %1778 = vmatprep.subr.bf16.mxu0 0
      %1779 = vmatpush2.bf16.msra.mxu0 0
      %1780 = vmatprep.subr.bf16.mxu0 0
      %1781 = vmatpush2.bf16.msra.mxu0 0
      %1782 = vmatprep.subr.bf16.mxu0 0
      %1783 = vmatpush2.bf16.msra.mxu0 0
      %1784 = vmatprep.subr.bf16.mxu0 0
      %1785 = vmatpush2.bf16.msra.mxu0 0
      %1786 = vmatprep.subr.bf16.mxu0 0
      %1787 = vmatpush2.bf16.msra.mxu0 0
      %1788 = vmatprep.subr.bf16.mxu0 0
      %1789 = vmatpush2.bf16.msra.mxu0 0
      %1790 = vmatprep.subr.bf16.mxu0 0
      %1791 = vmatpush2.bf16.msra.mxu0 0
      %1792 = vmatprep.subr.bf16.mxu0 0
      %1793 = vmatpush2.bf16.msra.mxu0 0
      %1794 = vmatprep.mubr.bf16.mxu0 0
      %1795 = vmatmul.mubr.bf16.gmra.mxu0 %v1756
      %v1796 = vpop.f32.mrf.mxu0
      %v1797 = vadd.f32 %v1699, %v1796
      %v1798 = vpop.f32.mrf.mxu0
      %v1799 = vpop.f32.mrf.mxu0
      %v1800 = vadd.f32 %v1699, %v1799
      %v1801 = vpop.f32.mrf.mxu0
      %1802 = vdwg.mxu0
      %v1803 = vadd.f32 %v1797, 3.0
      %v1804 = vadd.f32 %v1800, 3.0
      %v1805 = vmax.f32 %v1803, 0.0
      %v1806 = vmax.f32 %v1804, 0.0
      %v1807 = vmin.f32 %v1805, 6.0
      %v1808 = vmin.f32 %v1806, 6.0
      %v1809 = vmul.f32 %v1797, %v1807
      %v1810 = vmul.f32 %v1800, %v1808
      %v1811 = vmul.f32 %v1809, 0.16666667
      %v1812 = vmul.f32 %v1810, 0.16666667
      %v1813 = vpack.c.bf16 %v1676, %v1675
      %v1815 = vsel %vm1483, %v1813, 0
      %1817 = vmatprep.subr.bf16.mxu0 0
      %1818 = vmatpush1.bf16.msra.mxu0 0
      %1819 = vmatprep.subr.bf16.mxu0 0
      %1820 = vmatpush1.bf16.msra.mxu0 0
      %1821 = vmatprep.subr.bf16.mxu0 0
      %1822 = vmatpush1.bf16.msra.mxu0 0
      %1823 = vmatprep.subr.bf16.mxu0 0
      %1824 = vmatpush1.bf16.msra.mxu0 0
      %1825 = vmatprep.subr.bf16.mxu0 0
      %1826 = vmatpush1.bf16.msra.mxu0 0
      %1827 = vmatprep.subr.bf16.mxu0 0
      %1828 = vmatpush1.bf16.msra.mxu0 0
      %1829 = vmatprep.subr.bf16.mxu0 0
      %1830 = vmatpush1.bf16.msra.mxu0 0
      %1831 = vmatprep.subr.bf16.mxu0 0
      %1832 = vmatpush1.bf16.msra.mxu0 %v1760
      %1833 = vmatprep.subr.bf16.mxu0 0
      %1834 = vmatpush2.bf16.msra.mxu0 0
      %1835 = vmatprep.subr.bf16.mxu0 0
      %1836 = vmatpush2.bf16.msra.mxu0 0
      %1837 = vmatprep.subr.bf16.mxu0 0
      %1838 = vmatpush2.bf16.msra.mxu0 0
      %1839 = vmatprep.subr.bf16.mxu0 0
      %1840 = vmatpush2.bf16.msra.mxu0 0
      %1841 = vmatprep.subr.bf16.mxu0 0
      %1842 = vmatpush2.bf16.msra.mxu0 0
      %1843 = vmatprep.subr.bf16.mxu0 0
      %1844 = vmatpush2.bf16.msra.mxu0 0
      %1845 = vmatprep.subr.bf16.mxu0 0
      %1846 = vmatpush2.bf16.msra.mxu0 0
      %1847 = vmatprep.subr.bf16.mxu0 0
      %1848 = vmatpush2.bf16.msra.mxu0 0
      %1849 = vmatprep.mubr.bf16.mxu0 0
      %1850 = vmatmul.mubr.bf16.gmra.mxu0 %v1815
      %v1851 = vpop.f32.mrf.mxu0
      %v1852 = vadd.f32 %v1699, %v1851
      %v1853 = vpop.f32.mrf.mxu0
      %v1854 = vpop.f32.mrf.mxu0
      %v1855 = vadd.f32 %v1699, %v1854
      %v1856 = vpop.f32.mrf.mxu0
      %1857 = vdwg.mxu0
      %v1858 = vadd.f32 %v1852, 3.0
      %v1859 = vadd.f32 %v1855, 3.0
      %v1860 = vmax.f32 %v1858, 0.0
      %v1861 = vmax.f32 %v1859, 0.0
      %v1862 = vmin.f32 %v1860, 6.0
      %v1863 = vmin.f32 %v1861, 6.0
      %v1864 = vmul.f32 %v1852, %v1862
      %v1865 = vmul.f32 %v1855, %v1863
      %v1866 = vmul.f32 %v1864, 0.16666667
      %v1867 = vmul.f32 %v1865, 0.16666667
      %v1868 = vpack.c.bf16 %v1812, %v1811
      %v1869 = vld [vmem:[%s7] sm:$0xf]
      %v1870 = vld [vmem:[%s8] sm:$0x1]
      %v1872 = vlaneseq
      %v1873 = vshrl.u32 %v1872, 7
      %v1874 = vsub.s32 0, %v1873
      %v1875 = vrot.slane %v1870, %v1874
      %vm1877 = vcmask 64512
      %v1879 = vsel %vm1877, %v1868, 0
      %vm1881 = vcmask 1043456
      %v1883 = vsel %vm1881, %v1869, 0
      %1885 = vmatprep.subr.bf16.mxu0 0
      %1886 = vmatpush1.bf16.msra.mxu0 0
      %1887 = vmatprep.subr.bf16.mxu0 0
      %1888 = vmatpush1.bf16.msra.mxu0 0
      %1889 = vmatprep.subr.bf16.mxu0 0
      %1890 = vmatpush1.bf16.msra.mxu0 0
      %1891 = vmatprep.subr.bf16.mxu0 0
      %1892 = vmatpush1.bf16.msra.mxu0 0
      %1893 = vmatprep.subr.bf16.mxu0 0
      %1894 = vmatpush1.bf16.msra.mxu0 0
      %1895 = vmatprep.subr.bf16.mxu0 0
      %1896 = vmatpush1.bf16.msra.mxu0 0
      %1897 = vmatprep.subr.bf16.mxu0 0
      %1898 = vmatpush1.bf16.msra.mxu0 0
      %1899 = vmatprep.subr.bf16.mxu0 0
      %1900 = vmatpush1.bf16.msra.mxu0 %v1883
      %1901 = vmatprep.subr.bf16.mxu0 0
      %1902 = vmatpush2.bf16.msra.mxu0 0
      %1903 = vmatprep.subr.bf16.mxu0 0
      %1904 = vmatpush2.bf16.msra.mxu0 0
      %1905 = vmatprep.subr.bf16.mxu0 0
      %1906 = vmatpush2.bf16.msra.mxu0 0
      %1907 = vmatprep.subr.bf16.mxu0 0
      %1908 = vmatpush2.bf16.msra.mxu0 0
      %1909 = vmatprep.subr.bf16.mxu0 0
      %1910 = vmatpush2.bf16.msra.mxu0 0
      %1911 = vmatprep.subr.bf16.mxu0 0
      %1912 = vmatpush2.bf16.msra.mxu0 0
      %1913 = vmatprep.subr.bf16.mxu0 0
      %1914 = vmatpush2.bf16.msra.mxu0 0
      %1915 = vmatprep.subr.bf16.mxu0 0
      %1916 = vmatpush2.bf16.msra.mxu0 0
      %1917 = vmatprep.mubr.bf16.mxu0 0
      %1918 = vmatmul.mubr.bf16.gmra.mxu0 %v1879
      %v1919 = vpop.f32.mrf.mxu0
      %v1920 = vadd.f32 %v1875, %v1919
      %v1921 = vpop.f32.mrf.mxu0
      %v1922 = vpop.f32.mrf.mxu0
      %v1923 = vadd.f32 %v1875, %v1922
      %v1924 = vpop.f32.mrf.mxu0
      %1925 = vdwg.mxu0
      %v1926 = vsub.f32 0.0, %v1920
      %v1927 = vsub.f32 0.0, %v1923
      %v1928 = vmul.f32 %v1926, 1.442695
      %v1929 = vpow.pop %v1928
      %v1930 = vmul.f32 %v1927, 1.442695
      %v1931 = vpow.pop %v1930
      %v1932 = vadd.f32 %v1929, 1.0
      %v1933 = vadd.f32 %v1931, 1.0
      %v1934 = vrcp.pop %v1932
      %v1935 = vrcp.pop %v1933
      %v1936 = vpack.c.bf16 %v1867, %v1866
      %v1937 = vld [vmem:[%s9] sm:$0xf]
      %v1938 = vld [vmem:[%s10] sm:$0x1]
      %v1940 = vlaneseq
      %v1941 = vshrl.u32 %v1940, 7
      %v1942 = vsub.s32 0, %v1941
      %v1943 = vrot.slane %v1938, %v1942
      %v1946 = vsel %vm1877, %v1936, 0
      %v1949 = vsel %vm1881, %v1937, 0
      %1951 = vmatprep.subr.bf16.mxu0 0
      %1952 = vmatpush1.bf16.msra.mxu0 0
      %1953 = vmatprep.subr.bf16.mxu0 0
      %1954 = vmatpush1.bf16.msra.mxu0 0
      %1955 = vmatprep.subr.bf16.mxu0 0
      %1956 = vmatpush1.bf16.msra.mxu0 0
      %1957 = vmatprep.subr.bf16.mxu0 0
      %1958 = vmatpush1.bf16.msra.mxu0 0
      %1959 = vmatprep.subr.bf16.mxu0 0
      %1960 = vmatpush1.bf16.msra.mxu0 0
      %1961 = vmatprep.subr.bf16.mxu0 0
      %1962 = vmatpush1.bf16.msra.mxu0 0
      %1963 = vmatprep.subr.bf16.mxu0 0
      %1964 = vmatpush1.bf16.msra.mxu0 0
      %1965 = vmatprep.subr.bf16.mxu0 0
      %1966 = vmatpush1.bf16.msra.mxu0 %v1949
      %1967 = vmatprep.subr.bf16.mxu0 0
      %1968 = vmatpush2.bf16.msra.mxu0 0
      %1969 = vmatprep.subr.bf16.mxu0 0
      %1970 = vmatpush2.bf16.msra.mxu0 0
      %1971 = vmatprep.subr.bf16.mxu0 0
      %1972 = vmatpush2.bf16.msra.mxu0 0
      %1973 = vmatprep.subr.bf16.mxu0 0
      %1974 = vmatpush2.bf16.msra.mxu0 0
      %1975 = vmatprep.subr.bf16.mxu0 0
      %1976 = vmatpush2.bf16.msra.mxu0 0
      %1977 = vmatprep.subr.bf16.mxu0 0
      %1978 = vmatpush2.bf16.msra.mxu0 0
      %1979 = vmatprep.subr.bf16.mxu0 0
      %1980 = vmatpush2.bf16.msra.mxu0 0
      %1981 = vmatprep.subr.bf16.mxu0 0
      %1982 = vmatpush2.bf16.msra.mxu0 0
      %1983 = vmatprep.mubr.bf16.mxu0 0
      %1984 = vmatmul.mubr.bf16.gmra.mxu0 %v1946
      %v1985 = vpop.f32.mrf.mxu0
      %v1986 = vadd.f32 %v1943, %v1985
      %v1987 = vpop.f32.mrf.mxu0
      %v1988 = vpop.f32.mrf.mxu0
      %v1989 = vadd.f32 %v1943, %v1988
      %v1990 = vpop.f32.mrf.mxu0
      %1991 = vdwg.mxu0
      %v1992 = vsub.f32 0.0, %v1986
      %v1993 = vsub.f32 0.0, %v1989
      %v1994 = vmul.f32 %v1992, 1.442695
      %v1995 = vpow.pop %v1994
      %v1996 = vmul.f32 %v1993, 1.442695
      %v1997 = vpow.pop %v1996
      %v1998 = vadd.f32 %v1995, 1.0
      %v1999 = vadd.f32 %v1997, 1.0
      %v2000 = vrcp.pop %v1998
      %v2001 = vrcp.pop %v1999
      %v2004 = vcombine.high %v1934, %v1934
      %v2006 = vunpack.c.l.s4 1966171168
      %v2007 = vunpack.c.0.s8 %v2006
      %v2008 = vlaneseq
      %v2009 = vshrl.u32 %v2008, 7
      %v2010 = vsub.s32 %v2007, %v2009
      %v2011 = vrot.slane %v1934, %v2010
      %v2013 = vunpack.c.l.s4 1966171168
      %v2014 = vunpack.c.0.s8 %v2013
      %v2015 = vlaneseq
      %v2016 = vshrl.u32 %v2015, 7
      %v2017 = vsub.s32 %v2014, %v2016
      %v2018 = vrot.slane %v2004, %v2017
      %v2019 = vcombine.high %v2011, %v2011
      %v2020 = vcombine.high %v2018, %v2018
      %v2022 = vunpack.c.l.s4 1966171168
      %v2023 = vunpack.c.0.s8 %v2022
      %v2024 = vlaneseq
      %v2025 = vshrl.u32 %v2024, 7
      %v2026 = vsub.s32 %v2023, %v2025
      %v2027 = vrot.slane %v2011, %v2026
      %v2029 = vunpack.c.l.s4 1966171168
      %v2030 = vunpack.c.0.s8 %v2029
      %v2031 = vlaneseq
      %v2032 = vshrl.u32 %v2031, 7
      %v2033 = vsub.s32 %v2030, %v2032
      %v2034 = vrot.slane %v2018, %v2033
      %v2036 = vunpack.c.l.s4 1966171168
      %v2037 = vunpack.c.0.s8 %v2036
      %v2038 = vlaneseq
      %v2039 = vshrl.u32 %v2038, 7
      %v2040 = vsub.s32 %v2037, %v2039
      %v2041 = vrot.slane %v2019, %v2040
      %v2043 = vunpack.c.l.s4 1966171168
      %v2044 = vunpack.c.0.s8 %v2043
      %v2045 = vlaneseq
      %v2046 = vshrl.u32 %v2045, 7
      %v2047 = vsub.s32 %v2044, %v2046
      %v2048 = vrot.slane %v2020, %v2047
      %v2049 = vcombine.high %v2027, %v2027
      %v2050 = vcombine.high %v2034, %v2034
      %v2051 = vcombine.high %v2041, %v2041
      %v2052 = vcombine.high %v2048, %v2048
      %v2053 = vcombine.high %v1935, %v1935
      %v2055 = vunpack.c.l.s4 1966171168
      %v2056 = vunpack.c.0.s8 %v2055
      %v2057 = vlaneseq
      %v2058 = vshrl.u32 %v2057, 7
      %v2059 = vsub.s32 %v2056, %v2058
      %v2060 = vrot.slane %v1935, %v2059
      %v2062 = vunpack.c.l.s4 1966171168
      %v2063 = vunpack.c.0.s8 %v2062
      %v2064 = vlaneseq
      %v2065 = vshrl.u32 %v2064, 7
      %v2066 = vsub.s32 %v2063, %v2065
      %v2067 = vrot.slane %v2053, %v2066
      %v2068 = vcombine.high %v2060, %v2060
      %v2069 = vcombine.high %v2067, %v2067
      %v2071 = vunpack.c.l.s4 1966171168
      %v2072 = vunpack.c.0.s8 %v2071
      %v2073 = vlaneseq
      %v2074 = vshrl.u32 %v2073, 7
      %v2075 = vsub.s32 %v2072, %v2074
      %v2076 = vrot.slane %v2060, %v2075
      %v2078 = vunpack.c.l.s4 1966171168
      %v2079 = vunpack.c.0.s8 %v2078
      %v2080 = vlaneseq
      %v2081 = vshrl.u32 %v2080, 7
      %v2082 = vsub.s32 %v2079, %v2081
      %v2083 = vrot.slane %v2067, %v2082
      %v2085 = vunpack.c.l.s4 1966171168
      %v2086 = vunpack.c.0.s8 %v2085
      %v2087 = vlaneseq
      %v2088 = vshrl.u32 %v2087, 7
      %v2089 = vsub.s32 %v2086, %v2088
      %v2090 = vrot.slane %v2068, %v2089
      %v2092 = vunpack.c.l.s4 1966171168
      %v2093 = vunpack.c.0.s8 %v2092
      %v2094 = vlaneseq
      %v2095 = vshrl.u32 %v2094, 7
      %v2096 = vsub.s32 %v2093, %v2095
      %v2097 = vrot.slane %v2069, %v2096
      %v2098 = vcombine.high %v2076, %v2076
      %v2099 = vcombine.high %v2083, %v2083
      %v2100 = vcombine.high %v2090, %v2090
      %v2101 = vcombine.high %v2097, %v2097
      %v2102 = vlaneseq
      %v2103 = vshrl.u32 %v2102, 7
      %v2104 = vsub.s32 0, %v2103
      %v2105 = vrot.slane %v2027, %v2104
      %v2106 = vlaneseq
      %v2107 = vshrl.u32 %v2106, 7
      %v2108 = vsub.s32 0, %v2107
      %v2109 = vrot.slane %v2041, %v2108
      %v2110 = vlaneseq
      %v2111 = vshrl.u32 %v2110, 7
      %v2112 = vsub.s32 0, %v2111
      %v2113 = vrot.slane %v2049, %v2112
      %v2114 = vlaneseq
      %v2115 = vshrl.u32 %v2114, 7
      %v2116 = vsub.s32 0, %v2115
      %v2117 = vrot.slane %v2051, %v2116
      %v2118 = vlaneseq
      %v2119 = vshrl.u32 %v2118, 7
      %v2120 = vsub.s32 0, %v2119
      %v2121 = vrot.slane %v2034, %v2120
      %v2122 = vlaneseq
      %v2123 = vshrl.u32 %v2122, 7
      %v2124 = vsub.s32 0, %v2123
      %v2125 = vrot.slane %v2048, %v2124
      %v2126 = vlaneseq
      %v2127 = vshrl.u32 %v2126, 7
      %v2128 = vsub.s32 0, %v2127
      %v2129 = vrot.slane %v2050, %v2128
      %v2130 = vlaneseq
      %v2131 = vshrl.u32 %v2130, 7
      %v2132 = vsub.s32 0, %v2131
      %v2133 = vrot.slane %v2052, %v2132
      %v2134 = vlaneseq
      %v2135 = vshrl.u32 %v2134, 7
      %v2136 = vsub.s32 0, %v2135
      %v2137 = vrot.slane %v2076, %v2136
      %v2138 = vlaneseq
      %v2139 = vshrl.u32 %v2138, 7
      %v2140 = vsub.s32 0, %v2139
      %v2141 = vrot.slane %v2090, %v2140
      %v2142 = vlaneseq
      %v2143 = vshrl.u32 %v2142, 7
      %v2144 = vsub.s32 0, %v2143
      %v2145 = vrot.slane %v2098, %v2144
      %v2146 = vlaneseq
      %v2147 = vshrl.u32 %v2146, 7
      %v2148 = vsub.s32 0, %v2147
      %v2149 = vrot.slane %v2100, %v2148
      %v2150 = vlaneseq
      %v2151 = vshrl.u32 %v2150, 7
      %v2152 = vsub.s32 0, %v2151
      %v2153 = vrot.slane %v2083, %v2152
      %v2154 = vlaneseq
      %v2155 = vshrl.u32 %v2154, 7
      %v2156 = vsub.s32 0, %v2155
      %v2157 = vrot.slane %v2097, %v2156
      %v2158 = vlaneseq
      %v2159 = vshrl.u32 %v2158, 7
      %v2160 = vsub.s32 0, %v2159
      %v2161 = vrot.slane %v2099, %v2160
      %v2162 = vlaneseq
      %v2163 = vshrl.u32 %v2162, 7
      %v2164 = vsub.s32 0, %v2163
      %v2165 = vrot.slane %v2101, %v2164
      %v2182 = vmul.f32 %v2000, %v2105
      %v2183 = vmul.f32 %v2001, %v2105
      %v2184 = vmul.f32 %v2000, %v2109
      %v2185 = vmul.f32 %v2001, %v2109
      %v2186 = vmul.f32 %v2000, %v2113
      %v2187 = vmul.f32 %v2001, %v2113
      %v2188 = vmul.f32 %v2000, %v2117
      %v2189 = vmul.f32 %v2001, %v2117
      %v2190 = vmul.f32 %v2000, %v2121
      %v2191 = vmul.f32 %v2001, %v2121
      %v2192 = vmul.f32 %v2000, %v2125
      %v2193 = vmul.f32 %v2001, %v2125
      %v2194 = vmul.f32 %v2000, %v2129
      %v2195 = vmul.f32 %v2001, %v2129
      %v2196 = vmul.f32 %v2000, %v2133
      %v2197 = vmul.f32 %v2001, %v2133
      %v2198 = vmul.f32 %v2000, %v2137
      %v2199 = vmul.f32 %v2001, %v2137
      %v2200 = vmul.f32 %v2000, %v2141
      %v2201 = vmul.f32 %v2001, %v2141
      %v2202 = vmul.f32 %v2000, %v2145
      %v2203 = vmul.f32 %v2001, %v2145
      %v2204 = vmul.f32 %v2000, %v2149
      %v2205 = vmul.f32 %v2001, %v2149
      %v2206 = vmul.f32 %v2000, %v2153
      %v2207 = vmul.f32 %v2001, %v2153
      %v2208 = vmul.f32 %v2000, %v2157
      %v2209 = vmul.f32 %v2001, %v2157
      %v2210 = vmul.f32 %v2000, %v2161
      %v2211 = vmul.f32 %v2001, %v2161
      %v2212 = vmul.f32 %v2000, %v2165
      %v2213 = vmul.f32 %v2001, %v2165
      %v2214 = vmul.f32 %v1451, %v2182
      %v2215 = vmul.f32 %v1452, %v2183
      %v2216 = vmul.f32 %v1453, %v2184
      %v2217 = vmul.f32 %v1454, %v2185
      %v2218 = vmul.f32 %v1455, %v2186
      %v2219 = vmul.f32 %v1456, %v2187
      %v2220 = vmul.f32 %v1457, %v2188
      %v2221 = vmul.f32 %v1458, %v2189
      %v2222 = vmul.f32 %v1459, %v2190
      %v2223 = vmul.f32 %v1460, %v2191
      %v2224 = vmul.f32 %v1461, %v2192
      %v2225 = vmul.f32 %v1462, %v2193
      %v2226 = vmul.f32 %v1463, %v2194
      %v2227 = vmul.f32 %v1464, %v2195
      %v2228 = vmul.f32 %v1465, %v2196
      %v2229 = vmul.f32 %v1466, %v2197
      %v2230 = vmul.f32 %v1467, %v2198
      %v2231 = vmul.f32 %v1468, %v2199
      %v2232 = vmul.f32 %v1469, %v2200
      %v2233 = vmul.f32 %v1470, %v2201
      %v2234 = vmul.f32 %v1471, %v2202
      %v2235 = vmul.f32 %v1472, %v2203
      %v2236 = vmul.f32 %v1473, %v2204
      %v2237 = vmul.f32 %v1474, %v2205
      %v2238 = vmul.f32 %v1475, %v2206
      %v2239 = vmul.f32 %v1476, %v2207
      %v2240 = vmul.f32 %v1477, %v2208
      %v2241 = vmul.f32 %v1478, %v2209
      %v2242 = vmul.f32 %v1479, %v2210
      %v2243 = vmul.f32 %v1480, %v2211
      %v2244 = vmul.f32 %v1481, %v2212
      %v2245 = vmul.f32 %v1482, %v2213
      %v2246 = vadd.f32 %v1451, %v2214
      %v2247 = vadd.f32 %v1452, %v2215
      %v2248 = vadd.f32 %v1453, %v2216
      %v2249 = vadd.f32 %v1454, %v2217
      %v2250 = vadd.f32 %v1455, %v2218
      %v2251 = vadd.f32 %v1456, %v2219
      %v2252 = vadd.f32 %v1457, %v2220
      %v2253 = vadd.f32 %v1458, %v2221
      %v2254 = vadd.f32 %v1459, %v2222
      %v2255 = vadd.f32 %v1460, %v2223
      %v2256 = vadd.f32 %v1461, %v2224
      %v2257 = vadd.f32 %v1462, %v2225
      %v2258 = vadd.f32 %v1463, %v2226
      %v2259 = vadd.f32 %v1464, %v2227
      %v2260 = vadd.f32 %v1465, %v2228
      %v2261 = vadd.f32 %v1466, %v2229
      %v2262 = vadd.f32 %v1467, %v2230
      %v2263 = vadd.f32 %v1468, %v2231
      %v2264 = vadd.f32 %v1469, %v2232
      %v2265 = vadd.f32 %v1470, %v2233
      %v2266 = vadd.f32 %v1471, %v2234
      %v2267 = vadd.f32 %v1472, %v2235
      %v2268 = vadd.f32 %v1473, %v2236
      %v2269 = vadd.f32 %v1474, %v2237
      %v2270 = vadd.f32 %v1475, %v2238
      %v2271 = vadd.f32 %v1476, %v2239
      %v2272 = vadd.f32 %v1477, %v2240
      %v2273 = vadd.f32 %v1478, %v2241
      %v2274 = vadd.f32 %v1479, %v2242
      %v2275 = vadd.f32 %v1480, %v2243
      %v2276 = vadd.f32 %v1481, %v2244
      %v2277 = vadd.f32 %v1482, %v2245
      %v2278 = vpack.c.bf16 %v2247, %v2246
      %v2279 = vpack.c.bf16 %v2249, %v2248
      %v2280 = vpack.c.bf16 %v2251, %v2250
      %v2281 = vpack.c.bf16 %v2253, %v2252
      %v2282 = vpack.c.bf16 %v2255, %v2254
      %v2283 = vpack.c.bf16 %v2257, %v2256
      %v2284 = vpack.c.bf16 %v2259, %v2258
      %v2285 = vpack.c.bf16 %v2261, %v2260
      %v2286 = vpack.c.bf16 %v2263, %v2262
      %v2287 = vpack.c.bf16 %v2265, %v2264
      %v2288 = vpack.c.bf16 %v2267, %v2266
      %v2289 = vpack.c.bf16 %v2269, %v2268
      %v2290 = vpack.c.bf16 %v2271, %v2270
      %v2291 = vpack.c.bf16 %v2273, %v2272
      %v2292 = vpack.c.bf16 %v2275, %v2274
      %v2293 = vpack.c.bf16 %v2277, %v2276
      %v2294 = vld [vmem:[%s11] sm:$0x1]
      %v2295 = vld [vmem:[%s12] sm:$0x1]
      %v2297 = vlaneseq
      %v2298 = vshrl.u32 %v2297, 7
      %v2299 = vsub.s32 0, %v2298
      %v2300 = vrot.slane %v2295, %v2299
      %v2303 = vsel %vm1483, %v2278, 0
      %v2306 = vsel %vm1483, %v2279, 0
      %v2309 = vsel %vm1483, %v2280, 0
      %v2312 = vsel %vm1483, %v2281, 0
      %v2315 = vsel %vm1483, %v2282, 0
      %v2318 = vsel %vm1483, %v2283, 0
      %v2321 = vsel %vm1483, %v2284, 0
      %v2324 = vsel %vm1483, %v2285, 0
      %v2327 = vsel %vm1483, %v2286, 0
      %v2330 = vsel %vm1483, %v2287, 0
      %v2333 = vsel %vm1483, %v2288, 0
      %v2336 = vsel %vm1483, %v2289, 0
      %v2339 = vsel %vm1483, %v2290, 0
      %v2342 = vsel %vm1483, %v2291, 0
      %v2345 = vsel %vm1483, %v2292, 0
      %v2348 = vsel %vm1483, %v2293, 0
      %v2351 = vsel %vm1758, %v2294, 0
      %2353 = vmatprep.subr.bf16.mxu0 0
      %2354 = vmatpush1.bf16.msra.mxu0 0
      %2355 = vmatprep.subr.bf16.mxu0 0
      %2356 = vmatpush1.bf16.msra.mxu0 0
      %2357 = vmatprep.subr.bf16.mxu0 0
      %2358 = vmatpush1.bf16.msra.mxu0 0
      %2359 = vmatprep.subr.bf16.mxu0 0
      %2360 = vmatpush1.bf16.msra.mxu0 0
      %2361 = vmatprep.subr.bf16.mxu0 0
      %2362 = vmatpush1.bf16.msra.mxu0 0
      %2363 = vmatprep.subr.bf16.mxu0 0
      %2364 = vmatpush1.bf16.msra.mxu0 0
      %2365 = vmatprep.subr.bf16.mxu0 0
      %2366 = vmatpush1.bf16.msra.mxu0 0
      %2367 = vmatprep.subr.bf16.mxu0 0
      %2368 = vmatpush1.bf16.msra.mxu0 %v2351
      %2369 = vmatprep.subr.bf16.mxu0 0
      %2370 = vmatpush2.bf16.msra.mxu0 0
      %2371 = vmatprep.subr.bf16.mxu0 0
      %2372 = vmatpush2.bf16.msra.mxu0 0
      %2373 = vmatprep.subr.bf16.mxu0 0
      %2374 = vmatpush2.bf16.msra.mxu0 0
      %2375 = vmatprep.subr.bf16.mxu0 0
      %2376 = vmatpush2.bf16.msra.mxu0 0
      %2377 = vmatprep.subr.bf16.mxu0 0
      %2378 = vmatpush2.bf16.msra.mxu0 0
      %2379 = vmatprep.subr.bf16.mxu0 0
      %2380 = vmatpush2.bf16.msra.mxu0 0
      %2381 = vmatprep.subr.bf16.mxu0 0
      %2382 = vmatpush2.bf16.msra.mxu0 0
      %2383 = vmatprep.subr.bf16.mxu0 0
      %2384 = vmatpush2.bf16.msra.mxu0 0
      %2385 = vmatprep.mubr.bf16.mxu0 0
      %2386 = vmatmul.mubr.bf16.gmra.mxu0 %v2303
      %v2387 = vpop.f32.mrf.mxu0
      %v2388 = vadd.f32 %v2300, %v2387
      %v2389 = vpop.f32.mrf.mxu0
      %v2390 = vpop.f32.mrf.mxu0
      %v2391 = vadd.f32 %v2300, %v2390
      %v2392 = vpop.f32.mrf.mxu0
      %2393 = vmatprep.mubr.bf16.mxu0 0
      %2394 = vmatmul.mubr.bf16.gmra.mxu0 %v2306
      %v2395 = vpop.f32.mrf.mxu0
      %v2396 = vadd.f32 %v2300, %v2395
      %v2397 = vpop.f32.mrf.mxu0
      %v2398 = vpop.f32.mrf.mxu0
      %v2399 = vadd.f32 %v2300, %v2398
      %v2400 = vpop.f32.mrf.mxu0
      %2401 = vmatprep.mubr.bf16.mxu0 0
      %2402 = vmatmul.mubr.bf16.gmra.mxu0 %v2309
      %v2403 = vpop.f32.mrf.mxu0
      %v2404 = vadd.f32 %v2300, %v2403
      %v2405 = vpop.f32.mrf.mxu0
      %v2406 = vpop.f32.mrf.mxu0
      %v2407 = vadd.f32 %v2300, %v2406
      %v2408 = vpop.f32.mrf.mxu0
      %2409 = vmatprep.mubr.bf16.mxu0 0
      %2410 = vmatmul.mubr.bf16.gmra.mxu0 %v2312
      %v2411 = vpop.f32.mrf.mxu0
      %v2412 = vadd.f32 %v2300, %v2411
      %v2413 = vpop.f32.mrf.mxu0
      %v2414 = vpop.f32.mrf.mxu0
      %v2415 = vadd.f32 %v2300, %v2414
      %v2416 = vpop.f32.mrf.mxu0
      %2417 = vmatprep.mubr.bf16.mxu0 0
      %2418 = vmatmul.mubr.bf16.gmra.mxu0 %v2315
      %v2419 = vpop.f32.mrf.mxu0
      %v2420 = vadd.f32 %v2300, %v2419
      %v2421 = vpop.f32.mrf.mxu0
      %v2422 = vpop.f32.mrf.mxu0
      %v2423 = vadd.f32 %v2300, %v2422
      %v2424 = vpop.f32.mrf.mxu0
      %2425 = vmatprep.mubr.bf16.mxu0 0
      %2426 = vmatmul.mubr.bf16.gmra.mxu0 %v2318
      %v2427 = vpop.f32.mrf.mxu0
      %v2428 = vadd.f32 %v2300, %v2427
      %v2429 = vpop.f32.mrf.mxu0
      %v2430 = vpop.f32.mrf.mxu0
      %v2431 = vadd.f32 %v2300, %v2430
      %v2432 = vpop.f32.mrf.mxu0
      %2433 = vmatprep.mubr.bf16.mxu0 0
      %2434 = vmatmul.mubr.bf16.gmra.mxu0 %v2321
      %v2435 = vpop.f32.mrf.mxu0
      %v2436 = vadd.f32 %v2300, %v2435
      %v2437 = vpop.f32.mrf.mxu0
      %v2438 = vpop.f32.mrf.mxu0
      %v2439 = vadd.f32 %v2300, %v2438
      %v2440 = vpop.f32.mrf.mxu0
      %2441 = vmatprep.mubr.bf16.mxu0 0
      %2442 = vmatmul.mubr.bf16.gmra.mxu0 %v2324
      %v2443 = vpop.f32.mrf.mxu0
      %v2444 = vadd.f32 %v2300, %v2443
      %v2445 = vpop.f32.mrf.mxu0
      %v2446 = vpop.f32.mrf.mxu0
      %v2447 = vadd.f32 %v2300, %v2446
      %v2448 = vpop.f32.mrf.mxu0
      %2449 = vmatprep.mubr.bf16.mxu0 0
      %2450 = vmatmul.mubr.bf16.gmra.mxu0 %v2327
      %v2451 = vpop.f32.mrf.mxu0
      %v2452 = vadd.f32 %v2300, %v2451
      %v2453 = vpop.f32.mrf.mxu0
      %v2454 = vpop.f32.mrf.mxu0
      %v2455 = vadd.f32 %v2300, %v2454
      %v2456 = vpop.f32.mrf.mxu0
      %2457 = vmatprep.mubr.bf16.mxu0 0
      %2458 = vmatmul.mubr.bf16.gmra.mxu0 %v2330
      %v2459 = vpop.f32.mrf.mxu0
      %v2460 = vadd.f32 %v2300, %v2459
      %v2461 = vpop.f32.mrf.mxu0
      %v2462 = vpop.f32.mrf.mxu0
      %v2463 = vadd.f32 %v2300, %v2462
      %v2464 = vpop.f32.mrf.mxu0
      %2465 = vmatprep.mubr.bf16.mxu0 0
      %2466 = vmatmul.mubr.bf16.gmra.mxu0 %v2333
      %v2467 = vpop.f32.mrf.mxu0
      %v2468 = vadd.f32 %v2300, %v2467
      %v2469 = vpop.f32.mrf.mxu0
      %v2470 = vpop.f32.mrf.mxu0
      %v2471 = vadd.f32 %v2300, %v2470
      %v2472 = vpop.f32.mrf.mxu0
      %2473 = vmatprep.mubr.bf16.mxu0 0
      %2474 = vmatmul.mubr.bf16.gmra.mxu0 %v2336
      %v2475 = vpop.f32.mrf.mxu0
      %v2476 = vadd.f32 %v2300, %v2475
      %v2477 = vpop.f32.mrf.mxu0
      %v2478 = vpop.f32.mrf.mxu0
      %v2479 = vadd.f32 %v2300, %v2478
      %v2480 = vpop.f32.mrf.mxu0
      %2481 = vmatprep.mubr.bf16.mxu0 0
      %2482 = vmatmul.mubr.bf16.gmra.mxu0 %v2339
      %v2483 = vpop.f32.mrf.mxu0
      %v2484 = vadd.f32 %v2300, %v2483
      %v2485 = vpop.f32.mrf.mxu0
      %v2486 = vpop.f32.mrf.mxu0
      %v2487 = vadd.f32 %v2300, %v2486
      %v2488 = vpop.f32.mrf.mxu0
      %2489 = vmatprep.mubr.bf16.mxu0 0
      %2490 = vmatmul.mubr.bf16.gmra.mxu0 %v2342
      %v2491 = vpop.f32.mrf.mxu0
      %v2492 = vadd.f32 %v2300, %v2491
      %v2493 = vpop.f32.mrf.mxu0
      %v2494 = vpop.f32.mrf.mxu0
      %v2495 = vadd.f32 %v2300, %v2494
      %v2496 = vpop.f32.mrf.mxu0
      %2497 = vmatprep.mubr.bf16.mxu0 0
      %2498 = vmatmul.mubr.bf16.gmra.mxu0 %v2345
      %v2499 = vpop.f32.mrf.mxu0
      %v2500 = vadd.f32 %v2300, %v2499
      %v2501 = vpop.f32.mrf.mxu0
      %v2502 = vpop.f32.mrf.mxu0
      %v2503 = vadd.f32 %v2300, %v2502
      %v2504 = vpop.f32.mrf.mxu0
      %2505 = vmatprep.mubr.bf16.mxu0 0
      %2506 = vmatmul.mubr.bf16.gmra.mxu0 %v2348
      %v2507 = vpop.f32.mrf.mxu0
      %v2508 = vadd.f32 %v2300, %v2507
      %v2509 = vpop.f32.mrf.mxu0
      %v2510 = vpop.f32.mrf.mxu0
      %v2511 = vadd.f32 %v2300, %v2510
      %v2512 = vpop.f32.mrf.mxu0
      %2513 = vdwg.mxu0
      %v2514 = vsub.f32 0.0, %v2388
      %v2515 = vsub.f32 0.0, %v2391
      %v2516 = vsub.f32 0.0, %v2396
      %v2517 = vsub.f32 0.0, %v2399
      %v2518 = vsub.f32 0.0, %v2404
      %v2519 = vsub.f32 0.0, %v2407
      %v2520 = vsub.f32 0.0, %v2412
      %v2521 = vsub.f32 0.0, %v2415
      %v2522 = vsub.f32 0.0, %v2420
      %v2523 = vsub.f32 0.0, %v2423
      %v2524 = vsub.f32 0.0, %v2428
      %v2525 = vsub.f32 0.0, %v2431
      %v2526 = vsub.f32 0.0, %v2436
      %v2527 = vsub.f32 0.0, %v2439
      %v2528 = vsub.f32 0.0, %v2444
      %v2529 = vsub.f32 0.0, %v2447
      %v2530 = vsub.f32 0.0, %v2452
      %v2531 = vsub.f32 0.0, %v2455
      %v2532 = vsub.f32 0.0, %v2460
      %v2533 = vsub.f32 0.0, %v2463
      %v2534 = vsub.f32 0.0, %v2468
      %v2535 = vsub.f32 0.0, %v2471
      %v2536 = vsub.f32 0.0, %v2476
      %v2537 = vsub.f32 0.0, %v2479
      %v2538 = vsub.f32 0.0, %v2484
      %v2539 = vsub.f32 0.0, %v2487
      %v2540 = vsub.f32 0.0, %v2492
      %v2541 = vsub.f32 0.0, %v2495
      %v2542 = vsub.f32 0.0, %v2500
      %v2543 = vsub.f32 0.0, %v2503
      %v2544 = vsub.f32 0.0, %v2508
      %v2545 = vsub.f32 0.0, %v2511
      %v2546 = vmul.f32 %v2514, 1.442695
      %v2547 = vpow.pop %v2546
      %v2548 = vmul.f32 %v2515, 1.442695
      %v2549 = vpow.pop %v2548
      %v2550 = vmul.f32 %v2516, 1.442695
      %v2551 = vpow.pop %v2550
      %v2552 = vmul.f32 %v2517, 1.442695
      %v2553 = vpow.pop %v2552
      %v2554 = vmul.f32 %v2518, 1.442695
      %v2555 = vpow.pop %v2554
      %v2556 = vmul.f32 %v2519, 1.442695
      %v2557 = vpow.pop %v2556
      %v2558 = vmul.f32 %v2520, 1.442695
      %v2559 = vpow.pop %v2558
      %v2560 = vmul.f32 %v2521, 1.442695
      %v2561 = vpow.pop %v2560
      %v2562 = vmul.f32 %v2522, 1.442695
      %v2563 = vpow.pop %v2562
      %v2564 = vmul.f32 %v2523, 1.442695
      %v2565 = vpow.pop %v2564
      %v2566 = vmul.f32 %v2524, 1.442695
      %v2567 = vpow.pop %v2566
      %v2568 = vmul.f32 %v2525, 1.442695
      %v2569 = vpow.pop %v2568
      %v2570 = vmul.f32 %v2526, 1.442695
      %v2571 = vpow.pop %v2570
      %v2572 = vmul.f32 %v2527, 1.442695
      %v2573 = vpow.pop %v2572
      %v2574 = vmul.f32 %v2528, 1.442695
      %v2575 = vpow.pop %v2574
      %v2576 = vmul.f32 %v2529, 1.442695
      %v2577 = vpow.pop %v2576
      %v2578 = vmul.f32 %v2530, 1.442695
      %v2579 = vpow.pop %v2578
      %v2580 = vmul.f32 %v2531, 1.442695
      %v2581 = vpow.pop %v2580
      %v2582 = vmul.f32 %v2532, 1.442695
      %v2583 = vpow.pop %v2582
      %v2584 = vmul.f32 %v2533, 1.442695
      %v2585 = vpow.pop %v2584
      %v2586 = vmul.f32 %v2534, 1.442695
      %v2587 = vpow.pop %v2586
      %v2588 = vmul.f32 %v2535, 1.442695
      %v2589 = vpow.pop %v2588
      %v2590 = vmul.f32 %v2536, 1.442695
      %v2591 = vpow.pop %v2590
      %v2592 = vmul.f32 %v2537, 1.442695
      %v2593 = vpow.pop %v2592
      %v2594 = vmul.f32 %v2538, 1.442695
      %v2595 = vpow.pop %v2594
      %v2596 = vmul.f32 %v2539, 1.442695
      %v2597 = vpow.pop %v2596
      %v2598 = vmul.f32 %v2540, 1.442695
      %v2599 = vpow.pop %v2598
      %v2600 = vmul.f32 %v2541, 1.442695
      %v2601 = vpow.pop %v2600
      %v2602 = vmul.f32 %v2542, 1.442695
      %v2603 = vpow.pop %v2602
      %v2604 = vmul.f32 %v2543, 1.442695
      %v2605 = vpow.pop %v2604
      %v2606 = vmul.f32 %v2544, 1.442695
      %v2607 = vpow.pop %v2606
      %v2608 = vmul.f32 %v2545, 1.442695
      %v2609 = vpow.pop %v2608
      %v2610 = vadd.f32 %v2547, 1.0
      %v2611 = vadd.f32 %v2549, 1.0
      %v2612 = vadd.f32 %v2551, 1.0
      %v2613 = vadd.f32 %v2553, 1.0
      %v2614 = vadd.f32 %v2555, 1.0
      %v2615 = vadd.f32 %v2557, 1.0
      %v2616 = vadd.f32 %v2559, 1.0
      %v2617 = vadd.f32 %v2561, 1.0
      %v2618 = vadd.f32 %v2563, 1.0
      %v2619 = vadd.f32 %v2565, 1.0
      %v2620 = vadd.f32 %v2567, 1.0
      %v2621 = vadd.f32 %v2569, 1.0
      %v2622 = vadd.f32 %v2571, 1.0
      %v2623 = vadd.f32 %v2573, 1.0
      %v2624 = vadd.f32 %v2575, 1.0
      %v2625 = vadd.f32 %v2577, 1.0
      %v2626 = vadd.f32 %v2579, 1.0
      %v2627 = vadd.f32 %v2581, 1.0
      %v2628 = vadd.f32 %v2583, 1.0
      %v2629 = vadd.f32 %v2585, 1.0
      %v2630 = vadd.f32 %v2587, 1.0
      %v2631 = vadd.f32 %v2589, 1.0
      %v2632 = vadd.f32 %v2591, 1.0
      %v2633 = vadd.f32 %v2593, 1.0
      %v2634 = vadd.f32 %v2595, 1.0
      %v2635 = vadd.f32 %v2597, 1.0
      %v2636 = vadd.f32 %v2599, 1.0
      %v2637 = vadd.f32 %v2601, 1.0
      %v2638 = vadd.f32 %v2603, 1.0
      %v2639 = vadd.f32 %v2605, 1.0
      %v2640 = vadd.f32 %v2607, 1.0
      %v2641 = vadd.f32 %v2609, 1.0
      %v2642 = vrcp.pop %v2610
      %v2643 = vrcp.pop %v2611
      %v2644 = vrcp.pop %v2612
      %v2645 = vrcp.pop %v2613
      %v2646 = vrcp.pop %v2614
      %v2647 = vrcp.pop %v2615
      %v2648 = vrcp.pop %v2616
      %v2649 = vrcp.pop %v2617
      %v2650 = vrcp.pop %v2618
      %v2651 = vrcp.pop %v2619
      %v2652 = vrcp.pop %v2620
      %v2653 = vrcp.pop %v2621
      %v2654 = vrcp.pop %v2622
      %v2655 = vrcp.pop %v2623
      %v2656 = vrcp.pop %v2624
      %v2657 = vrcp.pop %v2625
      %v2658 = vrcp.pop %v2626
      %v2659 = vrcp.pop %v2627
      %v2660 = vrcp.pop %v2628
      %v2661 = vrcp.pop %v2629
      %v2662 = vrcp.pop %v2630
      %v2663 = vrcp.pop %v2631
      %v2664 = vrcp.pop %v2632
      %v2665 = vrcp.pop %v2633
      %v2666 = vrcp.pop %v2634
      %v2667 = vrcp.pop %v2635
      %v2668 = vrcp.pop %v2636
      %v2669 = vrcp.pop %v2637
      %v2670 = vrcp.pop %v2638
      %v2671 = vrcp.pop %v2639
      %v2672 = vrcp.pop %v2640
      %v2673 = vrcp.pop %v2641
      %v2674 = vmul.f32 %v2388, %v2642
      %v2675 = vmul.f32 %v2391, %v2643
      %v2676 = vmul.f32 %v2396, %v2644
      %v2677 = vmul.f32 %v2399, %v2645
      %v2678 = vmul.f32 %v2404, %v2646
      %v2679 = vmul.f32 %v2407, %v2647
      %v2680 = vmul.f32 %v2412, %v2648
      %v2681 = vmul.f32 %v2415, %v2649
      %v2682 = vmul.f32 %v2420, %v2650
      %v2683 = vmul.f32 %v2423, %v2651
      %v2684 = vmul.f32 %v2428, %v2652
      %v2685 = vmul.f32 %v2431, %v2653
      %v2686 = vmul.f32 %v2436, %v2654
      %v2687 = vmul.f32 %v2439, %v2655
      %v2688 = vmul.f32 %v2444, %v2656
      %v2689 = vmul.f32 %v2447, %v2657
      %v2690 = vmul.f32 %v2452, %v2658
      %v2691 = vmul.f32 %v2455, %v2659
      %v2692 = vmul.f32 %v2460, %v2660
      %v2693 = vmul.f32 %v2463, %v2661
      %v2694 = vmul.f32 %v2468, %v2662
      %v2695 = vmul.f32 %v2471, %v2663
      %v2696 = vmul.f32 %v2476, %v2664
      %v2697 = vmul.f32 %v2479, %v2665
      %v2698 = vmul.f32 %v2484, %v2666
      %v2699 = vmul.f32 %v2487, %v2667
      %v2700 = vmul.f32 %v2492, %v2668
      %v2701 = vmul.f32 %v2495, %v2669
      %v2702 = vmul.f32 %v2500, %v2670
      %v2703 = vmul.f32 %v2503, %v2671
      %v2704 = vmul.f32 %v2508, %v2672
      %v2705 = vmul.f32 %v2511, %v2673
      %v2706 = vpack.c.bf16 %v2675, %v2674
      %v2707 = vpack.c.bf16 %v2677, %v2676
      %v2708 = vpack.c.bf16 %v2679, %v2678
      %v2709 = vpack.c.bf16 %v2681, %v2680
      %v2710 = vpack.c.bf16 %v2683, %v2682
      %v2711 = vpack.c.bf16 %v2685, %v2684
      %v2712 = vpack.c.bf16 %v2687, %v2686
      %v2713 = vpack.c.bf16 %v2689, %v2688
      %v2714 = vpack.c.bf16 %v2691, %v2690
      %v2715 = vpack.c.bf16 %v2693, %v2692
      %v2716 = vpack.c.bf16 %v2695, %v2694
      %v2717 = vpack.c.bf16 %v2697, %v2696
      %v2718 = vpack.c.bf16 %v2699, %v2698
      %v2719 = vpack.c.bf16 %v2701, %v2700
      %v2720 = vpack.c.bf16 %v2703, %v2702
      %v2721 = vpack.c.bf16 %v2705, %v2704
      %v2722 = vld [vmem:[%s13] sm:$0x3]
      %v2723 = vld [vmem:[%s14] sm:$0x1]
      %v2725 = vlaneseq
      %v2726 = vshrl.u32 %v2725, 7
      %v2727 = vsub.s32 0, %v2726
      %v2728 = vrot.slane %v2723, %v2727
      %v2731 = vsel %vm697, %v2706, 0
      %v2734 = vsel %vm697, %v2707, 0
      %v2737 = vsel %vm697, %v2708, 0
      %v2740 = vsel %vm697, %v2709, 0
      %v2743 = vsel %vm697, %v2710, 0
      %v2746 = vsel %vm697, %v2711, 0
      %v2749 = vsel %vm697, %v2712, 0
      %v2752 = vsel %vm697, %v2713, 0
      %v2755 = vsel %vm697, %v2714, 0
      %v2758 = vsel %vm697, %v2715, 0
      %v2761 = vsel %vm697, %v2716, 0
      %v2764 = vsel %vm697, %v2717, 0
      %v2767 = vsel %vm697, %v2718, 0
      %v2770 = vsel %vm697, %v2719, 0
      %v2773 = vsel %vm697, %v2720, 0
      %v2776 = vsel %vm697, %v2721, 0
      %v2779 = vsel %vm746, %v2722, 0
      %2781 = vmatprep.subr.bf16.mxu0 0
      %2782 = vmatpush1.bf16.msra.mxu0 0
      %2783 = vmatprep.subr.bf16.mxu0 0
      %2784 = vmatpush1.bf16.msra.mxu0 0
      %2785 = vmatprep.subr.bf16.mxu0 0
      %2786 = vmatpush1.bf16.msra.mxu0 0
      %2787 = vmatprep.subr.bf16.mxu0 0
      %2788 = vmatpush1.bf16.msra.mxu0 0
      %2789 = vmatprep.subr.bf16.mxu0 0
      %2790 = vmatpush1.bf16.msra.mxu0 0
      %2791 = vmatprep.subr.bf16.mxu0 0
      %2792 = vmatpush1.bf16.msra.mxu0 0
      %2793 = vmatprep.subr.bf16.mxu0 0
      %2794 = vmatpush1.bf16.msra.mxu0 0
      %2795 = vmatprep.subr.bf16.mxu0 0
      %2796 = vmatpush1.bf16.msra.mxu0 %v2779
      %2797 = vmatprep.subr.bf16.mxu0 0
      %2798 = vmatpush2.bf16.msra.mxu0 0
      %2799 = vmatprep.subr.bf16.mxu0 0
      %2800 = vmatpush2.bf16.msra.mxu0 0
      %2801 = vmatprep.subr.bf16.mxu0 0
      %2802 = vmatpush2.bf16.msra.mxu0 0
      %2803 = vmatprep.subr.bf16.mxu0 0
      %2804 = vmatpush2.bf16.msra.mxu0 0
      %2805 = vmatprep.subr.bf16.mxu0 0
      %2806 = vmatpush2.bf16.msra.mxu0 0
      %2807 = vmatprep.subr.bf16.mxu0 0
      %2808 = vmatpush2.bf16.msra.mxu0 0
      %2809 = vmatprep.subr.bf16.mxu0 0
      %2810 = vmatpush2.bf16.msra.mxu0 0
      %2811 = vmatprep.subr.bf16.mxu0 0
      %2812 = vmatpush2.bf16.msra.mxu0 0
      %2813 = vmatprep.mubr.bf16.mxu0 0
      %2814 = vmatmul.mubr.bf16.gmra.mxu0 %v2731
      %v2815 = vpop.f32.mrf.mxu0
      %v2816 = vadd.f32 %v2728, %v2815
      %v2817 = vpop.f32.mrf.mxu0
      %v2818 = vpop.f32.mrf.mxu0
      %v2819 = vadd.f32 %v2728, %v2818
      %v2820 = vpop.f32.mrf.mxu0
      %2821 = vmatprep.mubr.bf16.mxu0 0
      %2822 = vmatmul.mubr.bf16.gmra.mxu0 %v2734
      %v2823 = vpop.f32.mrf.mxu0
      %v2824 = vadd.f32 %v2728, %v2823
      %v2825 = vpop.f32.mrf.mxu0
      %v2826 = vpop.f32.mrf.mxu0
      %v2827 = vadd.f32 %v2728, %v2826
      %v2828 = vpop.f32.mrf.mxu0
      %2829 = vmatprep.mubr.bf16.mxu0 0
      %2830 = vmatmul.mubr.bf16.gmra.mxu0 %v2737
      %v2831 = vpop.f32.mrf.mxu0
      %v2832 = vadd.f32 %v2728, %v2831
      %v2833 = vpop.f32.mrf.mxu0
      %v2834 = vpop.f32.mrf.mxu0
      %v2835 = vadd.f32 %v2728, %v2834
      %v2836 = vpop.f32.mrf.mxu0
      %2837 = vmatprep.mubr.bf16.mxu0 0
      %2838 = vmatmul.mubr.bf16.gmra.mxu0 %v2740
      %v2839 = vpop.f32.mrf.mxu0
      %v2840 = vadd.f32 %v2728, %v2839
      %v2841 = vpop.f32.mrf.mxu0
      %v2842 = vpop.f32.mrf.mxu0
      %v2843 = vadd.f32 %v2728, %v2842
      %v2844 = vpop.f32.mrf.mxu0
      %2845 = vmatprep.mubr.bf16.mxu0 0
      %2846 = vmatmul.mubr.bf16.gmra.mxu0 %v2743
      %v2847 = vpop.f32.mrf.mxu0
      %v2848 = vadd.f32 %v2728, %v2847
      %v2849 = vpop.f32.mrf.mxu0
      %v2850 = vpop.f32.mrf.mxu0
      %v2851 = vadd.f32 %v2728, %v2850
      %v2852 = vpop.f32.mrf.mxu0
      %2853 = vmatprep.mubr.bf16.mxu0 0
      %2854 = vmatmul.mubr.bf16.gmra.mxu0 %v2746
      %v2855 = vpop.f32.mrf.mxu0
      %v2856 = vadd.f32 %v2728, %v2855
      %v2857 = vpop.f32.mrf.mxu0
      %v2858 = vpop.f32.mrf.mxu0
      %v2859 = vadd.f32 %v2728, %v2858
      %v2860 = vpop.f32.mrf.mxu0
      %2861 = vmatprep.mubr.bf16.mxu0 0
      %2862 = vmatmul.mubr.bf16.gmra.mxu0 %v2749
      %v2863 = vpop.f32.mrf.mxu0
      %v2864 = vadd.f32 %v2728, %v2863
      %v2865 = vpop.f32.mrf.mxu0
      %v2866 = vpop.f32.mrf.mxu0
      %v2867 = vadd.f32 %v2728, %v2866
      %v2868 = vpop.f32.mrf.mxu0
      %2869 = vmatprep.mubr.bf16.mxu0 0
      %2870 = vmatmul.mubr.bf16.gmra.mxu0 %v2752
      %v2871 = vpop.f32.mrf.mxu0
      %v2872 = vadd.f32 %v2728, %v2871
      %v2873 = vpop.f32.mrf.mxu0
      %v2874 = vpop.f32.mrf.mxu0
      %v2875 = vadd.f32 %v2728, %v2874
      %v2876 = vpop.f32.mrf.mxu0
      %2877 = vmatprep.mubr.bf16.mxu0 0
      %2878 = vmatmul.mubr.bf16.gmra.mxu0 %v2755
      %v2879 = vpop.f32.mrf.mxu0
      %v2880 = vadd.f32 %v2728, %v2879
      %v2881 = vpop.f32.mrf.mxu0
      %v2882 = vpop.f32.mrf.mxu0
      %v2883 = vadd.f32 %v2728, %v2882
      %v2884 = vpop.f32.mrf.mxu0
      %2885 = vmatprep.mubr.bf16.mxu0 0
      %2886 = vmatmul.mubr.bf16.gmra.mxu0 %v2758
      %v2887 = vpop.f32.mrf.mxu0
      %v2888 = vadd.f32 %v2728, %v2887
      %v2889 = vpop.f32.mrf.mxu0
      %v2890 = vpop.f32.mrf.mxu0
      %v2891 = vadd.f32 %v2728, %v2890
      %v2892 = vpop.f32.mrf.mxu0
      %2893 = vmatprep.mubr.bf16.mxu0 0
      %2894 = vmatmul.mubr.bf16.gmra.mxu0 %v2761
      %v2895 = vpop.f32.mrf.mxu0
      %v2896 = vadd.f32 %v2728, %v2895
      %v2897 = vpop.f32.mrf.mxu0
      %v2898 = vpop.f32.mrf.mxu0
      %v2899 = vadd.f32 %v2728, %v2898
      %v2900 = vpop.f32.mrf.mxu0
      %2901 = vmatprep.mubr.bf16.mxu0 0
      %2902 = vmatmul.mubr.bf16.gmra.mxu0 %v2764
      %v2903 = vpop.f32.mrf.mxu0
      %v2904 = vadd.f32 %v2728, %v2903
      %v2905 = vpop.f32.mrf.mxu0
      %v2906 = vpop.f32.mrf.mxu0
      %v2907 = vadd.f32 %v2728, %v2906
      %v2908 = vpop.f32.mrf.mxu0
      %2909 = vmatprep.mubr.bf16.mxu0 0
      %2910 = vmatmul.mubr.bf16.gmra.mxu0 %v2767
      %v2911 = vpop.f32.mrf.mxu0
      %v2912 = vadd.f32 %v2728, %v2911
      %v2913 = vpop.f32.mrf.mxu0
      %v2914 = vpop.f32.mrf.mxu0
      %v2915 = vadd.f32 %v2728, %v2914
      %v2916 = vpop.f32.mrf.mxu0
      %2917 = vmatprep.mubr.bf16.mxu0 0
      %2918 = vmatmul.mubr.bf16.gmra.mxu0 %v2770
      %v2919 = vpop.f32.mrf.mxu0
      %v2920 = vadd.f32 %v2728, %v2919
      %v2921 = vpop.f32.mrf.mxu0
      %v2922 = vpop.f32.mrf.mxu0
      %v2923 = vadd.f32 %v2728, %v2922
      %v2924 = vpop.f32.mrf.mxu0
      %2925 = vmatprep.mubr.bf16.mxu0 0
      %2926 = vmatmul.mubr.bf16.gmra.mxu0 %v2773
      %v2927 = vpop.f32.mrf.mxu0
      %v2928 = vadd.f32 %v2728, %v2927
      %v2929 = vpop.f32.mrf.mxu0
      %v2930 = vpop.f32.mrf.mxu0
      %v2931 = vadd.f32 %v2728, %v2930
      %v2932 = vpop.f32.mrf.mxu0
      %2933 = vmatprep.mubr.bf16.mxu0 0
      %2934 = vmatmul.mubr.bf16.gmra.mxu0 %v2776
      %v2935 = vpop.f32.mrf.mxu0
      %v2936 = vadd.f32 %v2728, %v2935
      %v2937 = vpop.f32.mrf.mxu0
      %v2938 = vpop.f32.mrf.mxu0
      %v2939 = vadd.f32 %v2728, %v2938
      %v2940 = vpop.f32.mrf.mxu0
      %2941 = vdwg.mxu0
      %v2942 = vadd.f32 %v2246, %v2816
      %v2943 = vadd.f32 %v2247, %v2819
      %v2944 = vadd.f32 %v2248, %v2824
      %v2945 = vadd.f32 %v2249, %v2827
      %v2946 = vadd.f32 %v2250, %v2832
      %v2947 = vadd.f32 %v2251, %v2835
      %v2948 = vadd.f32 %v2252, %v2840
      %v2949 = vadd.f32 %v2253, %v2843
      %v2950 = vadd.f32 %v2254, %v2848
      %v2951 = vadd.f32 %v2255, %v2851
      %v2952 = vadd.f32 %v2256, %v2856
      %v2953 = vadd.f32 %v2257, %v2859
      %v2954 = vadd.f32 %v2258, %v2864
      %v2955 = vadd.f32 %v2259, %v2867
      %v2956 = vadd.f32 %v2260, %v2872
      %v2957 = vadd.f32 %v2261, %v2875
      %v2958 = vadd.f32 %v2262, %v2880
      %v2959 = vadd.f32 %v2263, %v2883
      %v2960 = vadd.f32 %v2264, %v2888
      %v2961 = vadd.f32 %v2265, %v2891
      %v2962 = vadd.f32 %v2266, %v2896
      %v2963 = vadd.f32 %v2267, %v2899
      %v2964 = vadd.f32 %v2268, %v2904
      %v2965 = vadd.f32 %v2269, %v2907
      %v2966 = vadd.f32 %v2270, %v2912
      %v2967 = vadd.f32 %v2271, %v2915
      %v2968 = vadd.f32 %v2272, %v2920
      %v2969 = vadd.f32 %v2273, %v2923
      %v2970 = vadd.f32 %v2274, %v2928
      %v2971 = vadd.f32 %v2275, %v2931
      %v2972 = vadd.f32 %v2276, %v2936
      %v2973 = vadd.f32 %v2277, %v2939
      %v2974 = vpack.c.bf16 %v2943, %v2942
      %v2975 = vpack.c.bf16 %v2945, %v2944
      %v2976 = vpack.c.bf16 %v2947, %v2946
      %v2977 = vpack.c.bf16 %v2949, %v2948
      %v2978 = vpack.c.bf16 %v2951, %v2950
      %v2979 = vpack.c.bf16 %v2953, %v2952
      %v2980 = vpack.c.bf16 %v2955, %v2954
      %v2981 = vpack.c.bf16 %v2957, %v2956
      %v2982 = vpack.c.bf16 %v2959, %v2958
      %v2983 = vpack.c.bf16 %v2961, %v2960
      %v2984 = vpack.c.bf16 %v2963, %v2962
      %v2985 = vpack.c.bf16 %v2965, %v2964
      %v2986 = vpack.c.bf16 %v2967, %v2966
      %v2987 = vpack.c.bf16 %v2969, %v2968
      %v2988 = vpack.c.bf16 %v2971, %v2970
      %v2989 = vpack.c.bf16 %v2973, %v2972
      %v2990 = vld [vmem:[%s15] sm:$0x1]
      %v2991 = vld [vmem:[%s16] sm:$0x1]
      %v2993 = vsel %vm1483, %v2974, 0
      %v2996 = vsel %vm1483, %v2975, 0
      %v2999 = vsel %vm1483, %v2976, 0
      %v3002 = vsel %vm1483, %v2977, 0
      %v3005 = vsel %vm1483, %v2978, 0
      %v3008 = vsel %vm1483, %v2979, 0
      %v3011 = vsel %vm1483, %v2980, 0
      %v3014 = vsel %vm1483, %v2981, 0
      %v3017 = vsel %vm1483, %v2982, 0
      %v3020 = vsel %vm1483, %v2983, 0
      %v3023 = vsel %vm1483, %v2984, 0
      %v3026 = vsel %vm1483, %v2985, 0
      %v3029 = vsel %vm1483, %v2986, 0
      %v3032 = vsel %vm1483, %v2987, 0
      %v3035 = vsel %vm1483, %v2988, 0
      %v3038 = vsel %vm1483, %v2989, 0
      %v3041 = vsel %vm1758, %v2991, 0
      %3043 = vmatprep.subr.bf16.mxu0 0
      %3044 = vmatpush1.bf16.msra.mxu0 0
      %3045 = vmatprep.subr.bf16.mxu0 0
      %3046 = vmatpush1.bf16.msra.mxu0 0
      %3047 = vmatprep.subr.bf16.mxu0 0
      %3048 = vmatpush1.bf16.msra.mxu0 0
      %3049 = vmatprep.subr.bf16.mxu0 0
      %3050 = vmatpush1.bf16.msra.mxu0 0
      %3051 = vmatprep.subr.bf16.mxu0 0
      %3052 = vmatpush1.bf16.msra.mxu0 0
      %3053 = vmatprep.subr.bf16.mxu0 0
      %3054 = vmatpush1.bf16.msra.mxu0 0
      %3055 = vmatprep.subr.bf16.mxu0 0
      %3056 = vmatpush1.bf16.msra.mxu0 0
      %3057 = vmatprep.subr.bf16.mxu0 0
      %3058 = vmatpush1.bf16.msra.mxu0 %v3041
      %3059 = vmatprep.subr.bf16.mxu0 0
      %3060 = vmatpush2.bf16.msra.mxu0 0
      %3061 = vmatprep.subr.bf16.mxu0 0
      %3062 = vmatpush2.bf16.msra.mxu0 0
      %3063 = vmatprep.subr.bf16.mxu0 0
      %3064 = vmatpush2.bf16.msra.mxu0 0
      %3065 = vmatprep.subr.bf16.mxu0 0
      %3066 = vmatpush2.bf16.msra.mxu0 0
      %3067 = vmatprep.subr.bf16.mxu0 0
      %3068 = vmatpush2.bf16.msra.mxu0 0
      %3069 = vmatprep.subr.bf16.mxu0 0
      %3070 = vmatpush2.bf16.msra.mxu0 0
      %3071 = vmatprep.subr.bf16.mxu0 0
      %3072 = vmatpush2.bf16.msra.mxu0 0
      %3073 = vmatprep.subr.bf16.mxu0 0
      %3074 = vmatpush2.bf16.msra.mxu0 0
      %3075 = vmatprep.mubr.bf16.mxu0 0
      %3076 = vmatmul.mubr.bf16.gmra.mxu0 %v2993
      %v3077 = vpop.f32.mrf.mxu0
      %v3078 = vadd.f32 0.0, %v3077
      %v3079 = vpop.f32.mrf.mxu0
      %v3080 = vpop.f32.mrf.mxu0
      %v3081 = vadd.f32 0.0, %v3080
      %v3082 = vpop.f32.mrf.mxu0
      %3083 = vmatprep.mubr.bf16.mxu0 0
      %3084 = vmatmul.mubr.bf16.gmra.mxu0 %v2996
      %v3085 = vpop.f32.mrf.mxu0
      %v3086 = vadd.f32 0.0, %v3085
      %v3087 = vpop.f32.mrf.mxu0
      %v3088 = vpop.f32.mrf.mxu0
      %v3089 = vadd.f32 0.0, %v3088
      %v3090 = vpop.f32.mrf.mxu0
      %3091 = vmatprep.mubr.bf16.mxu0 0
      %3092 = vmatmul.mubr.bf16.gmra.mxu0 %v2999
      %v3093 = vpop.f32.mrf.mxu0
      %v3094 = vadd.f32 0.0, %v3093
      %v3095 = vpop.f32.mrf.mxu0
      %v3096 = vpop.f32.mrf.mxu0
      %v3097 = vadd.f32 0.0, %v3096
      %v3098 = vpop.f32.mrf.mxu0
      %3099 = vmatprep.mubr.bf16.mxu0 0
      %3100 = vmatmul.mubr.bf16.gmra.mxu0 %v3002
      %v3101 = vpop.f32.mrf.mxu0
      %v3102 = vadd.f32 0.0, %v3101
      %v3103 = vpop.f32.mrf.mxu0
      %v3104 = vpop.f32.mrf.mxu0
      %v3105 = vadd.f32 0.0, %v3104
      %v3106 = vpop.f32.mrf.mxu0
      %3107 = vmatprep.mubr.bf16.mxu0 0
      %3108 = vmatmul.mubr.bf16.gmra.mxu0 %v3005
      %v3109 = vpop.f32.mrf.mxu0
      %v3110 = vadd.f32 0.0, %v3109
      %v3111 = vpop.f32.mrf.mxu0
      %v3112 = vpop.f32.mrf.mxu0
      %v3113 = vadd.f32 0.0, %v3112
      %v3114 = vpop.f32.mrf.mxu0
      %3115 = vmatprep.mubr.bf16.mxu0 0
      %3116 = vmatmul.mubr.bf16.gmra.mxu0 %v3008
      %v3117 = vpop.f32.mrf.mxu0
      %v3118 = vadd.f32 0.0, %v3117
      %v3119 = vpop.f32.mrf.mxu0
      %v3120 = vpop.f32.mrf.mxu0
      %v3121 = vadd.f32 0.0, %v3120
      %v3122 = vpop.f32.mrf.mxu0
      %3123 = vmatprep.mubr.bf16.mxu0 0
      %3124 = vmatmul.mubr.bf16.gmra.mxu0 %v3011
      %v3125 = vpop.f32.mrf.mxu0
      %v3126 = vadd.f32 0.0, %v3125
      %v3127 = vpop.f32.mrf.mxu0
      %v3128 = vpop.f32.mrf.mxu0
      %v3129 = vadd.f32 0.0, %v3128
      %v3130 = vpop.f32.mrf.mxu0
      %3131 = vmatprep.mubr.bf16.mxu0 0
      %3132 = vmatmul.mubr.bf16.gmra.mxu0 %v3014
      %v3133 = vpop.f32.mrf.mxu0
      %v3134 = vadd.f32 0.0, %v3133
      %v3135 = vpop.f32.mrf.mxu0
      %v3136 = vpop.f32.mrf.mxu0
      %v3137 = vadd.f32 0.0, %v3136
      %v3138 = vpop.f32.mrf.mxu0
      %3139 = vmatprep.mubr.bf16.mxu0 0
      %3140 = vmatmul.mubr.bf16.gmra.mxu0 %v3017
      %v3141 = vpop.f32.mrf.mxu0
      %v3142 = vadd.f32 0.0, %v3141
      %v3143 = vpop.f32.mrf.mxu0
      %v3144 = vpop.f32.mrf.mxu0
      %v3145 = vadd.f32 0.0, %v3144
      %v3146 = vpop.f32.mrf.mxu0
      %3147 = vmatprep.mubr.bf16.mxu0 0
      %3148 = vmatmul.mubr.bf16.gmra.mxu0 %v3020
      %v3149 = vpop.f32.mrf.mxu0
      %v3150 = vadd.f32 0.0, %v3149
      %v3151 = vpop.f32.mrf.mxu0
      %v3152 = vpop.f32.mrf.mxu0
      %v3153 = vadd.f32 0.0, %v3152
      %v3154 = vpop.f32.mrf.mxu0
      %3155 = vmatprep.mubr.bf16.mxu0 0
      %3156 = vmatmul.mubr.bf16.gmra.mxu0 %v3023
      %v3157 = vpop.f32.mrf.mxu0
      %v3158 = vadd.f32 0.0, %v3157
      %v3159 = vpop.f32.mrf.mxu0
      %v3160 = vpop.f32.mrf.mxu0
      %v3161 = vadd.f32 0.0, %v3160
      %v3162 = vpop.f32.mrf.mxu0
      %3163 = vmatprep.mubr.bf16.mxu0 0
      %3164 = vmatmul.mubr.bf16.gmra.mxu0 %v3026
      %v3165 = vpop.f32.mrf.mxu0
      %v3166 = vadd.f32 0.0, %v3165
      %v3167 = vpop.f32.mrf.mxu0
      %v3168 = vpop.f32.mrf.mxu0
      %v3169 = vadd.f32 0.0, %v3168
      %v3170 = vpop.f32.mrf.mxu0
      %3171 = vmatprep.mubr.bf16.mxu0 0
      %3172 = vmatmul.mubr.bf16.gmra.mxu0 %v3029
      %v3173 = vpop.f32.mrf.mxu0
      %v3174 = vadd.f32 0.0, %v3173
      %v3175 = vpop.f32.mrf.mxu0
      %v3176 = vpop.f32.mrf.mxu0
      %v3177 = vadd.f32 0.0, %v3176
      %v3178 = vpop.f32.mrf.mxu0
      %3179 = vmatprep.mubr.bf16.mxu0 0
      %3180 = vmatmul.mubr.bf16.gmra.mxu0 %v3032
      %v3181 = vpop.f32.mrf.mxu0
      %v3182 = vadd.f32 0.0, %v3181
      %v3183 = vpop.f32.mrf.mxu0
      %v3184 = vpop.f32.mrf.mxu0
      %v3185 = vadd.f32 0.0, %v3184
      %v3186 = vpop.f32.mrf.mxu0
      %3187 = vmatprep.mubr.bf16.mxu0 0
      %3188 = vmatmul.mubr.bf16.gmra.mxu0 %v3035
      %v3189 = vpop.f32.mrf.mxu0
      %v3190 = vadd.f32 0.0, %v3189
      %v3191 = vpop.f32.mrf.mxu0
      %v3192 = vpop.f32.mrf.mxu0
      %v3193 = vadd.f32 0.0, %v3192
      %v3194 = vpop.f32.mrf.mxu0
      %3195 = vmatprep.mubr.bf16.mxu0 0
      %3196 = vmatmul.mubr.bf16.gmra.mxu0 %v3038
      %v3197 = vpop.f32.mrf.mxu0
      %v3198 = vadd.f32 0.0, %v3197
      %v3199 = vpop.f32.mrf.mxu0
      %v3200 = vpop.f32.mrf.mxu0
      %v3201 = vadd.f32 0.0, %v3200
      %v3202 = vpop.f32.mrf.mxu0
      %3203 = vdwg.mxu0
      %v3205 = vsel %vm1483, %v1103, 0
      %v3208 = vsel %vm1483, %v1104, 0
      %v3211 = vsel %vm1483, %v1105, 0
      %v3214 = vsel %vm1483, %v1106, 0
      %v3217 = vsel %vm1483, %v1107, 0
      %v3220 = vsel %vm1483, %v1108, 0
      %v3223 = vsel %vm1483, %v1109, 0
      %v3226 = vsel %vm1483, %v1110, 0
      %v3229 = vsel %vm1483, %v1111, 0
      %v3232 = vsel %vm1483, %v1112, 0
      %v3235 = vsel %vm1483, %v1113, 0
      %v3238 = vsel %vm1483, %v1114, 0
      %v3241 = vsel %vm1483, %v1115, 0
      %v3244 = vsel %vm1483, %v1116, 0
      %v3247 = vsel %vm1483, %v1117, 0
      %v3250 = vsel %vm1483, %v1118, 0
      %v3253 = vsel %vm1758, %v2990, 0
      %3255 = vmatprep.subr.bf16.mxu0 0
      %3256 = vmatpush1.bf16.msra.mxu0 0
      %3257 = vmatprep.subr.bf16.mxu0 0
      %3258 = vmatpush1.bf16.msra.mxu0 0
      %3259 = vmatprep.subr.bf16.mxu0 0
      %3260 = vmatpush1.bf16.msra.mxu0 0
      %3261 = vmatprep.subr.bf16.mxu0 0
      %3262 = vmatpush1.bf16.msra.mxu0 0
      %3263 = vmatprep.subr.bf16.mxu0 0
      %3264 = vmatpush1.bf16.msra.mxu0 0
      %3265 = vmatprep.subr.bf16.mxu0 0
      %3266 = vmatpush1.bf16.msra.mxu0 0
      %3267 = vmatprep.subr.bf16.mxu0 0
      %3268 = vmatpush1.bf16.msra.mxu0 0
      %3269 = vmatprep.subr.bf16.mxu0 0
      %3270 = vmatpush1.bf16.msra.mxu0 %v3253
      %3271 = vmatprep.subr.bf16.mxu0 0
      %3272 = vmatpush2.bf16.msra.mxu0 0
      %3273 = vmatprep.subr.bf16.mxu0 0
      %3274 = vmatpush2.bf16.msra.mxu0 0
      %3275 = vmatprep.subr.bf16.mxu0 0
      %3276 = vmatpush2.bf16.msra.mxu0 0
      %3277 = vmatprep.subr.bf16.mxu0 0
      %3278 = vmatpush2.bf16.msra.mxu0 0
      %3279 = vmatprep.subr.bf16.mxu0 0
      %3280 = vmatpush2.bf16.msra.mxu0 0
      %3281 = vmatprep.subr.bf16.mxu0 0
      %3282 = vmatpush2.bf16.msra.mxu0 0
      %3283 = vmatprep.subr.bf16.mxu0 0
      %3284 = vmatpush2.bf16.msra.mxu0 0
      %3285 = vmatprep.subr.bf16.mxu0 0
      %3286 = vmatpush2.bf16.msra.mxu0 0
      %3287 = vmatprep.mubr.bf16.mxu0 0
      %3288 = vmatmul.mubr.bf16.gmra.mxu0 %v3205
      %v3289 = vpop.f32.mrf.mxu0
      %v3290 = vadd.f32 %v3078, %v3289
      %v3291 = vpop.f32.mrf.mxu0
      %v3292 = vpop.f32.mrf.mxu0
      %v3293 = vadd.f32 %v3081, %v3292
      %v3294 = vpop.f32.mrf.mxu0
      %3295 = vmatprep.mubr.bf16.mxu0 0
      %3296 = vmatmul.mubr.bf16.gmra.mxu0 %v3208
      %v3297 = vpop.f32.mrf.mxu0
      %v3298 = vadd.f32 %v3086, %v3297
      %v3299 = vpop.f32.mrf.mxu0
      %v3300 = vpop.f32.mrf.mxu0
      %v3301 = vadd.f32 %v3089, %v3300
      %v3302 = vpop.f32.mrf.mxu0
      %3303 = vmatprep.mubr.bf16.mxu0 0
      %3304 = vmatmul.mubr.bf16.gmra.mxu0 %v3211
      %v3305 = vpop.f32.mrf.mxu0
      %v3306 = vadd.f32 %v3094, %v3305
      %v3307 = vpop.f32.mrf.mxu0
      %v3308 = vpop.f32.mrf.mxu0
      %v3309 = vadd.f32 %v3097, %v3308
      %v3310 = vpop.f32.mrf.mxu0
      %3311 = vmatprep.mubr.bf16.mxu0 0
      %3312 = vmatmul.mubr.bf16.gmra.mxu0 %v3214
      %v3313 = vpop.f32.mrf.mxu0
      %v3314 = vadd.f32 %v3102, %v3313
      %v3315 = vpop.f32.mrf.mxu0
      %v3316 = vpop.f32.mrf.mxu0
      %v3317 = vadd.f32 %v3105, %v3316
      %v3318 = vpop.f32.mrf.mxu0
      %3319 = vmatprep.mubr.bf16.mxu0 0
      %3320 = vmatmul.mubr.bf16.gmra.mxu0 %v3217
      %v3321 = vpop.f32.mrf.mxu0
      %v3322 = vadd.f32 %v3110, %v3321
      %v3323 = vpop.f32.mrf.mxu0
      %v3324 = vpop.f32.mrf.mxu0
      %v3325 = vadd.f32 %v3113, %v3324
      %v3326 = vpop.f32.mrf.mxu0
      %3327 = vmatprep.mubr.bf16.mxu0 0
      %3328 = vmatmul.mubr.bf16.gmra.mxu0 %v3220
      %v3329 = vpop.f32.mrf.mxu0
      %v3330 = vadd.f32 %v3118, %v3329
      %v3331 = vpop.f32.mrf.mxu0
      %v3332 = vpop.f32.mrf.mxu0
      %v3333 = vadd.f32 %v3121, %v3332
      %v3334 = vpop.f32.mrf.mxu0
      %3335 = vmatprep.mubr.bf16.mxu0 0
      %3336 = vmatmul.mubr.bf16.gmra.mxu0 %v3223
      %v3337 = vpop.f32.mrf.mxu0
      %v3338 = vadd.f32 %v3126, %v3337
      %v3339 = vpop.f32.mrf.mxu0
      %v3340 = vpop.f32.mrf.mxu0
      %v3341 = vadd.f32 %v3129, %v3340
      %v3342 = vpop.f32.mrf.mxu0
      %3343 = vmatprep.mubr.bf16.mxu0 0
      %3344 = vmatmul.mubr.bf16.gmra.mxu0 %v3226
      %v3345 = vpop.f32.mrf.mxu0
      %v3346 = vadd.f32 %v3134, %v3345
      %v3347 = vpop.f32.mrf.mxu0
      %v3348 = vpop.f32.mrf.mxu0
      %v3349 = vadd.f32 %v3137, %v3348
      %v3350 = vpop.f32.mrf.mxu0
      %3351 = vmatprep.mubr.bf16.mxu0 0
      %3352 = vmatmul.mubr.bf16.gmra.mxu0 %v3229
      %v3353 = vpop.f32.mrf.mxu0
      %v3354 = vadd.f32 %v3142, %v3353
      %v3355 = vpop.f32.mrf.mxu0
      %v3356 = vpop.f32.mrf.mxu0
      %v3357 = vadd.f32 %v3145, %v3356
      %v3358 = vpop.f32.mrf.mxu0
      %3359 = vmatprep.mubr.bf16.mxu0 0
      %3360 = vmatmul.mubr.bf16.gmra.mxu0 %v3232
      %v3361 = vpop.f32.mrf.mxu0
      %v3362 = vadd.f32 %v3150, %v3361
      %v3363 = vpop.f32.mrf.mxu0
      %v3364 = vpop.f32.mrf.mxu0
      %v3365 = vadd.f32 %v3153, %v3364
      %v3366 = vpop.f32.mrf.mxu0
      %3367 = vmatprep.mubr.bf16.mxu0 0
      %3368 = vmatmul.mubr.bf16.gmra.mxu0 %v3235
      %v3369 = vpop.f32.mrf.mxu0
      %v3370 = vadd.f32 %v3158, %v3369
      %v3371 = vpop.f32.mrf.mxu0
      %v3372 = vpop.f32.mrf.mxu0
      %v3373 = vadd.f32 %v3161, %v3372
      %v3374 = vpop.f32.mrf.mxu0
      %3375 = vmatprep.mubr.bf16.mxu0 0
      %3376 = vmatmul.mubr.bf16.gmra.mxu0 %v3238
      %v3377 = vpop.f32.mrf.mxu0
      %v3378 = vadd.f32 %v3166, %v3377
      %v3379 = vpop.f32.mrf.mxu0
      %v3380 = vpop.f32.mrf.mxu0
      %v3381 = vadd.f32 %v3169, %v3380
      %v3382 = vpop.f32.mrf.mxu0
      %3383 = vmatprep.mubr.bf16.mxu0 0
      %3384 = vmatmul.mubr.bf16.gmra.mxu0 %v3241
      %v3385 = vpop.f32.mrf.mxu0
      %v3386 = vadd.f32 %v3174, %v3385
      %v3387 = vpop.f32.mrf.mxu0
      %v3388 = vpop.f32.mrf.mxu0
      %v3389 = vadd.f32 %v3177, %v3388
      %v3390 = vpop.f32.mrf.mxu0
      %3391 = vmatprep.mubr.bf16.mxu0 0
      %3392 = vmatmul.mubr.bf16.gmra.mxu0 %v3244
      %v3393 = vpop.f32.mrf.mxu0
      %v3394 = vadd.f32 %v3182, %v3393
      %v3395 = vpop.f32.mrf.mxu0
      %v3396 = vpop.f32.mrf.mxu0
      %v3397 = vadd.f32 %v3185, %v3396
      %v3398 = vpop.f32.mrf.mxu0
      %3399 = vmatprep.mubr.bf16.mxu0 0
      %3400 = vmatmul.mubr.bf16.gmra.mxu0 %v3247
      %v3401 = vpop.f32.mrf.mxu0
      %v3402 = vadd.f32 %v3190, %v3401
      %v3403 = vpop.f32.mrf.mxu0
      %v3404 = vpop.f32.mrf.mxu0
      %v3405 = vadd.f32 %v3193, %v3404
      %v3406 = vpop.f32.mrf.mxu0
      %3407 = vmatprep.mubr.bf16.mxu0 0
      %3408 = vmatmul.mubr.bf16.gmra.mxu0 %v3250
      %v3409 = vpop.f32.mrf.mxu0
      %v3410 = vadd.f32 %v3198, %v3409
      %v3411 = vpop.f32.mrf.mxu0
      %v3412 = vpop.f32.mrf.mxu0
      %v3413 = vadd.f32 %v3201, %v3412
      %v3414 = vpop.f32.mrf.mxu0
      %3415 = vdwg.mxu0
      %v3416 = vld [vmem:[%s17] sm:$0x1]
      %v3418 = vlaneseq
      %v3419 = vshrl.u32 %v3418, 7
      %v3420 = vsub.s32 0, %v3419
      %v3421 = vrot.slane %v3416, %v3420
      %v3423 = vadd.f32 %v3290, %v3421
      %v3424 = vadd.f32 %v3293, %v3421
      %v3425 = vadd.f32 %v3298, %v3421
      %v3426 = vadd.f32 %v3301, %v3421
      %v3427 = vadd.f32 %v3306, %v3421
      %v3428 = vadd.f32 %v3309, %v3421
      %v3429 = vadd.f32 %v3314, %v3421
      %v3430 = vadd.f32 %v3317, %v3421
      %v3431 = vadd.f32 %v3322, %v3421
      %v3432 = vadd.f32 %v3325, %v3421
      %v3433 = vadd.f32 %v3330, %v3421
      %v3434 = vadd.f32 %v3333, %v3421
      %v3435 = vadd.f32 %v3338, %v3421
      %v3436 = vadd.f32 %v3341, %v3421
      %v3437 = vadd.f32 %v3346, %v3421
      %v3438 = vadd.f32 %v3349, %v3421
      %v3439 = vadd.f32 %v3354, %v3421
      %v3440 = vadd.f32 %v3357, %v3421
      %v3441 = vadd.f32 %v3362, %v3421
      %v3442 = vadd.f32 %v3365, %v3421
      %v3443 = vadd.f32 %v3370, %v3421
      %v3444 = vadd.f32 %v3373, %v3421
      %v3445 = vadd.f32 %v3378, %v3421
      %v3446 = vadd.f32 %v3381, %v3421
      %v3447 = vadd.f32 %v3386, %v3421
      %v3448 = vadd.f32 %v3389, %v3421
      %v3449 = vadd.f32 %v3394, %v3421
      %v3450 = vadd.f32 %v3397, %v3421
      %v3451 = vadd.f32 %v3402, %v3421
      %v3452 = vadd.f32 %v3405, %v3421
      %v3453 = vadd.f32 %v3410, %v3421
      %v3454 = vadd.f32 %v3413, %v3421
      %v3455 = vsub.f32 0.0, %v3423
      %v3456 = vsub.f32 0.0, %v3424
      %v3457 = vsub.f32 0.0, %v3425
      %v3458 = vsub.f32 0.0, %v3426
      %v3459 = vsub.f32 0.0, %v3427
      %v3460 = vsub.f32 0.0, %v3428
      %v3461 = vsub.f32 0.0, %v3429
      %v3462 = vsub.f32 0.0, %v3430
      %v3463 = vsub.f32 0.0, %v3431
      %v3464 = vsub.f32 0.0, %v3432
      %v3465 = vsub.f32 0.0, %v3433
      %v3466 = vsub.f32 0.0, %v3434
      %v3467 = vsub.f32 0.0, %v3435
      %v3468 = vsub.f32 0.0, %v3436
      %v3469 = vsub.f32 0.0, %v3437
      %v3470 = vsub.f32 0.0, %v3438
      %v3471 = vsub.f32 0.0, %v3439
      %v3472 = vsub.f32 0.0, %v3440
      %v3473 = vsub.f32 0.0, %v3441
      %v3474 = vsub.f32 0.0, %v3442
      %v3475 = vsub.f32 0.0, %v3443
      %v3476 = vsub.f32 0.0, %v3444
      %v3477 = vsub.f32 0.0, %v3445
      %v3478 = vsub.f32 0.0, %v3446
      %v3479 = vsub.f32 0.0, %v3447
      %v3480 = vsub.f32 0.0, %v3448
      %v3481 = vsub.f32 0.0, %v3449
      %v3482 = vsub.f32 0.0, %v3450
      %v3483 = vsub.f32 0.0, %v3451
      %v3484 = vsub.f32 0.0, %v3452
      %v3485 = vsub.f32 0.0, %v3453
      %v3486 = vsub.f32 0.0, %v3454
      %v3487 = vmul.f32 %v3455, 1.442695
      %v3488 = vpow.pop %v3487
      %v3489 = vmul.f32 %v3456, 1.442695
      %v3490 = vpow.pop %v3489
      %v3491 = vmul.f32 %v3457, 1.442695
      %v3492 = vpow.pop %v3491
      %v3493 = vmul.f32 %v3458, 1.442695
      %v3494 = vpow.pop %v3493
      %v3495 = vmul.f32 %v3459, 1.442695
      %v3496 = vpow.pop %v3495
      %v3497 = vmul.f32 %v3460, 1.442695
      %v3498 = vpow.pop %v3497
      %v3499 = vmul.f32 %v3461, 1.442695
      %v3500 = vpow.pop %v3499
      %v3501 = vmul.f32 %v3462, 1.442695
      %v3502 = vpow.pop %v3501
      %v3503 = vmul.f32 %v3463, 1.442695
      %v3504 = vpow.pop %v3503
      %v3505 = vmul.f32 %v3464, 1.442695
      %v3506 = vpow.pop %v3505
      %v3507 = vmul.f32 %v3465, 1.442695
      %v3508 = vpow.pop %v3507
      %v3509 = vmul.f32 %v3466, 1.442695
      %v3510 = vpow.pop %v3509
      %v3511 = vmul.f32 %v3467, 1.442695
      %v3512 = vpow.pop %v3511
      %v3513 = vmul.f32 %v3468, 1.442695
      %v3514 = vpow.pop %v3513
      %v3515 = vmul.f32 %v3469, 1.442695
      %v3516 = vpow.pop %v3515
      %v3517 = vmul.f32 %v3470, 1.442695
      %v3518 = vpow.pop %v3517
      %v3519 = vmul.f32 %v3471, 1.442695
      %v3520 = vpow.pop %v3519
      %v3521 = vmul.f32 %v3472, 1.442695
      %v3522 = vpow.pop %v3521
      %v3523 = vmul.f32 %v3473, 1.442695
      %v3524 = vpow.pop %v3523
      %v3525 = vmul.f32 %v3474, 1.442695
      %v3526 = vpow.pop %v3525
      %v3527 = vmul.f32 %v3475, 1.442695
      %v3528 = vpow.pop %v3527
      %v3529 = vmul.f32 %v3476, 1.442695
      %v3530 = vpow.pop %v3529
      %v3531 = vmul.f32 %v3477, 1.442695
      %v3532 = vpow.pop %v3531
      %v3533 = vmul.f32 %v3478, 1.442695
      %v3534 = vpow.pop %v3533
      %v3535 = vmul.f32 %v3479, 1.442695
      %v3536 = vpow.pop %v3535
      %v3537 = vmul.f32 %v3480, 1.442695
      %v3538 = vpow.pop %v3537
      %v3539 = vmul.f32 %v3481, 1.442695
      %v3540 = vpow.pop %v3539
      %v3541 = vmul.f32 %v3482, 1.442695
      %v3542 = vpow.pop %v3541
      %v3543 = vmul.f32 %v3483, 1.442695
      %v3544 = vpow.pop %v3543
      %v3545 = vmul.f32 %v3484, 1.442695
      %v3546 = vpow.pop %v3545
      %v3547 = vmul.f32 %v3485, 1.442695
      %v3548 = vpow.pop %v3547
      %v3549 = vmul.f32 %v3486, 1.442695
      %v3550 = vpow.pop %v3549
      %v3551 = vadd.f32 %v3488, 1.0
      %v3552 = vadd.f32 %v3490, 1.0
      %v3553 = vadd.f32 %v3492, 1.0
      %v3554 = vadd.f32 %v3494, 1.0
      %v3555 = vadd.f32 %v3496, 1.0
      %v3556 = vadd.f32 %v3498, 1.0
      %v3557 = vadd.f32 %v3500, 1.0
      %v3558 = vadd.f32 %v3502, 1.0
      %v3559 = vadd.f32 %v3504, 1.0
      %v3560 = vadd.f32 %v3506, 1.0
      %v3561 = vadd.f32 %v3508, 1.0
      %v3562 = vadd.f32 %v3510, 1.0
      %v3563 = vadd.f32 %v3512, 1.0
      %v3564 = vadd.f32 %v3514, 1.0
      %v3565 = vadd.f32 %v3516, 1.0
      %v3566 = vadd.f32 %v3518, 1.0
      %v3567 = vadd.f32 %v3520, 1.0
      %v3568 = vadd.f32 %v3522, 1.0
      %v3569 = vadd.f32 %v3524, 1.0
      %v3570 = vadd.f32 %v3526, 1.0
      %v3571 = vadd.f32 %v3528, 1.0
      %v3572 = vadd.f32 %v3530, 1.0
      %v3573 = vadd.f32 %v3532, 1.0
      %v3574 = vadd.f32 %v3534, 1.0
      %v3575 = vadd.f32 %v3536, 1.0
      %v3576 = vadd.f32 %v3538, 1.0
      %v3577 = vadd.f32 %v3540, 1.0
      %v3578 = vadd.f32 %v3542, 1.0
      %v3579 = vadd.f32 %v3544, 1.0
      %v3580 = vadd.f32 %v3546, 1.0
      %v3581 = vadd.f32 %v3548, 1.0
      %v3582 = vadd.f32 %v3550, 1.0
      %v3583 = vrcp.pop %v3551
      %v3584 = vrcp.pop %v3552
      %v3585 = vrcp.pop %v3553
      %v3586 = vrcp.pop %v3554
      %v3587 = vrcp.pop %v3555
      %v3588 = vrcp.pop %v3556
      %v3589 = vrcp.pop %v3557
      %v3590 = vrcp.pop %v3558
      %v3591 = vrcp.pop %v3559
      %v3592 = vrcp.pop %v3560
      %v3593 = vrcp.pop %v3561
      %v3594 = vrcp.pop %v3562
      %v3595 = vrcp.pop %v3563
      %v3596 = vrcp.pop %v3564
      %v3597 = vrcp.pop %v3565
      %v3598 = vrcp.pop %v3566
      %v3599 = vrcp.pop %v3567
      %v3600 = vrcp.pop %v3568
      %v3601 = vrcp.pop %v3569
      %v3602 = vrcp.pop %v3570
      %v3603 = vrcp.pop %v3571
      %v3604 = vrcp.pop %v3572
      %v3605 = vrcp.pop %v3573
      %v3606 = vrcp.pop %v3574
      %v3607 = vrcp.pop %v3575
      %v3608 = vrcp.pop %v3576
      %v3609 = vrcp.pop %v3577
      %v3610 = vrcp.pop %v3578
      %v3611 = vrcp.pop %v3579
      %v3612 = vrcp.pop %v3580
      %v3613 = vrcp.pop %v3581
      %v3614 = vrcp.pop %v3582
      %v3615 = vmul.f32 %v3423, %v3583
      %v3616 = vmul.f32 %v3424, %v3584
      %v3617 = vmul.f32 %v3425, %v3585
      %v3618 = vmul.f32 %v3426, %v3586
      %v3619 = vmul.f32 %v3427, %v3587
      %v3620 = vmul.f32 %v3428, %v3588
      %v3621 = vmul.f32 %v3429, %v3589
      %v3622 = vmul.f32 %v3430, %v3590
      %v3623 = vmul.f32 %v3431, %v3591
      %v3624 = vmul.f32 %v3432, %v3592
      %v3625 = vmul.f32 %v3433, %v3593
      %v3626 = vmul.f32 %v3434, %v3594
      %v3627 = vmul.f32 %v3435, %v3595
      %v3628 = vmul.f32 %v3436, %v3596
      %v3629 = vmul.f32 %v3437, %v3597
      %v3630 = vmul.f32 %v3438, %v3598
      %v3631 = vmul.f32 %v3439, %v3599
      %v3632 = vmul.f32 %v3440, %v3600
      %v3633 = vmul.f32 %v3441, %v3601
      %v3634 = vmul.f32 %v3442, %v3602
      %v3635 = vmul.f32 %v3443, %v3603
      %v3636 = vmul.f32 %v3444, %v3604
      %v3637 = vmul.f32 %v3445, %v3605
      %v3638 = vmul.f32 %v3446, %v3606
      %v3639 = vmul.f32 %v3447, %v3607
      %v3640 = vmul.f32 %v3448, %v3608
      %v3641 = vmul.f32 %v3449, %v3609
      %v3642 = vmul.f32 %v3450, %v3610
      %v3643 = vmul.f32 %v3451, %v3611
      %v3644 = vmul.f32 %v3452, %v3612
      %v3645 = vmul.f32 %v3453, %v3613
      %v3646 = vmul.f32 %v3454, %v3614
      %v3647 = vpack.c.bf16 %v3616, %v3615
      %v3648 = vpack.c.bf16 %v3618, %v3617
      %v3649 = vpack.c.bf16 %v3620, %v3619
      %v3650 = vpack.c.bf16 %v3622, %v3621
      %v3651 = vpack.c.bf16 %v3624, %v3623
      %v3652 = vpack.c.bf16 %v3626, %v3625
      %v3653 = vpack.c.bf16 %v3628, %v3627
      %v3654 = vpack.c.bf16 %v3630, %v3629
      %v3655 = vpack.c.bf16 %v3632, %v3631
      %v3656 = vpack.c.bf16 %v3634, %v3633
      %v3657 = vpack.c.bf16 %v3636, %v3635
      %v3658 = vpack.c.bf16 %v3638, %v3637
      %v3659 = vpack.c.bf16 %v3640, %v3639
      %v3660 = vpack.c.bf16 %v3642, %v3641
      %v3661 = vpack.c.bf16 %v3644, %v3643
      %v3662 = vpack.c.bf16 %v3646, %v3645
      %v3679 = vunpack.c.l.b16 %v3647
      %v3680 = vunpack.c.h.b16 %v3647
      %v3681 = vunpack.c.l.b16 %v3648
      %v3682 = vunpack.c.h.b16 %v3648
      %v3683 = vunpack.c.l.b16 %v3649
      %v3684 = vunpack.c.h.b16 %v3649
      %v3685 = vunpack.c.l.b16 %v3650
      %v3686 = vunpack.c.h.b16 %v3650
      %v3687 = vunpack.c.l.b16 %v3651
      %v3688 = vunpack.c.h.b16 %v3651
      %v3689 = vunpack.c.l.b16 %v3652
      %v3690 = vunpack.c.h.b16 %v3652
      %v3691 = vunpack.c.l.b16 %v3653
      %v3692 = vunpack.c.h.b16 %v3653
      %v3693 = vunpack.c.l.b16 %v3654
      %v3694 = vunpack.c.h.b16 %v3654
      %v3695 = vunpack.c.l.b16 %v3655
      %v3696 = vunpack.c.h.b16 %v3655
      %v3697 = vunpack.c.l.b16 %v3656
      %v3698 = vunpack.c.h.b16 %v3656
      %v3699 = vunpack.c.l.b16 %v3657
      %v3700 = vunpack.c.h.b16 %v3657
      %v3701 = vunpack.c.l.b16 %v3658
      %v3702 = vunpack.c.h.b16 %v3658
      %v3703 = vunpack.c.l.b16 %v3659
      %v3704 = vunpack.c.h.b16 %v3659
      %v3705 = vunpack.c.l.b16 %v3660
      %v3706 = vunpack.c.h.b16 %v3660
      %v3707 = vunpack.c.l.b16 %v3661
      %v3708 = vunpack.c.h.b16 %v3661
      %v3709 = vunpack.c.l.b16 %v3662
      %v3710 = vunpack.c.h.b16 %v3662
      %v3711 = vpack.c.b16 %v3679, %v3679
      %v3712 = vpack.c.b16 %v3680, %v3680
      %v3713 = vpack.c.b16 %v3681, %v3681
      %v3714 = vpack.c.b16 %v3682, %v3682
      %v3715 = vpack.c.b16 %v3683, %v3683
      %v3716 = vpack.c.b16 %v3684, %v3684
      %v3717 = vpack.c.b16 %v3685, %v3685
      %v3718 = vpack.c.b16 %v3686, %v3686
      %v3719 = vpack.c.b16 %v3687, %v3687
      %v3720 = vpack.c.b16 %v3688, %v3688
      %v3721 = vpack.c.b16 %v3689, %v3689
      %v3722 = vpack.c.b16 %v3690, %v3690
      %v3723 = vpack.c.b16 %v3691, %v3691
      %v3724 = vpack.c.b16 %v3692, %v3692
      %v3725 = vpack.c.b16 %v3693, %v3693
      %v3726 = vpack.c.b16 %v3694, %v3694
      %v3727 = vpack.c.b16 %v3695, %v3695
      %v3728 = vpack.c.b16 %v3696, %v3696
      %v3729 = vpack.c.b16 %v3697, %v3697
      %v3730 = vpack.c.b16 %v3698, %v3698
      %v3731 = vpack.c.b16 %v3699, %v3699
      %v3732 = vpack.c.b16 %v3700, %v3700
      %v3733 = vpack.c.b16 %v3701, %v3701
      %v3734 = vpack.c.b16 %v3702, %v3702
      %v3735 = vpack.c.b16 %v3703, %v3703
      %v3736 = vpack.c.b16 %v3704, %v3704
      %v3737 = vpack.c.b16 %v3705, %v3705
      %v3738 = vpack.c.b16 %v3706, %v3706
      %v3739 = vpack.c.b16 %v3707, %v3707
      %v3740 = vpack.c.b16 %v3708, %v3708
      %v3741 = vpack.c.b16 %v3709, %v3709
      %v3742 = vpack.c.b16 %v3710, %v3710
      %vm3775 = vcmask 27648
      %3776 = vst.msk [vmem:[%s575] sm:$0xf] %vm3775, %v3711
      %3777 = vst.msk [vmem:[%s575 + $0x4] sm:$0xf] %vm3775, %v3712
      %3778 = vst.msk [vmem:[%s575 + $0x8] sm:$0xf] %vm3775, %v3713
      %3779 = vst.msk [vmem:[%s575 + $0xc] sm:$0xf] %vm3775, %v3714
      %3780 = vst.msk [vmem:[%s575 + $0x10] sm:$0xf] %vm3775, %v3715
      %3781 = vst.msk [vmem:[%s575 + $0x14] sm:$0xf] %vm3775, %v3716
      %3782 = vst.msk [vmem:[%s575 + $0x18] sm:$0xf] %vm3775, %v3717
      %3783 = vst.msk [vmem:[%s575 + $0x1c] sm:$0xf] %vm3775, %v3718
      %3784 = vst.msk [vmem:[%s575 + $0x20] sm:$0xf] %vm3775, %v3719
      %3785 = vst.msk [vmem:[%s575 + $0x24] sm:$0xf] %vm3775, %v3720
      %3786 = vst.msk [vmem:[%s575 + $0x28] sm:$0xf] %vm3775, %v3721
      %3787 = vst.msk [vmem:[%s575 + $0x2c] sm:$0xf] %vm3775, %v3722
      %3788 = vst.msk [vmem:[%s575 + $0x30] sm:$0xf] %vm3775, %v3723
      %3789 = vst.msk [vmem:[%s575 + $0x34] sm:$0xf] %vm3775, %v3724
      %3790 = vst.msk [vmem:[%s575 + $0x38] sm:$0xf] %vm3775, %v3725
      %3791 = vst.msk [vmem:[%s575 + $0x3c] sm:$0xf] %vm3775, %v3726
      %3792 = vst.msk [vmem:[%s575 + $0x40] sm:$0xf] %vm3775, %v3727
      %3793 = vst.msk [vmem:[%s575 + $0x44] sm:$0xf] %vm3775, %v3728
      %3794 = vst.msk [vmem:[%s575 + $0x48] sm:$0xf] %vm3775, %v3729
      %3795 = vst.msk [vmem:[%s575 + $0x4c] sm:$0xf] %vm3775, %v3730
      %3796 = vst.msk [vmem:[%s575 + $0x50] sm:$0xf] %vm3775, %v3731
      %3797 = vst.msk [vmem:[%s575 + $0x54] sm:$0xf] %vm3775, %v3732
      %3798 = vst.msk [vmem:[%s575 + $0x58] sm:$0xf] %vm3775, %v3733
      %3799 = vst.msk [vmem:[%s575 + $0x5c] sm:$0xf] %vm3775, %v3734
      %3800 = vst.msk [vmem:[%s575 + $0x60] sm:$0xf] %vm3775, %v3735
      %3801 = vst.msk [vmem:[%s575 + $0x64] sm:$0xf] %vm3775, %v3736
      %3802 = vst.msk [vmem:[%s575 + $0x68] sm:$0xf] %vm3775, %v3737
      %3803 = vst.msk [vmem:[%s575 + $0x6c] sm:$0xf] %vm3775, %v3738
      %3804 = vst.msk [vmem:[%s575 + $0x70] sm:$0xf] %vm3775, %v3739
      %3805 = vst.msk [vmem:[%s575 + $0x74] sm:$0xf] %vm3775, %v3740
      %3806 = vst.msk [vmem:[%s575 + $0x78] sm:$0xf] %vm3775, %v3741
      %3807 = vst.msk [vmem:[%s575 + $0x7c] sm:$0xf] %vm3775, %v3742
      %p3808 = scmp.lt.s32.totalorder %s29, 1
      %s3809 = scalar_select %p3808, %s29, 1
      %s3810 = smul.addr %s3809, 32
      %s3811 = smul.addr %s3810, 4
      %s3812 = scalar_lea.vmem %s18, %s3811
      // Predicated region
      $region93: #{tpu_custom_call.1} parent=91 // pred_check
        %p3813 = pneg %p430
      $region94: #{tpu_custom_call.1} parent=91 // pred_check_branch
        %3815 = sbr.rel (%p3813) target = $region96
      $region95: #{tpu_custom_call.1} parent=91 // pred_region
        _
      $region96: #{tpu_custom_call.1} parent=91 // pred_fallthru
        _
    $region92: #{tpu_custom_call.1} parent=5 // pred_fallthru
      _
    %p3816 = scmp.le.s32.totalorder 2, %s24
    // Predicated region
    $region97: #{tpu_custom_call.1} parent=5 // pred_check
      %p3817 = pneg %p3816
    $region98: #{tpu_custom_call.1} parent=5 // pred_check_branch
      %3819 = sbr.rel (%p3817) target = $region100
    $region99: #{tpu_custom_call.1} parent=5 // pred_region
      %s3820 = ssub.s32 %s24, 2
      // Predicated region
      $region101: #{tpu_custom_call.1} parent=99 // pred_check
        %p3821 = pneg %p436
      $region102: #{tpu_custom_call.1} parent=99 // pred_check_branch
        %3823 = sbr.rel (%p3821) target = $region104
      $region103: #{tpu_custom_call.1} parent=99 // pred_region
        %p3824 = scmp.lt.s32.totalorder %s30, 1
        %s3825 = scalar_select %p3824, %s30, 1
        %s3826 = smul.addr %s3825, 32
        %s3827 = smul.addr %s3826, 4
        %s3828 = scalar_lea.vmem %s18, %s3827
      $region104: #{tpu_custom_call.1} parent=99 // pred_fallthru
        _
    $region100: #{tpu_custom_call.1} parent=5 // pred_fallthru
      _
  $region6: #{tpu_custom_call.1} parent=0 // loop_footer
    %s28 = sadd.s32 1, %s24
  $region7: #{tpu_custom_call.1} parent=0 // loop_footer_branch
    %23 = sbr.rel target = $region3
  $region8: #{tpu_custom_call.1} parent=0 // loop_exit
    _

</llo_original>
